<compile_context>
chip_gen: v7x
topology: tpu7x:2x2x1
jax: 0.10.0
libtpu: 0.0.40
codegen_flags: <defaults>
</compile_context>

<pallas_src>
import functools

import jax
import jax.numpy as jnp
from jax import lax
from jax.experimental import pallas as pl
from jax.experimental.pallas import tpu as pltpu


# ----------------------------------------------------------------------------- helpers
def _round_up(x, m):
    return ((x + m - 1) // m) * m


def _bn_scale_shift(bn, conv_bias, eps=1e-5):
    gamma, beta, mean, var = bn
    scale = gamma / jnp.sqrt(var + eps)
    shift = beta + (conv_bias - mean) * scale
    return scale, shift


def _fold_conv1x1(w, bias, bn, cin_p, cout_p, dtype):
    """Fold BN scale into a (cin, cout) 1x1 weight; pad channels to lane width."""
    scale, shift = _bn_scale_shift(bn, bias)
    cin, cout = w.shape
    wf = (w * scale[None, :])
    wf = jnp.pad(wf, ((0, cin_p - cin), (0, cout_p - cout))).astype(dtype)
    sh = jnp.pad(shift, (0, cout_p - cout)).reshape(1, cout_p).astype(jnp.float32)
    return wf, sh


def _fold_conv3x3(w, bias, bn, cin_p, cout_p, dtype):
    """Fold BN scale into a (3,3,cin,cout) weight, pad channels, reshape to (9*cin_p, cout_p)."""
    scale, shift = _bn_scale_shift(bn, bias)
    kh, kw, cin, cout = w.shape
    wf = w * scale[None, None, None, :]
    wf = jnp.pad(wf, ((0, 0), (0, 0), (0, cin_p - cin), (0, cout_p - cout)))
    wf = wf.reshape(kh * kw * cin_p, cout_p).astype(dtype)   # rows ordered (kh, kw, cin)
    sh = jnp.pad(shift, (0, cout_p - cout)).reshape(1, cout_p).astype(jnp.float32)
    return wf, sh


# ----------------------------------------------------------------------------- fused kernel
def _bottleneck_kernel(x_ref, w1_ref, b1_ref, w2a_ref, b2a_ref,
                       w2b_ref, b2b_ref, w2c_ref, b2c_ref,
                       o_ref, pad_ref,
                       *, h, w, ho, wo, p, r, left_pad, cin_p, cout_p, is_add):
    cdt = pad_ref.dtype                                  # compute dtype (f32 or bf16)
    x2d = x_ref[...].reshape(h * w, cin_p)               # (M, Cin)

    # ---- branch 2a: 1x1 conv (in->in) + folded-BN shift + ReLU (kept in VMEM).
    h2a = jnp.dot(x2d, w2a_ref[...], preferred_element_type=jnp.float32)
    h2a = jnp.maximum(h2a + b2a_ref[...], 0.0)

    # ---- zero-pad h2a spatially into VMEM scratch (no HBM round-trip).
    # Interior is stored at a 16-sublane-aligned column offset so the partial
    # store is tile-aligned for both f32 and bf16.
    pad_ref[...] = jnp.zeros_like(pad_ref)
    pad_ref[p:p + h, left_pad:left_pad + w, :] = h2a.reshape(h, w, cin_p).astype(cdt)
    padded = pad_ref[...]                                # (hp, wpad, Cin)

    # ---- branch 2b: dilated 3x3 as ONE big-K matmul (im2col of the 9 taps).
    col0 = left_pad - p                                  # scratch col of padded-image col 0
    taps = []
    for kh in range(3):
        for kw in range(3):
            patch = padded[kh * r:kh * r + ho,
                           col0 + kw * r:col0 + kw * r + wo, :]
            taps.append(patch.reshape(ho * wo, cin_p))
    patches = jnp.concatenate(taps, axis=-1)             # (M, 9*Cin)
    h2b = jnp.dot(patches, w2b_ref[...], preferred_element_type=jnp.float32)
    h2b = jnp.maximum(h2b + b2b_ref[...], 0.0).astype(cdt)

    # ---- branch 2c: 1x1 conv (out->out) + shift + ReLU.
    out = jnp.dot(h2b, w2c_ref[...], preferred_element_type=jnp.float32)
    out = jnp.maximum(out + b2c_ref[...], 0.0)

    # ---- branch 1 (x1 = conv1x1 + BN, no ReLU) and residual add, fused.
    if is_add:
        x1 = jnp.dot(x2d, w1_ref[...], preferred_element_type=jnp.float32)
        out = out + (x1 + b1_ref[...])

    o_ref[...] = out.reshape(1, ho, wo, cout_p).astype(o_ref.dtype)


def fused_bottleneck(x_nhwc, weights, p, r, *, is_add, compute_dtype):
    n, h, w, cin_p = x_nhwc.shape
    (w1f, b1), (w2af, b2a), (w2bf, b2b), (w2cf, b2c) = weights
    cout_p = w1f.shape[1]
    ho, wo = h + 2 * p - 2 * r, w + 2 * p - 2 * r
    hp = h + 2 * p
    left_pad = _round_up(p, 16)          # sublane-tile-aligned interior store (f32 & bf16)
    wpad = left_pad + w + p

    kernel = functools.partial(
        _bottleneck_kernel, h=h, w=w, ho=ho, wo=wo, p=p, r=r,
        left_pad=left_pad, cin_p=cin_p, cout_p=cout_p, is_add=is_add)

    return pl.pallas_call(
        kernel,
        out_shape=jax.ShapeDtypeStruct((n, ho, wo, cout_p), jnp.float32),
        grid=(n,),
        in_specs=[
            pl.BlockSpec((1, h, w, cin_p), lambda b: (b, 0, 0, 0)),      # x
            pl.BlockSpec((cin_p, cout_p), lambda b: (0, 0)),             # w1 (folded)
            pl.BlockSpec((1, cout_p), lambda b: (0, 0)),                 # shift1
            pl.BlockSpec((cin_p, cin_p), lambda b: (0, 0)),              # w2a
            pl.BlockSpec((1, cin_p), lambda b: (0, 0)),                  # shift2a
            pl.BlockSpec((9 * cin_p, cout_p), lambda b: (0, 0)),         # w2b (im2col layout)
            pl.BlockSpec((1, cout_p), lambda b: (0, 0)),                 # shift2b
            pl.BlockSpec((cout_p, cout_p), lambda b: (0, 0)),            # w2c
            pl.BlockSpec((1, cout_p), lambda b: (0, 0)),                 # shift2c
        ],
        out_specs=pl.BlockSpec((1, ho, wo, cout_p), lambda b: (b, 0, 0, 0)),
        scratch_shapes=[pltpu.VMEM((hp, wpad, cin_p), compute_dtype)],
        compiler_params=pltpu.CompilerParams(
            dimension_semantics=("parallel",),            # v7x: 2 TCs share the batch
            vmem_limit_bytes=48 * 1024 * 1024),           # headroom under v7x's 64 MiB
    )(x_nhwc, w1f, b1, w2af, b2a, w2bf, b2b, w2cf, b2c)


# ----------------------------------------------------------------------------- module wrapper
def bottleneck_forward(x_nchw, params, p, r, is_add=True, compute_dtype=jnp.float32):
    x = jnp.transpose(x_nchw, (0, 2, 3, 1)).astype(jnp.float32)      # NCHW -> NHWC
    n, h, w, cin = x.shape
    cout = params["w1"].shape[1]
    ho, wo = h + 2 * p - 2 * r, w + 2 * p - 2 * r
    if is_add and (ho, wo) != (h, w):
        raise ValueError("is_add=True requires p == r so residual shapes match")

    cin_p, cout_p = _round_up(cin, 128), _round_up(cout, 128)        # lane-dense channels

    weights = (
        _fold_conv1x1(params["w1"], params["w1_b"], params["bn1"], cin_p, cout_p, compute_dtype),
        _fold_conv1x1(params["w2a"], params["w2a_b"], params["bn2a"], cin_p, cin_p, compute_dtype),
        _fold_conv3x3(params["w2b"], params["w2b_b"], params["bn2b"], cin_p, cout_p, compute_dtype),
        _fold_conv1x1(params["w2c"], params["w2c_b"], params["bn2c"], cout_p, cout_p, compute_dtype),
    )

    xp = jnp.pad(x, ((0, 0), (0, 0), (0, 0), (0, cin_p - cin))).astype(compute_dtype)
    out = fused_bottleneck(xp, weights, p, r, is_add=is_add, compute_dtype=compute_dtype)
    out = out[..., :cout]
    return jnp.transpose(out, (0, 3, 1, 2))                          # back to NCHW


# ----------------------------------------------------------------------------- reference (pure JAX)
def reference_forward(x_nchw, params, p, r, is_add=True):
    x = jnp.transpose(x_nchw, (0, 2, 3, 1)).astype(jnp.float32)

    def conv1x1_bn(y, wmat, b, bn, relu):
        scale, shift = _bn_scale_shift(bn, b)
        out = jnp.einsum("nhwc,cd->nhwd", y, wmat) * scale + shift
        return jnp.maximum(out, 0.0) if relu else out

    x1 = conv1x1_bn(x, params["w1"], params["w1_b"], params["bn1"], relu=False)
    h = conv1x1_bn(x, params["w2a"], params["w2a_b"], params["bn2a"], relu=True)

    scale, shift = _bn_scale_shift(params["bn2b"], params["w2b_b"])
    conv = lax.conv_general_dilated(
        h, params["w2b"], window_strides=(1, 1), padding=[(p, p), (p, p)],
        rhs_dilation=(r, r), dimension_numbers=("NHWC", "HWIO", "NHWC"))
    h = jnp.maximum(conv * scale + shift, 0.0)

    h = conv1x1_bn(h, params["w2c"], params["w2c_b"], params["bn2c"], relu=True)
    out = x1 + h if is_add else h
    return jnp.transpose(out, (0, 3, 1, 2))


# ----------------------------------------------------------------------------- params
def init_params(key, cin, cout):
    ks = jax.random.split(key, 12)

    def conv_w(k, shape):
        return jax.random.normal(k, shape, jnp.float32) * 0.1

    def bias(k, c):
        return jax.random.normal(k, (c,), jnp.float32) * 0.1

    def bn(k, c):
        k1, k2, k3, k4 = jax.random.split(k, 4)
        gamma = 1.0 + 0.1 * jax.random.normal(k1, (c,), jnp.float32)
        beta = 0.1 * jax.random.normal(k2, (c,), jnp.float32)
        mean = 0.1 * jax.random.normal(k3, (c,), jnp.float32)
        var = 1.0 + 0.1 * jax.random.uniform(k4, (c,), jnp.float32)
        return (gamma, beta, mean, var)

    return dict(
        w1=conv_w(ks[0], (cin, cout)), w1_b=bias(ks[1], cout), bn1=bn(ks[2], cout),
        w2a=conv_w(ks[3], (cin, cin)), w2a_b=bias(ks[4], cin), bn2a=bn(ks[5], cin),
        w2b=conv_w(ks[6], (3, 3, cin, cout)), w2b_b=bias(ks[7], cout), bn2b=bn(ks[8], cout),
        w2c=conv_w(ks[9], (cout, cout)), w2c_b=bias(ks[10], cout), bn2c=bn(ks[11], cout),
    )


# ----------------------------------------------------------------------------- main
if __name__ == "__main__":
    IN_C, OUT_C, P, R = 4, 8, 2, 2          # p == r keeps spatial size (required for add)
    x = jax.random.normal(jax.random.PRNGKey(0), (2, IN_C, 16, 16), jnp.float32)
    params = init_params(jax.random.PRNGKey(1), IN_C, OUT_C)

    # f32 path: tight check against the pure-JAX reference.
    out = jax.block_until_ready(bottleneck_forward(x, params, P, R, is_add=True))
    ref = reference_forward(x, params, P, R, is_add=True)
    assert out.shape == (2, OUT_C, 16, 16), out.shape
    assert jnp.allclose(out, ref, atol=1e-4, rtol=1e-4), float(jnp.max(jnp.abs(out - ref)))

    # is_add=False path.
    out_na = jax.block_until_ready(bottleneck_forward(x, params, P, R, is_add=False))
    ref_na = reference_forward(x, params, P, R, is_add=False)
    assert jnp.allclose(out_na, ref_na, atol=1e-4, rtol=1e-4)

    # bf16 activations/weights (HBM-bound regime on v6e/v7x), f32 accumulation: loose check.
    out_bf16 = jax.block_until_ready(
        bottleneck_forward(x, params, P, R, is_add=True, compute_dtype=jnp.bfloat16))
    assert jnp.allclose(out_bf16, ref, atol=1e-1, rtol=1e-1)

    print("KERNEL_OK")
</pallas_src>

<mosaic_0001>
module attributes {stable_mosaic.version = 11 : i64} {
  func.func @_bottleneck_kernel(%arg0: i32, %arg1: memref<1x16x16x128xf32, #tpu.memory_space<vmem>>, %arg2: memref<128x128xf32, #tpu.memory_space<vmem>>, %arg3: memref<1x128xf32, #tpu.memory_space<vmem>>, %arg4: memref<128x128xf32, #tpu.memory_space<vmem>>, %arg5: memref<1x128xf32, #tpu.memory_space<vmem>>, %arg6: memref<1152x128xf32, #tpu.memory_space<vmem>>, %arg7: memref<1x128xf32, #tpu.memory_space<vmem>>, %arg8: memref<128x128xf32, #tpu.memory_space<vmem>>, %arg9: memref<1x128xf32, #tpu.memory_space<vmem>>, %arg10: memref<1x16x16x128xf32, #tpu.memory_space<vmem>>, %arg11: memref<20x34x128xf32, #tpu.memory_space<vmem>>) attributes {dimension_semantics = [#tpu.dimension_semantics<parallel>], iteration_bounds = array<i64: 2>, scalar_prefetch = 0 : i64, scratch_operands = 1 : i64, tpu.core_type = #tpu.core_type<tc>, window_params = [{transform_indices = @transform_0, window_bounds = array<i64: 1, 16, 16, 128>}, {pipeline_mode = #tpu.pipeline_mode<synchronous>, transform_indices = @transform_1, window_bounds = array<i64: 128, 128>}, {pipeline_mode = #tpu.pipeline_mode<synchronous>, transform_indices = @transform_2, window_bounds = array<i64: 1, 128>}, {pipeline_mode = #tpu.pipeline_mode<synchronous>, transform_indices = @transform_3, window_bounds = array<i64: 128, 128>}, {pipeline_mode = #tpu.pipeline_mode<synchronous>, transform_indices = @transform_4, window_bounds = array<i64: 1, 128>}, {pipeline_mode = #tpu.pipeline_mode<synchronous>, transform_indices = @transform_5, window_bounds = array<i64: 1152, 128>}, {pipeline_mode = #tpu.pipeline_mode<synchronous>, transform_indices = @transform_6, window_bounds = array<i64: 1, 128>}, {pipeline_mode = #tpu.pipeline_mode<synchronous>, transform_indices = @transform_7, window_bounds = array<i64: 128, 128>}, {pipeline_mode = #tpu.pipeline_mode<synchronous>, transform_indices = @transform_8, window_bounds = array<i64: 1, 128>}, {transform_indices = @transform_9, window_bounds = array<i64: 1, 16, 16, 128>}]} {
    %c0 = arith.constant 0 : index
    %c0_0 = arith.constant 0 : index
    %c0_1 = arith.constant 0 : index
    %c0_2 = arith.constant 0 : index
    %0 = vector.load %arg1[%c0, %c0_0, %c0_1, %c0_2] : memref<1x16x16x128xf32, #tpu.memory_space<vmem>>, vector<1x16x16x128xf32>
    %1 = vector.shape_cast %0 : vector<1x16x16x128xf32> to vector<256x128xf32>
    %c0_3 = arith.constant 0 : index
    %c0_4 = arith.constant 0 : index
    %2 = vector.load %arg4[%c0_3, %c0_4] : memref<128x128xf32, #tpu.memory_space<vmem>>, vector<128x128xf32>
    %cst = arith.constant dense<0.000000e+00> : vector<256x128xf32>
    %3 = tpu.matmul %1, %2, %cst {dimension_numbers = #tpu.dot_dimension_numbers<[1], [0], [0], [1], [0, 0, 1, 1], [], []>} : vector<256x128xf32>, vector<128x128xf32>, vector<256x128xf32> -> vector<256x128xf32>
    %c0_5 = arith.constant 0 : index
    %c0_6 = arith.constant 0 : index
    %4 = vector.load %arg5[%c0_5, %c0_6] : memref<1x128xf32, #tpu.memory_space<vmem>>, vector<1x128xf32>
    %5 = vector.broadcast %4 : vector<1x128xf32> to vector<256x128xf32>
    %6 = arith.addf %3, %5 : vector<256x128xf32>
    %cst_7 = arith.constant 0.000000e+00 : f32
    %7 = vector.broadcast %cst_7 : f32 to vector<256x128xf32>
    %8 = arith.maximumf %6, %7 : vector<256x128xf32>
    %cst_8 = arith.constant 0.000000e+00 : f32
    %9 = vector.broadcast %cst_8 : f32 to vector<20x34x128xf32>
    %c0_9 = arith.constant 0 : index
    %c0_10 = arith.constant 0 : index
    %c0_11 = arith.constant 0 : index
    %10 = vector.load %arg11[%c0_9, %c0_10, %c0_11] : memref<20x34x128xf32, #tpu.memory_space<vmem>>, vector<20x34x128xf32>
    tpu.vector_store %arg11[%c0_9, %c0_10, %c0_11], %9 {strides = array<i32>} : memref<20x34x128xf32, #tpu.memory_space<vmem>>, vector<20x34x128xf32>,
    %11 = vector.shape_cast %8 : vector<256x128xf32> to vector<16x16x128xf32>
    %c2 = arith.constant 2 : index
    %c16 = arith.constant 16 : index
    %c0_12 = arith.constant 0 : index
    %12 = vector.load %arg11[%c2, %c16, %c0_12] : memref<20x34x128xf32, #tpu.memory_space<vmem>>, vector<16x16x128xf32>
    tpu.vector_store %arg11[%c2, %c16, %c0_12], %11 {strides = array<i32>} : memref<20x34x128xf32, #tpu.memory_space<vmem>>, vector<16x16x128xf32>,
    %c0_13 = arith.constant 0 : index
    %c0_14 = arith.constant 0 : index
    %c0_15 = arith.constant 0 : index
    %13 = vector.load %arg11[%c0_13, %c0_14, %c0_15] : memref<20x34x128xf32, #tpu.memory_space<vmem>>, vector<20x34x128xf32>
    %14 = vector.extract_strided_slice %13 {offsets = [0, 14, 0], sizes = [16, 16, 128], strides = [1, 1, 1]} : vector<20x34x128xf32> to vector<16x16x128xf32>
    %15 = vector.shape_cast %14 : vector<16x16x128xf32> to vector<256x128xf32>
    %16 = vector.extract_strided_slice %13 {offsets = [0, 16, 0], sizes = [16, 16, 128], strides = [1, 1, 1]} : vector<20x34x128xf32> to vector<16x16x128xf32>
    %17 = vector.shape_cast %16 : vector<16x16x128xf32> to vector<256x128xf32>
    %18 = vector.extract_strided_slice %13 {offsets = [0, 18, 0], sizes = [16, 16, 128], strides = [1, 1, 1]} : vector<20x34x128xf32> to vector<16x16x128xf32>
    %19 = vector.shape_cast %18 : vector<16x16x128xf32> to vector<256x128xf32>
    %20 = vector.extract_strided_slice %13 {offsets = [2, 14, 0], sizes = [16, 16, 128], strides = [1, 1, 1]} : vector<20x34x128xf32> to vector<16x16x128xf32>
    %21 = vector.shape_cast %20 : vector<16x16x128xf32> to vector<256x128xf32>
    %22 = vector.extract_strided_slice %13 {offsets = [2, 16, 0], sizes = [16, 16, 128], strides = [1, 1, 1]} : vector<20x34x128xf32> to vector<16x16x128xf32>
    %23 = vector.shape_cast %22 : vector<16x16x128xf32> to vector<256x128xf32>
    %24 = vector.extract_strided_slice %13 {offsets = [2, 18, 0], sizes = [16, 16, 128], strides = [1, 1, 1]} : vector<20x34x128xf32> to vector<16x16x128xf32>
    %25 = vector.shape_cast %24 : vector<16x16x128xf32> to vector<256x128xf32>
    %26 = vector.extract_strided_slice %13 {offsets = [4, 14, 0], sizes = [16, 16, 128], strides = [1, 1, 1]} : vector<20x34x128xf32> to vector<16x16x128xf32>
    %27 = vector.shape_cast %26 : vector<16x16x128xf32> to vector<256x128xf32>
    %28 = vector.extract_strided_slice %13 {offsets = [4, 16, 0], sizes = [16, 16, 128], strides = [1, 1, 1]} : vector<20x34x128xf32> to vector<16x16x128xf32>
    %29 = vector.shape_cast %28 : vector<16x16x128xf32> to vector<256x128xf32>
    %30 = vector.extract_strided_slice %13 {offsets = [4, 18, 0], sizes = [16, 16, 128], strides = [1, 1, 1]} : vector<20x34x128xf32> to vector<16x16x128xf32>
    %31 = vector.shape_cast %30 : vector<16x16x128xf32> to vector<256x128xf32>
    %32 = tpu.concatenate %15, %17, %19, %21, %23, %25, %27, %29, %31 in 1 : vector<256x128xf32>, vector<256x128xf32>, vector<256x128xf32>, vector<256x128xf32>, vector<256x128xf32>, vector<256x128xf32>, vector<256x128xf32>, vector<256x128xf32>, vector<256x128xf32> -> vector<256x1152xf32>
    %c0_16 = arith.constant 0 : index
    %c0_17 = arith.constant 0 : index
    %33 = vector.load %arg6[%c0_16, %c0_17] : memref<1152x128xf32, #tpu.memory_space<vmem>>, vector<1152x128xf32>
    %cst_18 = arith.constant dense<0.000000e+00> : vector<256x128xf32>
    %34 = tpu.matmul %32, %33, %cst_18 {dimension_numbers = #tpu.dot_dimension_numbers<[1], [0], [0], [1], [0, 0, 1, 1], [], []>} : vector<256x1152xf32>, vector<1152x128xf32>, vector<256x128xf32> -> vector<256x128xf32>
    %c0_19 = arith.constant 0 : index
    %c0_20 = arith.constant 0 : index
    %35 = vector.load %arg7[%c0_19, %c0_20] : memref<1x128xf32, #tpu.memory_space<vmem>>, vector<1x128xf32>
    %36 = vector.broadcast %35 : vector<1x128xf32> to vector<256x128xf32>
    %37 = arith.addf %34, %36 : vector<256x128xf32>
    %cst_21 = arith.constant 0.000000e+00 : f32
    %38 = vector.broadcast %cst_21 : f32 to vector<256x128xf32>
    %39 = arith.maximumf %37, %38 : vector<256x128xf32>
    %c0_22 = arith.constant 0 : index
    %c0_23 = arith.constant 0 : index
    %40 = vector.load %arg8[%c0_22, %c0_23] : memref<128x128xf32, #tpu.memory_space<vmem>>, vector<128x128xf32>
    %cst_24 = arith.constant dense<0.000000e+00> : vector<256x128xf32>
    %41 = tpu.matmul %39, %40, %cst_24 {dimension_numbers = #tpu.dot_dimension_numbers<[1], [0], [0], [1], [0, 0, 1, 1], [], []>} : vector<256x128xf32>, vector<128x128xf32>, vector<256x128xf32> -> vector<256x128xf32>
    %c0_25 = arith.constant 0 : index
    %c0_26 = arith.constant 0 : index
    %42 = vector.load %arg9[%c0_25, %c0_26] : memref<1x128xf32, #tpu.memory_space<vmem>>, vector<1x128xf32>
    %43 = vector.broadcast %42 : vector<1x128xf32> to vector<256x128xf32>
    %44 = arith.addf %41, %43 : vector<256x128xf32>
    %cst_27 = arith.constant 0.000000e+00 : f32
    %45 = vector.broadcast %cst_27 : f32 to vector<256x128xf32>
    %46 = arith.maximumf %44, %45 : vector<256x128xf32>
    %c0_28 = arith.constant 0 : index
    %c0_29 = arith.constant 0 : index
    %47 = vector.load %arg2[%c0_28, %c0_29] : memref<128x128xf32, #tpu.memory_space<vmem>>, vector<128x128xf32>
    %cst_30 = arith.constant dense<0.000000e+00> : vector<256x128xf32>
    %48 = tpu.matmul %1, %47, %cst_30 {dimension_numbers = #tpu.dot_dimension_numbers<[1], [0], [0], [1], [0, 0, 1, 1], [], []>} : vector<256x128xf32>, vector<128x128xf32>, vector<256x128xf32> -> vector<256x128xf32>
    %c0_31 = arith.constant 0 : index
    %c0_32 = arith.constant 0 : index
    %49 = vector.load %arg3[%c0_31, %c0_32] : memref<1x128xf32, #tpu.memory_space<vmem>>, vector<1x128xf32>
    %50 = vector.broadcast %49 : vector<1x128xf32> to vector<256x128xf32>
    %51 = arith.addf %48, %50 : vector<256x128xf32>
    %52 = arith.addf %46, %51 : vector<256x128xf32>
    %53 = vector.shape_cast %52 : vector<256x128xf32> to vector<1x16x16x128xf32>
    %c0_33 = arith.constant 0 : index
    %c0_34 = arith.constant 0 : index
    %c0_35 = arith.constant 0 : index
    %c0_36 = arith.constant 0 : index
    %54 = vector.load %arg10[%c0_33, %c0_34, %c0_35, %c0_36] : memref<1x16x16x128xf32, #tpu.memory_space<vmem>>, vector<1x16x16x128xf32>
    tpu.vector_store %arg10[%c0_33, %c0_34, %c0_35, %c0_36], %53 {strides = array<i32>} : memref<1x16x16x128xf32, #tpu.memory_space<vmem>>, vector<1x16x16x128xf32>,
    return
  }
  func.func @transform_0(%arg0: i32) -> (i32, i32, i32, i32) {
    %c0_i32 = arith.constant 0 : i32
    %c0_i32_0 = arith.constant 0 : i32
    %c0_i32_1 = arith.constant 0 : i32
    %c0_i32_2 = arith.constant 0 : i32
    return %arg0, %c0_i32, %c0_i32_0, %c0_i32_1 : i32, i32, i32, i32
  }
  func.func @transform_1(%arg0: i32) -> (i32, i32) {
    %c0_i32 = arith.constant 0 : i32
    %c0_i32_0 = arith.constant 0 : i32
    %c0_i32_1 = arith.constant 0 : i32
    return %c0_i32, %c0_i32_0 : i32, i32
  }
  func.func @transform_2(%arg0: i32) -> (i32, i32) {
    %c0_i32 = arith.constant 0 : i32
    %c0_i32_0 = arith.constant 0 : i32
    %c0_i32_1 = arith.constant 0 : i32
    return %c0_i32, %c0_i32_0 : i32, i32
  }
  func.func @transform_3(%arg0: i32) -> (i32, i32) {
    %c0_i32 = arith.constant 0 : i32
    %c0_i32_0 = arith.constant 0 : i32
    %c0_i32_1 = arith.constant 0 : i32
    return %c0_i32, %c0_i32_0 : i32, i32
  }
  func.func @transform_4(%arg0: i32) -> (i32, i32) {
    %c0_i32 = arith.constant 0 : i32
    %c0_i32_0 = arith.constant 0 : i32
    %c0_i32_1 = arith.constant 0 : i32
    return %c0_i32, %c0_i32_0 : i32, i32
  }
  func.func @transform_5(%arg0: i32) -> (i32, i32) {
    %c0_i32 = arith.constant 0 : i32
    %c0_i32_0 = arith.constant 0 : i32
    %c0_i32_1 = arith.constant 0 : i32
    return %c0_i32, %c0_i32_0 : i32, i32
  }
  func.func @transform_6(%arg0: i32) -> (i32, i32) {
    %c0_i32 = arith.constant 0 : i32
    %c0_i32_0 = arith.constant 0 : i32
    %c0_i32_1 = arith.constant 0 : i32
    return %c0_i32, %c0_i32_0 : i32, i32
  }
  func.func @transform_7(%arg0: i32) -> (i32, i32) {
    %c0_i32 = arith.constant 0 : i32
    %c0_i32_0 = arith.constant 0 : i32
    %c0_i32_1 = arith.constant 0 : i32
    return %c0_i32, %c0_i32_0 : i32, i32
  }
  func.func @transform_8(%arg0: i32) -> (i32, i32) {
    %c0_i32 = arith.constant 0 : i32
    %c0_i32_0 = arith.constant 0 : i32
    %c0_i32_1 = arith.constant 0 : i32
    return %c0_i32, %c0_i32_0 : i32, i32
  }
  func.func @transform_9(%arg0: i32) -> (i32, i32, i32, i32) {
    %c0_i32 = arith.constant 0 : i32
    %c0_i32_0 = arith.constant 0 : i32
    %c0_i32_1 = arith.constant 0 : i32
    %c0_i32_2 = arith.constant 0 : i32
    return %arg0, %c0_i32, %c0_i32_0, %c0_i32_1 : i32, i32, i32, i32
  }
}

</mosaic_0001>

<llo_original>
// kernel: tpu_custom_call.1
$region0: #{tpu_custom_call.1}
  #allocation0 [shape = 'u32[]', space=smem, size = 0x4, offset = 0x4, fixed_abs, tag = 'smem constant byte address 0x4 - core index']
  #allocation1 [shape = 'u32[144,128]{1,0:T(1,128)}', space=vmem, size = 0x12000, scoped, tag = 'internal scratch']
  #allocation2 [shape = 'f32[20,34,128]{2,1,0:T(8,128)}', space=vmem, size = 0x64000, scoped, tag = 'scratch operand']
  %s0 = inlined_call_operand.hbm [shape: f32[2,16,16,128], index: 0, kind: input, shape index: {}]
  %s1 = inlined_call_operand.hbm [shape: f32[128,128], index: 1, kind: input, shape index: {}]
  %s2 = inlined_call_operand.vmem [shape: f32[1,128], index: 2, kind: input, shape index: {}]
  %s3 = inlined_call_operand.hbm [shape: f32[128,128], index: 3, kind: input, shape index: {}]
  %s4 = inlined_call_operand.vmem [shape: f32[1,128], index: 4, kind: input, shape index: {}]
  %s5 = inlined_call_operand.hbm [shape: f32[1152,128], index: 5, kind: input, shape index: {}]
  %s6 = inlined_call_operand.vmem [shape: f32[1,128], index: 6, kind: input, shape index: {}]
  %s7 = inlined_call_operand.hbm [shape: f32[128,128], index: 7, kind: input, shape index: {}]
  %s8 = inlined_call_operand.vmem [shape: f32[1,128], index: 8, kind: input, shape index: {}]
  %s9 = inlined_call_operand.hbm [shape: f32[2,16,16,128], index: 9, kind: output, shape index: {}]
  %s10 = sld [smem:[#allocation0]]
  $region89: #{tpu_custom_call.1} parent=0
    _
  %s12 = ssub.s32 1, %s10
  %s13 = scalar_select 0, %s12, %s10
  $region1: #{tpu_custom_call.1} parent=0
    #allocation3 [shape = 'u8[262144]{0}', space=vmem, size = 0x40000, scoped, tag = 'input window, operand 0']
    #allocation4 [shape = 's32[2]{0}', space=sflag, size = 0x8, scoped, tag = 'scoped memory for tpu_custom_call.1']
    #allocation5 [shape = 's32[2]{0}', space=sflag, size = 0x8, scoped, tag = 'scoped memory for tpu_custom_call.1']
    #allocation6 [shape = 'u8[65536]{0}', space=vmem, size = 0x10000, scoped, tag = 'input window, operand 1, single buffered']
    #allocation7 [shape = 's32[1]{0}', space=sflag, size = 0x4, scoped, tag = 'scoped memory for tpu_custom_call.1']
    #allocation8 [shape = 'u8[65536]{0}', space=vmem, size = 0x10000, scoped, tag = 'input window, operand 3, single buffered']
    #allocation9 [shape = 'u8[589824]{0}', space=vmem, size = 0x90000, scoped, tag = 'input window, operand 5, single buffered']
    #allocation10 [shape = 's32[1]{0}', space=sflag, size = 0x4, scoped, tag = 'scoped memory for tpu_custom_call.1']
    #allocation11 [shape = 'u8[65536]{0}', space=vmem, size = 0x10000, scoped, tag = 'input window, operand 7, single buffered']
    #allocation12 [shape = 'u8[262144]{0}', space=vmem, size = 0x40000, scoped, tag = 'output window, operand 0']
    %14 = vsyncpa [#allocation4], 0
    %s15 = scalar_lea.sflag [#allocation4], 1
    %16 = vsyncpa %s15, 0
    %17 = vsyncpa [#allocation7], 0
    %18 = vsyncpa [#allocation10], 0
    %19 = vsyncpa [#allocation5], 0
    %s20 = scalar_lea.sflag [#allocation5], 1
    %21 = vsyncpa %s20, 0
    loop: start=0, step=1, limit=4
    $region2: #{tpu_custom_call.1} parent=1 // loop_pre_header
      _
    $region3: #{tpu_custom_call.1} parent=1 // loop_header
      %s23 = sphi 0, %s27
      %p24 = scmp.ge.s32.totalorder %s23, 4
      %s33 = sphi 0, %s35
      %s36 = sphi 0, %s33
      %s37 = sphi 0, %s36
      %s53 = sphi 0, %s37
      %s57 = sphi 0, %s57
      %s59 = sphi 0, %s57
      %s60 = sphi 0, %s59
      %s74 = sphi 0, %s60
      %s78 = sphi 0, %s78
      %s80 = sphi 0, %s78
      %s81 = sphi 0, %s80
      %s95 = sphi 0, %s81
      %s99 = sphi 0, %s99
      %s101 = sphi 0, %s99
      %s102 = sphi 0, %s101
      %s116 = sphi 0, %s102
      %s120 = sphi 0, %s120
      %s122 = sphi 0, %s120
      %s123 = sphi 0, %s122
      %s137 = sphi 0, %s123
      %s141 = sphi 0, %s141
      %s143 = sphi 0, %s141
      %s144 = sphi 0, %s143
      %s158 = sphi 0, %s144
      %s162 = sphi 0, %s162
      %s164 = sphi 0, %s162
      %s165 = sphi 0, %s164
      %s179 = sphi 0, %s165
      %s183 = sphi 0, %s183
      %s185 = sphi 0, %s183
      %s186 = sphi 0, %s185
      %s200 = sphi 0, %s186
      %s204 = sphi 0, %s204
      %s206 = sphi 0, %s204
      %s207 = sphi 0, %s206
      %s221 = sphi 0, %s207
      %s227 = sphi 0, %s229
      %s230 = sphi 0, %s227
      %s231 = sphi 0, %s230
      %s247 = sphi 0, %s231
    $region4: #{tpu_custom_call.1} parent=1 // loop_header_branch
      %26 = sbr.rel (%p24) target = $region8
    $region5: #{tpu_custom_call.1} parent=1 // loop_body
      %s28 = ssub.s32 %s23, 1
      %s29 = ssub.s32 %s23, 2
      %s30 = sadd.s32 %s23, 1
      %s31 = ssub.s32 %s23, %s30
      %p32 = scmp.eq.s32.totalorder %s31, 0
      %s34 = sadd.s32 %s33, 1
      %s35 = scalar_select %p32, %s33, %s34
      %p38 = pneg %p32
      %p39 = scmp.eq.s32.totalorder %s23, 1
      %p40 = por %p38, %p39
      %p41 = scmp.ne.s32.totalorder %s33, %s36
      %p42 = scmp.eq.s32.totalorder %s23, 0
      %p43 = por %p41, %p42
      %p44 = scmp.ne.s32.totalorder %s33, %s36
      %p45 = scmp.eq.s32.totalorder %s28, 1
      %p46 = por %p44, %p45
      %p47 = scmp.ne.s32.totalorder %s36, %s37
      %p48 = scmp.eq.s32.totalorder %s28, 0
      %p49 = por %p47, %p48
      %p50 = scmp.ne.s32.totalorder %s36, %s37
      %p51 = scmp.eq.s32.totalorder %s29, 1
      %p52 = por %p50, %p51
      %p54 = scmp.ne.s32.totalorder %s37, %s53
      %p55 = scmp.eq.s32.totalorder %s29, 0
      %p56 = por %p54, %p55
      %s58 = sadd.s32 %s57, 1
      %p61 = scmp.eq.s32.totalorder %s23, 1
      %p62 = scmp.ne.s32.totalorder %s57, %s59
      %p63 = scmp.eq.s32.totalorder %s23, 0
      %p64 = por %p62, %p63
      %p65 = scmp.ne.s32.totalorder %s57, %s59
      %p66 = scmp.eq.s32.totalorder %s28, 1
      %p67 = por %p65, %p66
      %p68 = scmp.ne.s32.totalorder %s59, %s60
      %p69 = scmp.eq.s32.totalorder %s28, 0
      %p70 = por %p68, %p69
      %p71 = scmp.ne.s32.totalorder %s59, %s60
      %p72 = scmp.eq.s32.totalorder %s29, 1
      %p73 = por %p71, %p72
      %p75 = scmp.ne.s32.totalorder %s60, %s74
      %p76 = scmp.eq.s32.totalorder %s29, 0
      %p77 = por %p75, %p76
      %s79 = sadd.s32 %s78, 1
      %p82 = scmp.eq.s32.totalorder %s23, 1
      %p83 = scmp.ne.s32.totalorder %s78, %s80
      %p84 = scmp.eq.s32.totalorder %s23, 0
      %p85 = por %p83, %p84
      %p86 = scmp.ne.s32.totalorder %s78, %s80
      %p87 = scmp.eq.s32.totalorder %s28, 1
      %p88 = por %p86, %p87
      %p89 = scmp.ne.s32.totalorder %s80, %s81
      %p90 = scmp.eq.s32.totalorder %s28, 0
      %p91 = por %p89, %p90
      %p92 = scmp.ne.s32.totalorder %s80, %s81
      %p93 = scmp.eq.s32.totalorder %s29, 1
      %p94 = por %p92, %p93
      %p96 = scmp.ne.s32.totalorder %s81, %s95
      %p97 = scmp.eq.s32.totalorder %s29, 0
      %p98 = por %p96, %p97
      %s100 = sadd.s32 %s99, 1
      %p103 = scmp.eq.s32.totalorder %s23, 1
      %p104 = scmp.ne.s32.totalorder %s99, %s101
      %p105 = scmp.eq.s32.totalorder %s23, 0
      %p106 = por %p104, %p105
      %p107 = scmp.ne.s32.totalorder %s99, %s101
      %p108 = scmp.eq.s32.totalorder %s28, 1
      %p109 = por %p107, %p108
      %p110 = scmp.ne.s32.totalorder %s101, %s102
      %p111 = scmp.eq.s32.totalorder %s28, 0
      %p112 = por %p110, %p111
      %p113 = scmp.ne.s32.totalorder %s101, %s102
      %p114 = scmp.eq.s32.totalorder %s29, 1
      %p115 = por %p113, %p114
      %p117 = scmp.ne.s32.totalorder %s102, %s116
      %p118 = scmp.eq.s32.totalorder %s29, 0
      %p119 = por %p117, %p118
      %s121 = sadd.s32 %s120, 1
      %p124 = scmp.eq.s32.totalorder %s23, 1
      %p125 = scmp.ne.s32.totalorder %s120, %s122
      %p126 = scmp.eq.s32.totalorder %s23, 0
      %p127 = por %p125, %p126
      %p128 = scmp.ne.s32.totalorder %s120, %s122
      %p129 = scmp.eq.s32.totalorder %s28, 1
      %p130 = por %p128, %p129
      %p131 = scmp.ne.s32.totalorder %s122, %s123
      %p132 = scmp.eq.s32.totalorder %s28, 0
      %p133 = por %p131, %p132
      %p134 = scmp.ne.s32.totalorder %s122, %s123
      %p135 = scmp.eq.s32.totalorder %s29, 1
      %p136 = por %p134, %p135
      %p138 = scmp.ne.s32.totalorder %s123, %s137
      %p139 = scmp.eq.s32.totalorder %s29, 0
      %p140 = por %p138, %p139
      %s142 = sadd.s32 %s141, 1
      %p145 = scmp.eq.s32.totalorder %s23, 1
      %p146 = scmp.ne.s32.totalorder %s141, %s143
      %p147 = scmp.eq.s32.totalorder %s23, 0
      %p148 = por %p146, %p147
      %p149 = scmp.ne.s32.totalorder %s141, %s143
      %p150 = scmp.eq.s32.totalorder %s28, 1
      %p151 = por %p149, %p150
      %p152 = scmp.ne.s32.totalorder %s143, %s144
      %p153 = scmp.eq.s32.totalorder %s28, 0
      %p154 = por %p152, %p153
      %p155 = scmp.ne.s32.totalorder %s143, %s144
      %p156 = scmp.eq.s32.totalorder %s29, 1
      %p157 = por %p155, %p156
      %p159 = scmp.ne.s32.totalorder %s144, %s158
      %p160 = scmp.eq.s32.totalorder %s29, 0
      %p161 = por %p159, %p160
      %s163 = sadd.s32 %s162, 1
      %p166 = scmp.eq.s32.totalorder %s23, 1
      %p167 = scmp.ne.s32.totalorder %s162, %s164
      %p168 = scmp.eq.s32.totalorder %s23, 0
      %p169 = por %p167, %p168
      %p170 = scmp.ne.s32.totalorder %s162, %s164
      %p171 = scmp.eq.s32.totalorder %s28, 1
      %p172 = por %p170, %p171
      %p173 = scmp.ne.s32.totalorder %s164, %s165
      %p174 = scmp.eq.s32.totalorder %s28, 0
      %p175 = por %p173, %p174
      %p176 = scmp.ne.s32.totalorder %s164, %s165
      %p177 = scmp.eq.s32.totalorder %s29, 1
      %p178 = por %p176, %p177
      %p180 = scmp.ne.s32.totalorder %s165, %s179
      %p181 = scmp.eq.s32.totalorder %s29, 0
      %p182 = por %p180, %p181
      %s184 = sadd.s32 %s183, 1
      %p187 = scmp.eq.s32.totalorder %s23, 1
      %p188 = scmp.ne.s32.totalorder %s183, %s185
      %p189 = scmp.eq.s32.totalorder %s23, 0
      %p190 = por %p188, %p189
      %p191 = scmp.ne.s32.totalorder %s183, %s185
      %p192 = scmp.eq.s32.totalorder %s28, 1
      %p193 = por %p191, %p192
      %p194 = scmp.ne.s32.totalorder %s185, %s186
      %p195 = scmp.eq.s32.totalorder %s28, 0
      %p196 = por %p194, %p195
      %p197 = scmp.ne.s32.totalorder %s185, %s186
      %p198 = scmp.eq.s32.totalorder %s29, 1
      %p199 = por %p197, %p198
      %p201 = scmp.ne.s32.totalorder %s186, %s200
      %p202 = scmp.eq.s32.totalorder %s29, 0
      %p203 = por %p201, %p202
      %s205 = sadd.s32 %s204, 1
      %p208 = scmp.eq.s32.totalorder %s23, 1
      %p209 = scmp.ne.s32.totalorder %s204, %s206
      %p210 = scmp.eq.s32.totalorder %s23, 0
      %p211 = por %p209, %p210
      %p212 = scmp.ne.s32.totalorder %s204, %s206
      %p213 = scmp.eq.s32.totalorder %s28, 1
      %p214 = por %p212, %p213
      %p215 = scmp.ne.s32.totalorder %s206, %s207
      %p216 = scmp.eq.s32.totalorder %s28, 0
      %p217 = por %p215, %p216
      %p218 = scmp.ne.s32.totalorder %s206, %s207
      %p219 = scmp.eq.s32.totalorder %s29, 1
      %p220 = por %p218, %p219
      %p222 = scmp.ne.s32.totalorder %s207, %s221
      %p223 = scmp.eq.s32.totalorder %s29, 0
      %p224 = por %p222, %p223
      %s225 = ssub.s32 %s23, %s30
      %p226 = scmp.eq.s32.totalorder %s225, 0
      %s228 = sadd.s32 %s227, 1
      %s229 = scalar_select %p226, %s227, %s228
      %p232 = pneg %p226
      %p233 = scmp.eq.s32.totalorder %s23, 1
      %p234 = por %p232, %p233
      %p235 = scmp.ne.s32.totalorder %s227, %s230
      %p236 = scmp.eq.s32.totalorder %s23, 0
      %p237 = por %p235, %p236
      %p238 = scmp.ne.s32.totalorder %s227, %s230
      %p239 = scmp.eq.s32.totalorder %s28, 1
      %p240 = por %p238, %p239
      %p241 = scmp.ne.s32.totalorder %s230, %s231
      %p242 = scmp.eq.s32.totalorder %s28, 0
      %p243 = por %p241, %p242
      %p244 = scmp.ne.s32.totalorder %s230, %s231
      %p245 = scmp.eq.s32.totalorder %s29, 1
      %p246 = por %p244, %p245
      %p248 = scmp.ne.s32.totalorder %s231, %s247
      %p249 = scmp.eq.s32.totalorder %s29, 0
      %p250 = por %p248, %p249
      %p251 = scmp.le.s32.totalorder 1, %s23
      %p252 = scmp.lt.s32.totalorder %s23, 3
      %p253 = pnand %p251, %p252
      %p254 = pneg %p253
      // Predicated region
      $region9: #{tpu_custom_call.1} parent=5 // pred_check
        _
      $region10: #{tpu_custom_call.1} parent=5 // pred_check_branch
        %256 = sbr.rel (%p253) target = $region12
      $region11: #{tpu_custom_call.1} parent=5 // pred_region
        %s257 = ssub.s32 %s23, 1
        // Predicated region
        $region13: #{tpu_custom_call.1} parent=11 // pred_check
          %p258 = pneg %p70
        $region14: #{tpu_custom_call.1} parent=11 // pred_check_branch
          %260 = sbr.rel (%p258) target = $region16
        $region15: #{tpu_custom_call.1} parent=11 // pred_region
          %s262 = ssub.s32 2048, 2048
          %263 = vsyncadd [#allocation7], %s262
          %s264 = sshll.u32 [#allocation6], 4
          %s265 = int_to_ptr.vmem [resolvable:$true] %s264
          %270 = dma.hbm_to_vmem [thread:$0]  %s1, 2048, %s265, [#allocation7], 128, 128, 8
        $region16: #{tpu_custom_call.1} parent=11 // pred_fallthru
          _
        // Predicated region
        $region17: #{tpu_custom_call.1} parent=11 // pred_check
          %p271 = pneg %p91
        $region18: #{tpu_custom_call.1} parent=11 // pred_check_branch
          %273 = sbr.rel (%p271) target = $region20
        $region19: #{tpu_custom_call.1} parent=11 // pred_region
          _
        $region20: #{tpu_custom_call.1} parent=11 // pred_fallthru
          _
        // Predicated region
        $region21: #{tpu_custom_call.1} parent=11 // pred_check
          %p274 = pneg %p112
        $region22: #{tpu_custom_call.1} parent=11 // pred_check_branch
          %276 = sbr.rel (%p274) target = $region24
        $region23: #{tpu_custom_call.1} parent=11 // pred_region
          %s278 = ssub.s32 2048, 2048
          %279 = vsyncadd [#allocation7], %s278
          %s280 = sshll.u32 [#allocation8], 4
          %s281 = int_to_ptr.vmem [resolvable:$true] %s280
          %286 = dma.hbm_to_vmem [thread:$0]  %s3, 2048, %s281, [#allocation7], 128, 128, 8
        $region24: #{tpu_custom_call.1} parent=11 // pred_fallthru
          _
        // Predicated region
        $region25: #{tpu_custom_call.1} parent=11 // pred_check
          %p287 = pneg %p133
        $region26: #{tpu_custom_call.1} parent=11 // pred_check_branch
          %289 = sbr.rel (%p287) target = $region28
        $region27: #{tpu_custom_call.1} parent=11 // pred_region
          _
        $region28: #{tpu_custom_call.1} parent=11 // pred_fallthru
          _
        // Predicated region
        $region29: #{tpu_custom_call.1} parent=11 // pred_check
          %p290 = pneg %p154
        $region30: #{tpu_custom_call.1} parent=11 // pred_check_branch
          %292 = sbr.rel (%p290) target = $region32
        $region31: #{tpu_custom_call.1} parent=11 // pred_region
          %s294 = ssub.s32 18432, 18432
          %295 = vsyncadd [#allocation10], %s294
          %s296 = sshll.u32 [#allocation9], 4
          %s297 = int_to_ptr.vmem [resolvable:$true] %s296
          %302 = dma.hbm_to_vmem [thread:$0]  %s5, 18432, %s297, [#allocation10], 128, 128, 8
        $region32: #{tpu_custom_call.1} parent=11 // pred_fallthru
          _
        // Predicated region
        $region33: #{tpu_custom_call.1} parent=11 // pred_check
          %p303 = pneg %p175
        $region34: #{tpu_custom_call.1} parent=11 // pred_check_branch
          %305 = sbr.rel (%p303) target = $region36
        $region35: #{tpu_custom_call.1} parent=11 // pred_region
          _
        $region36: #{tpu_custom_call.1} parent=11 // pred_fallthru
          _
        // Predicated region
        $region37: #{tpu_custom_call.1} parent=11 // pred_check
          %p306 = pneg %p196
        $region38: #{tpu_custom_call.1} parent=11 // pred_check_branch
          %308 = sbr.rel (%p306) target = $region40
        $region39: #{tpu_custom_call.1} parent=11 // pred_region
          %s310 = ssub.s32 2048, 2048
          %311 = vsyncadd [#allocation10], %s310
          %s312 = sshll.u32 [#allocation11], 4
          %s313 = int_to_ptr.vmem [resolvable:$true] %s312
          %318 = dma.hbm_to_vmem [thread:$0]  %s7, 2048, %s313, [#allocation10], 128, 128, 8
        $region40: #{tpu_custom_call.1} parent=11 // pred_fallthru
          _
        // Predicated region
        $region41: #{tpu_custom_call.1} parent=11 // pred_check
          %p319 = pneg %p217
        $region42: #{tpu_custom_call.1} parent=11 // pred_check_branch
          %321 = sbr.rel (%p319) target = $region44
        $region43: #{tpu_custom_call.1} parent=11 // pred_region
          _
        $region44: #{tpu_custom_call.1} parent=11 // pred_fallthru
          _
      $region12: #{tpu_custom_call.1} parent=5 // pred_fallthru
        _
      %p322 = scmp.lt.s32.totalorder %s23, 2
      // Predicated region
      $region45: #{tpu_custom_call.1} parent=5 // pred_check
        %p323 = pneg %p322
      $region46: #{tpu_custom_call.1} parent=5 // pred_check_branch
        %325 = sbr.rel (%p323) target = $region48
      $region47: #{tpu_custom_call.1} parent=5 // pred_region
        // Predicated region
        $region49: #{tpu_custom_call.1} parent=47 // pred_check
          %p326 = pneg %p43
        $region50: #{tpu_custom_call.1} parent=47 // pred_check_branch
          %328 = sbr.rel (%p326) target = $region52
        $region51: #{tpu_custom_call.1} parent=47 // pred_region
          %s329 = sand.u32 %s33, 1
          %s330 = scalar_lea.sflag [#allocation4], %s329
          %s331 = sand.u32 %s33, 1
          %s332 = smul.addr %s331, 256
          %s333 = scalar_lea.vmem [#allocation3], %s332
          %s335 = ssub.s32 4096, 4096
          %336 = vsyncadd %s330, %s335
          %s337 = smul.addr %s23, 32
          %s338 = smul.addr %s337, 128
          %s339 = scalar_lea.hbm %s0, %s338
          %s340 = sshll.u32 %s333, 4
          %s341 = int_to_ptr.vmem [resolvable:$true] %s340
          %346 = dma.hbm_to_vmem [thread:$0]  %s339, 4096, %s341, %s330, 128, 128, 8
        $region52: #{tpu_custom_call.1} parent=47 // pred_fallthru
          _
      $region48: #{tpu_custom_call.1} parent=5 // pred_fallthru
        _
      %p347 = scmp.le.s32.totalorder 1, %s23
      %p348 = scmp.lt.s32.totalorder %s23, 3
      %p349 = pnand %p347, %p348
      %p350 = pneg %p349
      // Predicated region
      $region53: #{tpu_custom_call.1} parent=5 // pred_check
        _
      $region54: #{tpu_custom_call.1} parent=5 // pred_check_branch
        %352 = sbr.rel (%p349) target = $region56
      $region55: #{tpu_custom_call.1} parent=5 // pred_region
        %s353 = ssub.s32 %s23, 1
        %s354 = sand.u32 %s36, 1
        %s355 = scalar_lea.sflag [#allocation4], %s354
        %s356 = sand.u32 %s36, 1
        %s357 = smul.addr %s356, 256
        %s358 = scalar_lea.vmem [#allocation3], %s357
        // Predicated region
        $region57: #{tpu_custom_call.1} parent=55 // pred_check
          %p359 = pneg %p49
        $region58: #{tpu_custom_call.1} parent=55 // pred_check_branch
          %361 = sbr.rel (%p359) target = $region60
        $region59: #{tpu_custom_call.1} parent=55 // pred_region
          %362 = dma.done %s355, 4096
        $region60: #{tpu_custom_call.1} parent=55 // pred_fallthru
          _
        // Predicated region
        $region61: #{tpu_custom_call.1} parent=55 // pred_check
          %p363 = pneg %p70
        $region62: #{tpu_custom_call.1} parent=55 // pred_check_branch
          %365 = sbr.rel (%p363) target = $region64
        $region63: #{tpu_custom_call.1} parent=55 // pred_region
          %366 = dma.done [#allocation7], 2048
        $region64: #{tpu_custom_call.1} parent=55 // pred_fallthru
          _
        // Predicated region
        $region65: #{tpu_custom_call.1} parent=55 // pred_check
          %p367 = pneg %p112
        $region66: #{tpu_custom_call.1} parent=55 // pred_check_branch
          %369 = sbr.rel (%p367) target = $region68
        $region67: #{tpu_custom_call.1} parent=55 // pred_region
          %370 = dma.done [#allocation7], 2048
        $region68: #{tpu_custom_call.1} parent=55 // pred_fallthru
          _
        // Predicated region
        $region69: #{tpu_custom_call.1} parent=55 // pred_check
          %p371 = pneg %p154
        $region70: #{tpu_custom_call.1} parent=55 // pred_check_branch
          %373 = sbr.rel (%p371) target = $region72
        $region71: #{tpu_custom_call.1} parent=55 // pred_region
          %374 = dma.done [#allocation10], 18432
        $region72: #{tpu_custom_call.1} parent=55 // pred_fallthru
          _
        // Predicated region
        $region73: #{tpu_custom_call.1} parent=55 // pred_check
          %p375 = pneg %p196
        $region74: #{tpu_custom_call.1} parent=55 // pred_check_branch
          %377 = sbr.rel (%p375) target = $region76
        $region75: #{tpu_custom_call.1} parent=55 // pred_region
          %378 = dma.done [#allocation10], 2048
        $region76: #{tpu_custom_call.1} parent=55 // pred_fallthru
          _
        %s379 = sand.u32 %s36, 1
        %s380 = scalar_lea.sflag [#allocation4], %s379
        %s381 = sand.u32 %s36, 1
        %s382 = smul.addr %s381, 256
        %s383 = scalar_lea.vmem [#allocation3], %s382
        %p384 = pneg %p49
        %p385 = pneg %p46
        %p386 = pneg %p70
        %p387 = pneg %p67
        %p388 = pneg %p91
        %p389 = pneg %p88
        %p390 = pneg %p112
        %p391 = pneg %p109
        %p392 = pneg %p133
        %p393 = pneg %p130
        %p394 = pneg %p154
        %p395 = pneg %p151
        %p396 = pneg %p175
        %p397 = pneg %p172
        %p398 = pneg %p196
        %p399 = pneg %p193
        %p400 = pneg %p217
        %p401 = pneg %p214
        %p402 = pneg %p243
        %p403 = pneg %p240
        %s404 = sand.u32 %s230, 1
        %s405 = scalar_lea.sflag [#allocation5], %s404
        %s406 = sand.u32 %s230, 1
        %s407 = smul.addr %s406, 256
        %s408 = scalar_lea.vmem [#allocation12], %s407
        %v409 = vld [vmem:[%s358] sm:$0xff]
        %v410 = vld [vmem:[%s358 + $0x8] sm:$0xff]
        %v411 = vld [vmem:[%s358 + $0x10] sm:$0xff]
        %v412 = vld [vmem:[%s358 + $0x18] sm:$0xff]
        %v413 = vld [vmem:[%s358 + $0x20] sm:$0xff]
        %v414 = vld [vmem:[%s358 + $0x28] sm:$0xff]
        %v415 = vld [vmem:[%s358 + $0x30] sm:$0xff]
        %v416 = vld [vmem:[%s358 + $0x38] sm:$0xff]
        %v417 = vld [vmem:[%s358 + $0x40] sm:$0xff]
        %v418 = vld [vmem:[%s358 + $0x48] sm:$0xff]
        %v419 = vld [vmem:[%s358 + $0x50] sm:$0xff]
        %v420 = vld [vmem:[%s358 + $0x58] sm:$0xff]
        %v421 = vld [vmem:[%s358 + $0x60] sm:$0xff]
        %v422 = vld [vmem:[%s358 + $0x68] sm:$0xff]
        %v423 = vld [vmem:[%s358 + $0x70] sm:$0xff]
        %v424 = vld [vmem:[%s358 + $0x78] sm:$0xff]
        %v425 = vld [vmem:[%s358 + $0x80] sm:$0xff]
        %v426 = vld [vmem:[%s358 + $0x88] sm:$0xff]
        %v427 = vld [vmem:[%s358 + $0x90] sm:$0xff]
        %v428 = vld [vmem:[%s358 + $0x98] sm:$0xff]
        %v429 = vld [vmem:[%s358 + $0xa0] sm:$0xff]
        %v430 = vld [vmem:[%s358 + $0xa8] sm:$0xff]
        %v431 = vld [vmem:[%s358 + $0xb0] sm:$0xff]
        %v432 = vld [vmem:[%s358 + $0xb8] sm:$0xff]
        %v433 = vld [vmem:[%s358 + $0xc0] sm:$0xff]
        %v434 = vld [vmem:[%s358 + $0xc8] sm:$0xff]
        %v435 = vld [vmem:[%s358 + $0xd0] sm:$0xff]
        %v436 = vld [vmem:[%s358 + $0xd8] sm:$0xff]
        %v437 = vld [vmem:[%s358 + $0xe0] sm:$0xff]
        %v438 = vld [vmem:[%s358 + $0xe8] sm:$0xff]
        %v439 = vld [vmem:[%s358 + $0xf0] sm:$0xff]
        %v440 = vld [vmem:[%s358 + $0xf8] sm:$0xff]
        %v441 = vld [vmem:[#allocation8] sm:$0xff]
        %v442 = vld [vmem:[#allocation8 + $0x8] sm:$0xff]
        %v443 = vld [vmem:[#allocation8 + $0x10] sm:$0xff]
        %v444 = vld [vmem:[#allocation8 + $0x18] sm:$0xff]
        %v445 = vld [vmem:[#allocation8 + $0x20] sm:$0xff]
        %v446 = vld [vmem:[#allocation8 + $0x28] sm:$0xff]
        %v447 = vld [vmem:[#allocation8 + $0x30] sm:$0xff]
        %v448 = vld [vmem:[#allocation8 + $0x38] sm:$0xff]
        %v449 = vld [vmem:[#allocation8 + $0x40] sm:$0xff]
        %v450 = vld [vmem:[#allocation8 + $0x48] sm:$0xff]
        %v451 = vld [vmem:[#allocation8 + $0x50] sm:$0xff]
        %v452 = vld [vmem:[#allocation8 + $0x58] sm:$0xff]
        %v453 = vld [vmem:[#allocation8 + $0x60] sm:$0xff]
        %v454 = vld [vmem:[#allocation8 + $0x68] sm:$0xff]
        %v455 = vld [vmem:[#allocation8 + $0x70] sm:$0xff]
        %v456 = vld [vmem:[#allocation8 + $0x78] sm:$0xff]
        %v457 = vld [vmem:[%s4] sm:$0x1]
        %v459 = vlaneseq
        %v460 = vshrl.u32 %v459, 7
        %v461 = vsub.s32 0, %v460
        %v462 = vrot.slane %v457, %v461
        %464 = vmatprep.subr.mxu0 0.0
        %465 = vmatpush1.msra.mxu0 %v441
        %466 = vmatprep.subr.mxu0 0.0
        %467 = vmatpush1.msra.mxu0 %v442
        %468 = vmatprep.subr.mxu0 0.0
        %469 = vmatpush1.msra.mxu0 %v443
        %470 = vmatprep.subr.mxu0 0.0
        %471 = vmatpush1.msra.mxu0 %v444
        %472 = vmatprep.subr.mxu0 0.0
        %473 = vmatpush1.msra.mxu0 %v445
        %474 = vmatprep.subr.mxu0 0.0
        %475 = vmatpush1.msra.mxu0 %v446
        %476 = vmatprep.subr.mxu0 0.0
        %477 = vmatpush1.msra.mxu0 %v447
        %478 = vmatprep.subr.mxu0 0.0
        %479 = vmatpush1.msra.mxu0 %v448
        %480 = vmatprep.subr.mxu0 0.0
        %481 = vmatpush1.msra.mxu0 %v449
        %482 = vmatprep.subr.mxu0 0.0
        %483 = vmatpush1.msra.mxu0 %v450
        %484 = vmatprep.subr.mxu0 0.0
        %485 = vmatpush1.msra.mxu0 %v451
        %486 = vmatprep.subr.mxu0 0.0
        %487 = vmatpush1.msra.mxu0 %v452
        %488 = vmatprep.subr.mxu0 0.0
        %489 = vmatpush1.msra.mxu0 %v453
        %490 = vmatprep.subr.mxu0 0.0
        %491 = vmatpush1.msra.mxu0 %v454
        %492 = vmatprep.subr.mxu0 0.0
        %493 = vmatpush1.msra.mxu0 %v455
        %494 = vmatprep.subr.mxu0 0.0
        %495 = vmatpush1.msra.mxu0 %v456
        %496 = vmatprep.subr.mxu0 0.0
        %497 = vmatpush1.msra.mxu0 0.0
        %498 = vmatprep.subr.mxu0 0.0
        %499 = vmatpush1.msra.mxu0 0.0
        %500 = vmatprep.subr.mxu0 0.0
        %501 = vmatpush1.msra.mxu0 0.0
        %502 = vmatprep.subr.mxu0 0.0
        %503 = vmatpush1.msra.mxu0 0.0
        %504 = vmatprep.subr.mxu0 0.0
        %505 = vmatpush1.msra.mxu0 0.0
        %506 = vmatprep.subr.mxu0 0.0
        %507 = vmatpush1.msra.mxu0 0.0
        %508 = vmatprep.subr.mxu0 0.0
        %509 = vmatpush1.msra.mxu0 0.0
        %510 = vmatprep.subr.mxu0 0.0
        %511 = vmatpush1.msra.mxu0 0.0
        %512 = vmatprep.subr.mxu0 0.0
        %513 = vmatpush1.msra.mxu0 0.0
        %514 = vmatprep.subr.mxu0 0.0
        %515 = vmatpush1.msra.mxu0 0.0
        %516 = vmatprep.subr.mxu0 0.0
        %517 = vmatpush1.msra.mxu0 0.0
        %518 = vmatprep.subr.mxu0 0.0
        %519 = vmatpush1.msra.mxu0 0.0
        %520 = vmatprep.subr.mxu0 0.0
        %521 = vmatpush1.msra.mxu0 0.0
        %522 = vmatprep.subr.mxu0 0.0
        %523 = vmatpush1.msra.mxu0 0.0
        %524 = vmatprep.subr.mxu0 0.0
        %525 = vmatpush1.msra.mxu0 0.0
        %526 = vmatprep.subr.mxu0 0.0
        %527 = vmatpush1.msra.mxu0 0.0
        %528 = vmatprep.mubr.f32.mxu0 0.0
        %529 = vmatmul.mubr.f32.gmra.mrb[0].mxu0 %v409
        %v530 = vpop.f32.mrb[0].mxu0
        %v531 = vadd.f32 %v462, %v530
        %v532 = vpop.f32.mrb[0].mxu0
        %533 = vmatprep.mubr.f32.mxu0 0.0
        %534 = vmatmul.mubr.f32.gmra.mrb[0].mxu0 %v410
        %v535 = vpop.f32.mrb[0].mxu0
        %v536 = vadd.f32 %v462, %v535
        %v537 = vpop.f32.mrb[0].mxu0
        %538 = vmatprep.mubr.f32.mxu0 0.0
        %539 = vmatmul.mubr.f32.gmra.mrb[0].mxu0 %v411
        %v540 = vpop.f32.mrb[0].mxu0
        %v541 = vadd.f32 %v462, %v540
        %v542 = vpop.f32.mrb[0].mxu0
        %543 = vmatprep.mubr.f32.mxu0 0.0
        %544 = vmatmul.mubr.f32.gmra.mrb[0].mxu0 %v412
        %v545 = vpop.f32.mrb[0].mxu0
        %v546 = vadd.f32 %v462, %v545
        %v547 = vpop.f32.mrb[0].mxu0
        %548 = vmatprep.mubr.f32.mxu0 0.0
        %549 = vmatmul.mubr.f32.gmra.mrb[0].mxu0 %v413
        %v550 = vpop.f32.mrb[0].mxu0
        %v551 = vadd.f32 %v462, %v550
        %v552 = vpop.f32.mrb[0].mxu0
        %553 = vmatprep.mubr.f32.mxu0 0.0
        %554 = vmatmul.mubr.f32.gmra.mrb[0].mxu0 %v414
        %v555 = vpop.f32.mrb[0].mxu0
        %v556 = vadd.f32 %v462, %v555
        %v557 = vpop.f32.mrb[0].mxu0
        %558 = vmatprep.mubr.f32.mxu0 0.0
        %559 = vmatmul.mubr.f32.gmra.mrb[0].mxu0 %v415
        %v560 = vpop.f32.mrb[0].mxu0
        %v561 = vadd.f32 %v462, %v560
        %v562 = vpop.f32.mrb[0].mxu0
        %563 = vmatprep.mubr.f32.mxu0 0.0
        %564 = vmatmul.mubr.f32.gmra.mrb[0].mxu0 %v416
        %v565 = vpop.f32.mrb[0].mxu0
        %v566 = vadd.f32 %v462, %v565
        %v567 = vpop.f32.mrb[0].mxu0
        %568 = vmatprep.mubr.f32.mxu0 0.0
        %569 = vmatmul.mubr.f32.gmra.mrb[0].mxu0 %v417
        %v570 = vpop.f32.mrb[0].mxu0
        %v571 = vadd.f32 %v462, %v570
        %v572 = vpop.f32.mrb[0].mxu0
        %573 = vmatprep.mubr.f32.mxu0 0.0
        %574 = vmatmul.mubr.f32.gmra.mrb[0].mxu0 %v418
        %v575 = vpop.f32.mrb[0].mxu0
        %v576 = vadd.f32 %v462, %v575
        %v577 = vpop.f32.mrb[0].mxu0
        %578 = vmatprep.mubr.f32.mxu0 0.0
        %579 = vmatmul.mubr.f32.gmra.mrb[0].mxu0 %v419
        %v580 = vpop.f32.mrb[0].mxu0
        %v581 = vadd.f32 %v462, %v580
        %v582 = vpop.f32.mrb[0].mxu0
        %583 = vmatprep.mubr.f32.mxu0 0.0
        %584 = vmatmul.mubr.f32.gmra.mrb[0].mxu0 %v420
        %v585 = vpop.f32.mrb[0].mxu0
        %v586 = vadd.f32 %v462, %v585
        %v587 = vpop.f32.mrb[0].mxu0
        %588 = vmatprep.mubr.f32.mxu0 0.0
        %589 = vmatmul.mubr.f32.gmra.mrb[0].mxu0 %v421
        %v590 = vpop.f32.mrb[0].mxu0
        %v591 = vadd.f32 %v462, %v590
        %v592 = vpop.f32.mrb[0].mxu0
        %593 = vmatprep.mubr.f32.mxu0 0.0
        %594 = vmatmul.mubr.f32.gmra.mrb[0].mxu0 %v422
        %v595 = vpop.f32.mrb[0].mxu0
        %v596 = vadd.f32 %v462, %v595
        %v597 = vpop.f32.mrb[0].mxu0
        %598 = vmatprep.mubr.f32.mxu0 0.0
        %599 = vmatmul.mubr.f32.gmra.mrb[0].mxu0 %v423
        %v600 = vpop.f32.mrb[0].mxu0
        %v601 = vadd.f32 %v462, %v600
        %v602 = vpop.f32.mrb[0].mxu0
        %603 = vmatprep.mubr.f32.mxu0 0.0
        %604 = vmatmul.mubr.f32.gmra.mrb[0].mxu0 %v424
        %v605 = vpop.f32.mrb[0].mxu0
        %v606 = vadd.f32 %v462, %v605
        %v607 = vpop.f32.mrb[0].mxu0
        %608 = vmatprep.mubr.f32.mxu0 0.0
        %609 = vmatmul.mubr.f32.gmra.mrb[0].mxu0 %v425
        %v610 = vpop.f32.mrb[0].mxu0
        %v611 = vadd.f32 %v462, %v610
        %v612 = vpop.f32.mrb[0].mxu0
        %613 = vmatprep.mubr.f32.mxu0 0.0
        %614 = vmatmul.mubr.f32.gmra.mrb[0].mxu0 %v426
        %v615 = vpop.f32.mrb[0].mxu0
        %v616 = vadd.f32 %v462, %v615
        %v617 = vpop.f32.mrb[0].mxu0
        %618 = vmatprep.mubr.f32.mxu0 0.0
        %619 = vmatmul.mubr.f32.gmra.mrb[0].mxu0 %v427
        %v620 = vpop.f32.mrb[0].mxu0
        %v621 = vadd.f32 %v462, %v620
        %v622 = vpop.f32.mrb[0].mxu0
        %623 = vmatprep.mubr.f32.mxu0 0.0
        %624 = vmatmul.mubr.f32.gmra.mrb[0].mxu0 %v428
        %v625 = vpop.f32.mrb[0].mxu0
        %v626 = vadd.f32 %v462, %v625
        %v627 = vpop.f32.mrb[0].mxu0
        %628 = vmatprep.mubr.f32.mxu0 0.0
        %629 = vmatmul.mubr.f32.gmra.mrb[0].mxu0 %v429
        %v630 = vpop.f32.mrb[0].mxu0
        %v631 = vadd.f32 %v462, %v630
        %v632 = vpop.f32.mrb[0].mxu0
        %633 = vmatprep.mubr.f32.mxu0 0.0
        %634 = vmatmul.mubr.f32.gmra.mrb[0].mxu0 %v430
        %v635 = vpop.f32.mrb[0].mxu0
        %v636 = vadd.f32 %v462, %v635
        %v637 = vpop.f32.mrb[0].mxu0
        %638 = vmatprep.mubr.f32.mxu0 0.0
        %639 = vmatmul.mubr.f32.gmra.mrb[0].mxu0 %v431
        %v640 = vpop.f32.mrb[0].mxu0
        %v641 = vadd.f32 %v462, %v640
        %v642 = vpop.f32.mrb[0].mxu0
        %643 = vmatprep.mubr.f32.mxu0 0.0
        %644 = vmatmul.mubr.f32.gmra.mrb[0].mxu0 %v432
        %v645 = vpop.f32.mrb[0].mxu0
        %v646 = vadd.f32 %v462, %v645
        %v647 = vpop.f32.mrb[0].mxu0
        %648 = vmatprep.mubr.f32.mxu0 0.0
        %649 = vmatmul.mubr.f32.gmra.mrb[0].mxu0 %v433
        %v650 = vpop.f32.mrb[0].mxu0
        %v651 = vadd.f32 %v462, %v650
        %v652 = vpop.f32.mrb[0].mxu0
        %653 = vmatprep.mubr.f32.mxu0 0.0
        %654 = vmatmul.mubr.f32.gmra.mrb[0].mxu0 %v434
        %v655 = vpop.f32.mrb[0].mxu0
        %v656 = vadd.f32 %v462, %v655
        %v657 = vpop.f32.mrb[0].mxu0
        %658 = vmatprep.mubr.f32.mxu0 0.0
        %659 = vmatmul.mubr.f32.gmra.mrb[0].mxu0 %v435
        %v660 = vpop.f32.mrb[0].mxu0
        %v661 = vadd.f32 %v462, %v660
        %v662 = vpop.f32.mrb[0].mxu0
        %663 = vmatprep.mubr.f32.mxu0 0.0
        %664 = vmatmul.mubr.f32.gmra.mrb[0].mxu0 %v436
        %v665 = vpop.f32.mrb[0].mxu0
        %v666 = vadd.f32 %v462, %v665
        %v667 = vpop.f32.mrb[0].mxu0
        %668 = vmatprep.mubr.f32.mxu0 0.0
        %669 = vmatmul.mubr.f32.gmra.mrb[0].mxu0 %v437
        %v670 = vpop.f32.mrb[0].mxu0
        %v671 = vadd.f32 %v462, %v670
        %v672 = vpop.f32.mrb[0].mxu0
        %673 = vmatprep.mubr.f32.mxu0 0.0
        %674 = vmatmul.mubr.f32.gmra.mrb[0].mxu0 %v438
        %v675 = vpop.f32.mrb[0].mxu0
        %v676 = vadd.f32 %v462, %v675
        %v677 = vpop.f32.mrb[0].mxu0
        %678 = vmatprep.mubr.f32.mxu0 0.0
        %679 = vmatmul.mubr.f32.gmra.mrb[0].mxu0 %v439
        %v680 = vpop.f32.mrb[0].mxu0
        %v681 = vadd.f32 %v462, %v680
        %v682 = vpop.f32.mrb[0].mxu0
        %683 = vmatprep.mubr.f32.mxu0 0.0
        %684 = vmatmul.mubr.f32.gmra.mrb[0].mxu0 %v440
        %v685 = vpop.f32.mrb[0].mxu0
        %v686 = vadd.f32 %v462, %v685
        %v687 = vpop.f32.mrb[0].mxu0
        %688 = vdwg.mxu0
        %v689 = vmax.f32 %v531, 0.0
        %v690 = vmax.f32 %v536, 0.0
        %v691 = vmax.f32 %v541, 0.0
        %v692 = vmax.f32 %v546, 0.0
        %v693 = vmax.f32 %v551, 0.0
        %v694 = vmax.f32 %v556, 0.0
        %v695 = vmax.f32 %v561, 0.0
        %v696 = vmax.f32 %v566, 0.0
        %v697 = vmax.f32 %v571, 0.0
        %v698 = vmax.f32 %v576, 0.0
        %v699 = vmax.f32 %v581, 0.0
        %v700 = vmax.f32 %v586, 0.0
        %v701 = vmax.f32 %v591, 0.0
        %v702 = vmax.f32 %v596, 0.0
        %v703 = vmax.f32 %v601, 0.0
        %v704 = vmax.f32 %v606, 0.0
        %v705 = vmax.f32 %v611, 0.0
        %v706 = vmax.f32 %v616, 0.0
        %v707 = vmax.f32 %v621, 0.0
        %v708 = vmax.f32 %v626, 0.0
        %v709 = vmax.f32 %v631, 0.0
        %v710 = vmax.f32 %v636, 0.0
        %v711 = vmax.f32 %v641, 0.0
        %v712 = vmax.f32 %v646, 0.0
        %v713 = vmax.f32 %v651, 0.0
        %v714 = vmax.f32 %v656, 0.0
        %v715 = vmax.f32 %v661, 0.0
        %v716 = vmax.f32 %v666, 0.0
        %v717 = vmax.f32 %v671, 0.0
        %v718 = vmax.f32 %v676, 0.0
        %v719 = vmax.f32 %v681, 0.0
        %v720 = vmax.f32 %v686, 0.0
        %721 = vst [vmem:[#allocation2] sm:$0xff] 0.0
        %722 = vst [vmem:[#allocation2 + $0x8] sm:$0xff] 0.0
        %723 = vst [vmem:[#allocation2 + $0x10] sm:$0xff] 0.0
        %724 = vst [vmem:[#allocation2 + $0x18] sm:$0xff] 0.0
        %725 = vst [vmem:[#allocation2 + $0x20] sm:$0x3] 0.0
        %726 = vst [vmem:[#allocation2 + $0x28] sm:$0xff] 0.0
        %727 = vst [vmem:[#allocation2 + $0x30] sm:$0xff] 0.0
        %728 = vst [vmem:[#allocation2 + $0x38] sm:$0xff] 0.0
        %729 = vst [vmem:[#allocation2 + $0x40] sm:$0xff] 0.0
        %730 = vst [vmem:[#allocation2 + $0x48] sm:$0x3] 0.0
        %731 = vst [vmem:[#allocation2 + $0x50] sm:$0xff] 0.0
        %732 = vst [vmem:[#allocation2 + $0x58] sm:$0xff] 0.0
        %733 = vst [vmem:[#allocation2 + $0x60] sm:$0xff] 0.0
        %734 = vst [vmem:[#allocation2 + $0x68] sm:$0xff] 0.0
        %735 = vst [vmem:[#allocation2 + $0x70] sm:$0x3] 0.0
        %736 = vst [vmem:[#allocation2 + $0x78] sm:$0xff] 0.0
        %737 = vst [vmem:[#allocation2 + $0x80] sm:$0xff] 0.0
        %738 = vst [vmem:[#allocation2 + $0x88] sm:$0xff] 0.0
        %739 = vst [vmem:[#allocation2 + $0x90] sm:$0xff] 0.0
        %740 = vst [vmem:[#allocation2 + $0x98] sm:$0x3] 0.0
        %741 = vst [vmem:[#allocation2 + $0xa0] sm:$0xff] 0.0
        %742 = vst [vmem:[#allocation2 + $0xa8] sm:$0xff] 0.0
        %743 = vst [vmem:[#allocation2 + $0xb0] sm:$0xff] 0.0
        %744 = vst [vmem:[#allocation2 + $0xb8] sm:$0xff] 0.0
        %745 = vst [vmem:[#allocation2 + $0xc0] sm:$0x3] 0.0
        %746 = vst [vmem:[#allocation2 + $0xc8] sm:$0xff] 0.0
        %747 = vst [vmem:[#allocation2 + $0xd0] sm:$0xff] 0.0
        %748 = vst [vmem:[#allocation2 + $0xd8] sm:$0xff] 0.0
        %749 = vst [vmem:[#allocation2 + $0xe0] sm:$0xff] 0.0
        %750 = vst [vmem:[#allocation2 + $0xe8] sm:$0x3] 0.0
        %751 = vst [vmem:[#allocation2 + $0xf0] sm:$0xff] 0.0
        %752 = vst [vmem:[#allocation2 + $0xf8] sm:$0xff] 0.0
        %753 = vst [vmem:[#allocation2 + $0x100] sm:$0xff] 0.0
        %754 = vst [vmem:[#allocation2 + $0x108] sm:$0xff] 0.0
        %755 = vst [vmem:[#allocation2 + $0x110] sm:$0x3] 0.0
        %756 = vst [vmem:[#allocation2 + $0x118] sm:$0xff] 0.0
        %757 = vst [vmem:[#allocation2 + $0x120] sm:$0xff] 0.0
        %758 = vst [vmem:[#allocation2 + $0x128] sm:$0xff] 0.0
        %759 = vst [vmem:[#allocation2 + $0x130] sm:$0xff] 0.0
        %760 = vst [vmem:[#allocation2 + $0x138] sm:$0x3] 0.0
        %761 = vst [vmem:[#allocation2 + $0x140] sm:$0xff] 0.0
        %762 = vst [vmem:[#allocation2 + $0x148] sm:$0xff] 0.0
        %763 = vst [vmem:[#allocation2 + $0x150] sm:$0xff] 0.0
        %764 = vst [vmem:[#allocation2 + $0x158] sm:$0xff] 0.0
        %765 = vst [vmem:[#allocation2 + $0x160] sm:$0x3] 0.0
        %766 = vst [vmem:[#allocation2 + $0x168] sm:$0xff] 0.0
        %767 = vst [vmem:[#allocation2 + $0x170] sm:$0xff] 0.0
        %768 = vst [vmem:[#allocation2 + $0x178] sm:$0xff] 0.0
        %769 = vst [vmem:[#allocation2 + $0x180] sm:$0xff] 0.0
        %770 = vst [vmem:[#allocation2 + $0x188] sm:$0x3] 0.0
        %771 = vst [vmem:[#allocation2 + $0x190] sm:$0xff] 0.0
        %772 = vst [vmem:[#allocation2 + $0x198] sm:$0xff] 0.0
        %773 = vst [vmem:[#allocation2 + $0x1a0] sm:$0xff] 0.0
        %774 = vst [vmem:[#allocation2 + $0x1a8] sm:$0xff] 0.0
        %775 = vst [vmem:[#allocation2 + $0x1b0] sm:$0x3] 0.0
        %776 = vst [vmem:[#allocation2 + $0x1b8] sm:$0xff] 0.0
        %777 = vst [vmem:[#allocation2 + $0x1c0] sm:$0xff] 0.0
        %778 = vst [vmem:[#allocation2 + $0x1c8] sm:$0xff] 0.0
        %779 = vst [vmem:[#allocation2 + $0x1d0] sm:$0xff] 0.0
        %780 = vst [vmem:[#allocation2 + $0x1d8] sm:$0x3] 0.0
        %781 = vst [vmem:[#allocation2 + $0x1e0] sm:$0xff] 0.0
        %782 = vst [vmem:[#allocation2 + $0x1e8] sm:$0xff] 0.0
        %783 = vst [vmem:[#allocation2 + $0x1f0] sm:$0xff] 0.0
        %784 = vst [vmem:[#allocation2 + $0x1f8] sm:$0xff] 0.0
        %785 = vst [vmem:[#allocation2 + $0x200] sm:$0x3] 0.0
        %786 = vst [vmem:[#allocation2 + $0x208] sm:$0xff] 0.0
        %787 = vst [vmem:[#allocation2 + $0x210] sm:$0xff] 0.0
        %788 = vst [vmem:[#allocation2 + $0x218] sm:$0xff] 0.0
        %789 = vst [vmem:[#allocation2 + $0x220] sm:$0xff] 0.0
        %790 = vst [vmem:[#allocation2 + $0x228] sm:$0x3] 0.0
        %791 = vst [vmem:[#allocation2 + $0x230] sm:$0xff] 0.0
        %792 = vst [vmem:[#allocation2 + $0x238] sm:$0xff] 0.0
        %793 = vst [vmem:[#allocation2 + $0x240] sm:$0xff] 0.0
        %794 = vst [vmem:[#allocation2 + $0x248] sm:$0xff] 0.0
        %795 = vst [vmem:[#allocation2 + $0x250] sm:$0x3] 0.0
        %796 = vst [vmem:[#allocation2 + $0x258] sm:$0xff] 0.0
        %797 = vst [vmem:[#allocation2 + $0x260] sm:$0xff] 0.0
        %798 = vst [vmem:[#allocation2 + $0x268] sm:$0xff] 0.0
        %799 = vst [vmem:[#allocation2 + $0x270] sm:$0xff] 0.0
        %800 = vst [vmem:[#allocation2 + $0x278] sm:$0x3] 0.0
        %801 = vst [vmem:[#allocation2 + $0x280] sm:$0xff] 0.0
        %802 = vst [vmem:[#allocation2 + $0x288] sm:$0xff] 0.0
        %803 = vst [vmem:[#allocation2 + $0x290] sm:$0xff] 0.0
        %804 = vst [vmem:[#allocation2 + $0x298] sm:$0xff] 0.0
        %805 = vst [vmem:[#allocation2 + $0x2a0] sm:$0x3] 0.0
        %806 = vst [vmem:[#allocation2 + $0x2a8] sm:$0xff] 0.0
        %807 = vst [vmem:[#allocation2 + $0x2b0] sm:$0xff] 0.0
        %808 = vst [vmem:[#allocation2 + $0x2b8] sm:$0xff] 0.0
        %809 = vst [vmem:[#allocation2 + $0x2c0] sm:$0xff] 0.0
        %810 = vst [vmem:[#allocation2 + $0x2c8] sm:$0x3] 0.0
        %811 = vst [vmem:[#allocation2 + $0x2d0] sm:$0xff] 0.0
        %812 = vst [vmem:[#allocation2 + $0x2d8] sm:$0xff] 0.0
        %813 = vst [vmem:[#allocation2 + $0x2e0] sm:$0xff] 0.0
        %814 = vst [vmem:[#allocation2 + $0x2e8] sm:$0xff] 0.0
        %815 = vst [vmem:[#allocation2 + $0x2f0] sm:$0x3] 0.0
        %816 = vst [vmem:[#allocation2 + $0x2f8] sm:$0xff] 0.0
        %817 = vst [vmem:[#allocation2 + $0x300] sm:$0xff] 0.0
        %818 = vst [vmem:[#allocation2 + $0x308] sm:$0xff] 0.0
        %819 = vst [vmem:[#allocation2 + $0x310] sm:$0xff] 0.0
        %820 = vst [vmem:[#allocation2 + $0x318] sm:$0x3] 0.0
        %s821 = scalar_lea.vmem [#allocation2], 80
        %822 = vst [vmem:[%s821 + $0x10] sm:$0xff] %v689
        %823 = vst [vmem:[%s821 + $0x18] sm:$0xff] %v690
        %824 = vst [vmem:[%s821 + $0x38] sm:$0xff] %v691
        %825 = vst [vmem:[%s821 + $0x40] sm:$0xff] %v692
        %826 = vst [vmem:[%s821 + $0x60] sm:$0xff] %v693
        %827 = vst [vmem:[%s821 + $0x68] sm:$0xff] %v694
        %828 = vst [vmem:[%s821 + $0x88] sm:$0xff] %v695
        %829 = vst [vmem:[%s821 + $0x90] sm:$0xff] %v696
        %830 = vst [vmem:[%s821 + $0xb0] sm:$0xff] %v697
        %831 = vst [vmem:[%s821 + $0xb8] sm:$0xff] %v698
        %832 = vst [vmem:[%s821 + $0xd8] sm:$0xff] %v699
        %833 = vst [vmem:[%s821 + $0xe0] sm:$0xff] %v700
        %834 = vst [vmem:[%s821 + $0x100] sm:$0xff] %v701
        %835 = vst [vmem:[%s821 + $0x108] sm:$0xff] %v702
        %836 = vst [vmem:[%s821 + $0x128] sm:$0xff] %v703
        %837 = vst [vmem:[%s821 + $0x130] sm:$0xff] %v704
        %838 = vst [vmem:[%s821 + $0x150] sm:$0xff] %v705
        %839 = vst [vmem:[%s821 + $0x158] sm:$0xff] %v706
        %840 = vst [vmem:[%s821 + $0x178] sm:$0xff] %v707
        %841 = vst [vmem:[%s821 + $0x180] sm:$0xff] %v708
        %842 = vst [vmem:[%s821 + $0x1a0] sm:$0xff] %v709
        %843 = vst [vmem:[%s821 + $0x1a8] sm:$0xff] %v710
        %844 = vst [vmem:[%s821 + $0x1c8] sm:$0xff] %v711
        %845 = vst [vmem:[%s821 + $0x1d0] sm:$0xff] %v712
        %846 = vst [vmem:[%s821 + $0x1f0] sm:$0xff] %v713
        %847 = vst [vmem:[%s821 + $0x1f8] sm:$0xff] %v714
        %848 = vst [vmem:[%s821 + $0x218] sm:$0xff] %v715
        %849 = vst [vmem:[%s821 + $0x220] sm:$0xff] %v716
        %850 = vst [vmem:[%s821 + $0x240] sm:$0xff] %v717
        %851 = vst [vmem:[%s821 + $0x248] sm:$0xff] %v718
        %852 = vst [vmem:[%s821 + $0x268] sm:$0xff] %v719
        %853 = vst [vmem:[%s821 + $0x270] sm:$0xff] %v720
        %v854 = vld [vmem:[#allocation2 + $0x8] sm:$0xff]
        %v855 = vld [vmem:[#allocation2 + $0x10] sm:$0xff]
        %v856 = vld [vmem:[#allocation2 + $0x18] sm:$0xff]
        %v857 = vld [vmem:[#allocation2 + $0x20] sm:$0x3]
        %v858 = vld [vmem:[#allocation2 + $0x30] sm:$0xff]
        %v859 = vld [vmem:[#allocation2 + $0x38] sm:$0xff]
        %v860 = vld [vmem:[#allocation2 + $0x40] sm:$0xff]
        %v861 = vld [vmem:[#allocation2 + $0x48] sm:$0x3]
        %v862 = vld [vmem:[#allocation2 + $0x58] sm:$0xff]
        %v863 = vld [vmem:[#allocation2 + $0x60] sm:$0xff]
        %v864 = vld [vmem:[#allocation2 + $0x68] sm:$0xff]
        %v865 = vld [vmem:[#allocation2 + $0x70] sm:$0x3]
        %v866 = vld [vmem:[#allocation2 + $0x80] sm:$0xff]
        %v867 = vld [vmem:[#allocation2 + $0x88] sm:$0xff]
        %v868 = vld [vmem:[#allocation2 + $0x90] sm:$0xff]
        %v869 = vld [vmem:[#allocation2 + $0x98] sm:$0x3]
        %v870 = vld [vmem:[#allocation2 + $0xa8] sm:$0xff]
        %v871 = vld [vmem:[#allocation2 + $0xb0] sm:$0xff]
        %v872 = vld [vmem:[#allocation2 + $0xb8] sm:$0xff]
        %v873 = vld [vmem:[#allocation2 + $0xc0] sm:$0x3]
        %v874 = vld [vmem:[#allocation2 + $0xd0] sm:$0xff]
        %v875 = vld [vmem:[#allocation2 + $0xd8] sm:$0xff]
        %v876 = vld [vmem:[#allocation2 + $0xe0] sm:$0xff]
        %v877 = vld [vmem:[#allocation2 + $0xe8] sm:$0x3]
        %v878 = vld [vmem:[#allocation2 + $0xf8] sm:$0xff]
        %v879 = vld [vmem:[#allocation2 + $0x100] sm:$0xff]
        %v880 = vld [vmem:[#allocation2 + $0x108] sm:$0xff]
        %v881 = vld [vmem:[#allocation2 + $0x110] sm:$0x3]
        %v882 = vld [vmem:[#allocation2 + $0x120] sm:$0xff]
        %v883 = vld [vmem:[#allocation2 + $0x128] sm:$0xff]
        %v884 = vld [vmem:[#allocation2 + $0x130] sm:$0xff]
        %v885 = vld [vmem:[#allocation2 + $0x138] sm:$0x3]
        %v886 = vld [vmem:[#allocation2 + $0x148] sm:$0xff]
        %v887 = vld [vmem:[#allocation2 + $0x150] sm:$0xff]
        %v888 = vld [vmem:[#allocation2 + $0x158] sm:$0xff]
        %v889 = vld [vmem:[#allocation2 + $0x160] sm:$0x3]
        %v890 = vld [vmem:[#allocation2 + $0x170] sm:$0xff]
        %v891 = vld [vmem:[#allocation2 + $0x178] sm:$0xff]
        %v892 = vld [vmem:[#allocation2 + $0x180] sm:$0xff]
        %v893 = vld [vmem:[#allocation2 + $0x188] sm:$0x3]
        %v894 = vld [vmem:[#allocation2 + $0x198] sm:$0xff]
        %v895 = vld [vmem:[#allocation2 + $0x1a0] sm:$0xff]
        %v896 = vld [vmem:[#allocation2 + $0x1a8] sm:$0xff]
        %v897 = vld [vmem:[#allocation2 + $0x1b0] sm:$0x3]
        %v898 = vld [vmem:[#allocation2 + $0x1c0] sm:$0xff]
        %v899 = vld [vmem:[#allocation2 + $0x1c8] sm:$0xff]
        %v900 = vld [vmem:[#allocation2 + $0x1d0] sm:$0xff]
        %v901 = vld [vmem:[#allocation2 + $0x1d8] sm:$0x3]
        %v902 = vld [vmem:[#allocation2 + $0x1e8] sm:$0xff]
        %v903 = vld [vmem:[#allocation2 + $0x1f0] sm:$0xff]
        %v904 = vld [vmem:[#allocation2 + $0x1f8] sm:$0xff]
        %v905 = vld [vmem:[#allocation2 + $0x200] sm:$0x3]
        %v906 = vld [vmem:[#allocation2 + $0x210] sm:$0xff]
        %v907 = vld [vmem:[#allocation2 + $0x218] sm:$0xff]
        %v908 = vld [vmem:[#allocation2 + $0x220] sm:$0xff]
        %v909 = vld [vmem:[#allocation2 + $0x228] sm:$0x3]
        %v910 = vld [vmem:[#allocation2 + $0x238] sm:$0xff]
        %v911 = vld [vmem:[#allocation2 + $0x240] sm:$0xff]
        %v912 = vld [vmem:[#allocation2 + $0x248] sm:$0xff]
        %v913 = vld [vmem:[#allocation2 + $0x250] sm:$0x3]
        %v914 = vld [vmem:[#allocation2 + $0x260] sm:$0xff]
        %v915 = vld [vmem:[#allocation2 + $0x268] sm:$0xff]
        %v916 = vld [vmem:[#allocation2 + $0x270] sm:$0xff]
        %v917 = vld [vmem:[#allocation2 + $0x278] sm:$0x3]
        %v918 = vld [vmem:[#allocation2 + $0x288] sm:$0xff]
        %v919 = vld [vmem:[#allocation2 + $0x290] sm:$0xff]
        %v920 = vld [vmem:[#allocation2 + $0x298] sm:$0xff]
        %v921 = vld [vmem:[#allocation2 + $0x2a0] sm:$0x3]
        %v922 = vld [vmem:[#allocation2 + $0x2b0] sm:$0xff]
        %v923 = vld [vmem:[#allocation2 + $0x2b8] sm:$0xff]
        %v924 = vld [vmem:[#allocation2 + $0x2c0] sm:$0xff]
        %v925 = vld [vmem:[#allocation2 + $0x2c8] sm:$0x3]
        %v926 = vld [vmem:[#allocation2 + $0x2d8] sm:$0xff]
        %v927 = vld [vmem:[#allocation2 + $0x2e0] sm:$0xff]
        %v928 = vld [vmem:[#allocation2 + $0x2e8] sm:$0xff]
        %v929 = vld [vmem:[#allocation2 + $0x2f0] sm:$0x3]
        %v930 = vld [vmem:[#allocation2 + $0x300] sm:$0xff]
        %v931 = vld [vmem:[#allocation2 + $0x308] sm:$0xff]
        %v932 = vld [vmem:[#allocation2 + $0x310] sm:$0xff]
        %v933 = vld [vmem:[#allocation2 + $0x318] sm:$0x3]
        %vm982 = vcmask 1041408
        %v983 = vrot.slane %v854, 6
        %v984 = vrot.slane %v855, 6
        %v985 = vsel %vm982, %v983, %v984
        %v986 = vrot.slane %v856, 6
        %v987 = vsel %vm982, %v984, %v986
        %v988 = vrot.slane %v858, 6
        %v989 = vrot.slane %v859, 6
        %v990 = vsel %vm982, %v988, %v989
        %v991 = vrot.slane %v860, 6
        %v992 = vsel %vm982, %v989, %v991
        %v993 = vrot.slane %v862, 6
        %v994 = vrot.slane %v863, 6
        %v995 = vsel %vm982, %v993, %v994
        %v996 = vrot.slane %v864, 6
        %v997 = vsel %vm982, %v994, %v996
        %v998 = vrot.slane %v866, 6
        %v999 = vrot.slane %v867, 6
        %v1000 = vsel %vm982, %v998, %v999
        %v1001 = vrot.slane %v868, 6
        %v1002 = vsel %vm982, %v999, %v1001
        %v1003 = vrot.slane %v870, 6
        %v1004 = vrot.slane %v871, 6
        %v1005 = vsel %vm982, %v1003, %v1004
        %v1006 = vrot.slane %v872, 6
        %v1007 = vsel %vm982, %v1004, %v1006
        %v1008 = vrot.slane %v874, 6
        %v1009 = vrot.slane %v875, 6
        %v1010 = vsel %vm982, %v1008, %v1009
        %v1011 = vrot.slane %v876, 6
        %v1012 = vsel %vm982, %v1009, %v1011
        %v1013 = vrot.slane %v878, 6
        %v1014 = vrot.slane %v879, 6
        %v1015 = vsel %vm982, %v1013, %v1014
        %v1016 = vrot.slane %v880, 6
        %v1017 = vsel %vm982, %v1014, %v1016
        %v1018 = vrot.slane %v882, 6
        %v1019 = vrot.slane %v883, 6
        %v1020 = vsel %vm982, %v1018, %v1019
        %v1021 = vrot.slane %v884, 6
        %v1022 = vsel %vm982, %v1019, %v1021
        %v1023 = vrot.slane %v886, 6
        %v1024 = vrot.slane %v887, 6
        %v1025 = vsel %vm982, %v1023, %v1024
        %v1026 = vrot.slane %v888, 6
        %v1027 = vsel %vm982, %v1024, %v1026
        %v1028 = vrot.slane %v890, 6
        %v1029 = vrot.slane %v891, 6
        %v1030 = vsel %vm982, %v1028, %v1029
        %v1031 = vrot.slane %v892, 6
        %v1032 = vsel %vm982, %v1029, %v1031
        %v1033 = vrot.slane %v894, 6
        %v1034 = vrot.slane %v895, 6
        %v1035 = vsel %vm982, %v1033, %v1034
        %v1036 = vrot.slane %v896, 6
        %v1037 = vsel %vm982, %v1034, %v1036
        %v1038 = vrot.slane %v898, 6
        %v1039 = vrot.slane %v899, 6
        %v1040 = vsel %vm982, %v1038, %v1039
        %v1041 = vrot.slane %v900, 6
        %v1042 = vsel %vm982, %v1039, %v1041
        %v1043 = vrot.slane %v902, 6
        %v1044 = vrot.slane %v903, 6
        %v1045 = vsel %vm982, %v1043, %v1044
        %v1046 = vrot.slane %v904, 6
        %v1047 = vsel %vm982, %v1044, %v1046
        %v1048 = vrot.slane %v906, 6
        %v1049 = vrot.slane %v907, 6
        %v1050 = vsel %vm982, %v1048, %v1049
        %v1051 = vrot.slane %v908, 6
        %v1052 = vsel %vm982, %v1049, %v1051
        %v1053 = vrot.slane %v910, 6
        %v1054 = vrot.slane %v911, 6
        %v1055 = vsel %vm982, %v1053, %v1054
        %v1056 = vrot.slane %v912, 6
        %v1057 = vsel %vm982, %v1054, %v1056
        %v1058 = vrot.slane %v914, 6
        %v1059 = vrot.slane %v915, 6
        %v1060 = vsel %vm982, %v1058, %v1059
        %v1061 = vrot.slane %v916, 6
        %v1062 = vsel %vm982, %v1059, %v1061
        %vm1111 = vcmask 1045504
        %v1112 = vrot.slane %v855, 2
        %v1113 = vrot.slane %v856, 2
        %v1114 = vsel %vm1111, %v1112, %v1113
        %v1115 = vrot.slane %v857, 2
        %v1116 = vsel %vm1111, %v1113, %v1115
        %v1117 = vrot.slane %v859, 2
        %v1118 = vrot.slane %v860, 2
        %v1119 = vsel %vm1111, %v1117, %v1118
        %v1120 = vrot.slane %v861, 2
        %v1121 = vsel %vm1111, %v1118, %v1120
        %v1122 = vrot.slane %v863, 2
        %v1123 = vrot.slane %v864, 2
        %v1124 = vsel %vm1111, %v1122, %v1123
        %v1125 = vrot.slane %v865, 2
        %v1126 = vsel %vm1111, %v1123, %v1125
        %v1127 = vrot.slane %v867, 2
        %v1128 = vrot.slane %v868, 2
        %v1129 = vsel %vm1111, %v1127, %v1128
        %v1130 = vrot.slane %v869, 2
        %v1131 = vsel %vm1111, %v1128, %v1130
        %v1132 = vrot.slane %v871, 2
        %v1133 = vrot.slane %v872, 2
        %v1134 = vsel %vm1111, %v1132, %v1133
        %v1135 = vrot.slane %v873, 2
        %v1136 = vsel %vm1111, %v1133, %v1135
        %v1137 = vrot.slane %v875, 2
        %v1138 = vrot.slane %v876, 2
        %v1139 = vsel %vm1111, %v1137, %v1138
        %v1140 = vrot.slane %v877, 2
        %v1141 = vsel %vm1111, %v1138, %v1140
        %v1142 = vrot.slane %v879, 2
        %v1143 = vrot.slane %v880, 2
        %v1144 = vsel %vm1111, %v1142, %v1143
        %v1145 = vrot.slane %v881, 2
        %v1146 = vsel %vm1111, %v1143, %v1145
        %v1147 = vrot.slane %v883, 2
        %v1148 = vrot.slane %v884, 2
        %v1149 = vsel %vm1111, %v1147, %v1148
        %v1150 = vrot.slane %v885, 2
        %v1151 = vsel %vm1111, %v1148, %v1150
        %v1152 = vrot.slane %v887, 2
        %v1153 = vrot.slane %v888, 2
        %v1154 = vsel %vm1111, %v1152, %v1153
        %v1155 = vrot.slane %v889, 2
        %v1156 = vsel %vm1111, %v1153, %v1155
        %v1157 = vrot.slane %v891, 2
        %v1158 = vrot.slane %v892, 2
        %v1159 = vsel %vm1111, %v1157, %v1158
        %v1160 = vrot.slane %v893, 2
        %v1161 = vsel %vm1111, %v1158, %v1160
        %v1162 = vrot.slane %v895, 2
        %v1163 = vrot.slane %v896, 2
        %v1164 = vsel %vm1111, %v1162, %v1163
        %v1165 = vrot.slane %v897, 2
        %v1166 = vsel %vm1111, %v1163, %v1165
        %v1167 = vrot.slane %v899, 2
        %v1168 = vrot.slane %v900, 2
        %v1169 = vsel %vm1111, %v1167, %v1168
        %v1170 = vrot.slane %v901, 2
        %v1171 = vsel %vm1111, %v1168, %v1170
        %v1172 = vrot.slane %v903, 2
        %v1173 = vrot.slane %v904, 2
        %v1174 = vsel %vm1111, %v1172, %v1173
        %v1175 = vrot.slane %v905, 2
        %v1176 = vsel %vm1111, %v1173, %v1175
        %v1177 = vrot.slane %v907, 2
        %v1178 = vrot.slane %v908, 2
        %v1179 = vsel %vm1111, %v1177, %v1178
        %v1180 = vrot.slane %v909, 2
        %v1181 = vsel %vm1111, %v1178, %v1180
        %v1182 = vrot.slane %v911, 2
        %v1183 = vrot.slane %v912, 2
        %v1184 = vsel %vm1111, %v1182, %v1183
        %v1185 = vrot.slane %v913, 2
        %v1186 = vsel %vm1111, %v1183, %v1185
        %v1187 = vrot.slane %v915, 2
        %v1188 = vrot.slane %v916, 2
        %v1189 = vsel %vm1111, %v1187, %v1188
        %v1190 = vrot.slane %v917, 2
        %v1191 = vsel %vm1111, %v1188, %v1190
        %v1230 = vrot.slane %v918, 6
        %v1231 = vrot.slane %v919, 6
        %v1232 = vsel %vm982, %v1230, %v1231
        %v1233 = vrot.slane %v920, 6
        %v1234 = vsel %vm982, %v1231, %v1233
        %v1235 = vrot.slane %v922, 6
        %v1236 = vrot.slane %v923, 6
        %v1237 = vsel %vm982, %v1235, %v1236
        %v1238 = vrot.slane %v924, 6
        %v1239 = vsel %vm982, %v1236, %v1238
        %v1246 = vrot.slane %v919, 2
        %v1247 = vrot.slane %v920, 2
        %v1248 = vsel %vm1111, %v1246, %v1247
        %v1249 = vrot.slane %v921, 2
        %v1250 = vsel %vm1111, %v1247, %v1249
        %v1251 = vrot.slane %v923, 2
        %v1252 = vrot.slane %v924, 2
        %v1253 = vsel %vm1111, %v1251, %v1252
        %v1254 = vrot.slane %v925, 2
        %v1255 = vsel %vm1111, %v1252, %v1254
        %v1266 = vrot.slane %v926, 6
        %v1267 = vrot.slane %v927, 6
        %v1268 = vsel %vm982, %v1266, %v1267
        %v1269 = vrot.slane %v928, 6
        %v1270 = vsel %vm982, %v1267, %v1269
        %v1271 = vrot.slane %v930, 6
        %v1272 = vrot.slane %v931, 6
        %v1273 = vsel %vm982, %v1271, %v1272
        %v1274 = vrot.slane %v932, 6
        %v1275 = vsel %vm982, %v1272, %v1274
        %v1282 = vrot.slane %v927, 2
        %v1283 = vrot.slane %v928, 2
        %v1284 = vsel %vm1111, %v1282, %v1283
        %v1285 = vrot.slane %v929, 2
        %v1286 = vsel %vm1111, %v1283, %v1285
        %v1287 = vrot.slane %v931, 2
        %v1288 = vrot.slane %v932, 2
        %v1289 = vsel %vm1111, %v1287, %v1288
        %v1290 = vrot.slane %v933, 2
        %v1291 = vsel %vm1111, %v1288, %v1290
        %v1296 = vld [vmem:[#allocation9] sm:$0xff]
        %v1297 = vld [vmem:[#allocation9 + $0x8] sm:$0xff]
        %v1298 = vld [vmem:[#allocation9 + $0x10] sm:$0xff]
        %v1299 = vld [vmem:[#allocation9 + $0x18] sm:$0xff]
        %v1300 = vld [vmem:[#allocation9 + $0x20] sm:$0xff]
        %v1301 = vld [vmem:[#allocation9 + $0x28] sm:$0xff]
        %v1302 = vld [vmem:[#allocation9 + $0x30] sm:$0xff]
        %v1303 = vld [vmem:[#allocation9 + $0x38] sm:$0xff]
        %v1304 = vld [vmem:[#allocation9 + $0x40] sm:$0xff]
        %v1305 = vld [vmem:[#allocation9 + $0x48] sm:$0xff]
        %v1306 = vld [vmem:[#allocation9 + $0x50] sm:$0xff]
        %v1307 = vld [vmem:[#allocation9 + $0x58] sm:$0xff]
        %v1308 = vld [vmem:[#allocation9 + $0x60] sm:$0xff]
        %v1309 = vld [vmem:[#allocation9 + $0x68] sm:$0xff]
        %v1310 = vld [vmem:[#allocation9 + $0x70] sm:$0xff]
        %v1311 = vld [vmem:[#allocation9 + $0x78] sm:$0xff]
        %v1312 = vld [vmem:[#allocation9 + $0x80] sm:$0xff]
        %v1313 = vld [vmem:[#allocation9 + $0x88] sm:$0xff]
        %v1314 = vld [vmem:[#allocation9 + $0x90] sm:$0xff]
        %v1315 = vld [vmem:[#allocation9 + $0x98] sm:$0xff]
        %v1316 = vld [vmem:[#allocation9 + $0xa0] sm:$0xff]
        %v1317 = vld [vmem:[#allocation9 + $0xa8] sm:$0xff]
        %v1318 = vld [vmem:[#allocation9 + $0xb0] sm:$0xff]
        %v1319 = vld [vmem:[#allocation9 + $0xb8] sm:$0xff]
        %v1320 = vld [vmem:[#allocation9 + $0xc0] sm:$0xff]
        %v1321 = vld [vmem:[#allocation9 + $0xc8] sm:$0xff]
        %v1322 = vld [vmem:[#allocation9 + $0xd0] sm:$0xff]
        %v1323 = vld [vmem:[#allocation9 + $0xd8] sm:$0xff]
        %v1324 = vld [vmem:[#allocation9 + $0xe0] sm:$0xff]
        %v1325 = vld [vmem:[#allocation9 + $0xe8] sm:$0xff]
        %v1326 = vld [vmem:[#allocation9 + $0xf0] sm:$0xff]
        %v1327 = vld [vmem:[#allocation9 + $0xf8] sm:$0xff]
        %v1328 = vld [vmem:[#allocation9 + $0x100] sm:$0xff]
        %v1329 = vld [vmem:[#allocation9 + $0x108] sm:$0xff]
        %v1330 = vld [vmem:[#allocation9 + $0x110] sm:$0xff]
        %v1331 = vld [vmem:[#allocation9 + $0x118] sm:$0xff]
        %v1332 = vld [vmem:[#allocation9 + $0x120] sm:$0xff]
        %v1333 = vld [vmem:[#allocation9 + $0x128] sm:$0xff]
        %v1334 = vld [vmem:[#allocation9 + $0x130] sm:$0xff]
        %v1335 = vld [vmem:[#allocation9 + $0x138] sm:$0xff]
        %v1336 = vld [vmem:[#allocation9 + $0x140] sm:$0xff]
        %v1337 = vld [vmem:[#allocation9 + $0x148] sm:$0xff]
        %v1338 = vld [vmem:[#allocation9 + $0x150] sm:$0xff]
        %v1339 = vld [vmem:[#allocation9 + $0x158] sm:$0xff]
        %v1340 = vld [vmem:[#allocation9 + $0x160] sm:$0xff]
        %v1341 = vld [vmem:[#allocation9 + $0x168] sm:$0xff]
        %v1342 = vld [vmem:[#allocation9 + $0x170] sm:$0xff]
        %v1343 = vld [vmem:[#allocation9 + $0x178] sm:$0xff]
        %v1344 = vld [vmem:[#allocation9 + $0x180] sm:$0xff]
        %v1345 = vld [vmem:[#allocation9 + $0x188] sm:$0xff]
        %v1346 = vld [vmem:[#allocation9 + $0x190] sm:$0xff]
        %v1347 = vld [vmem:[#allocation9 + $0x198] sm:$0xff]
        %v1348 = vld [vmem:[#allocation9 + $0x1a0] sm:$0xff]
        %v1349 = vld [vmem:[#allocation9 + $0x1a8] sm:$0xff]
        %v1350 = vld [vmem:[#allocation9 + $0x1b0] sm:$0xff]
        %v1351 = vld [vmem:[#allocation9 + $0x1b8] sm:$0xff]
        %v1352 = vld [vmem:[#allocation9 + $0x1c0] sm:$0xff]
        %v1353 = vld [vmem:[#allocation9 + $0x1c8] sm:$0xff]
        %v1354 = vld [vmem:[#allocation9 + $0x1d0] sm:$0xff]
        %v1355 = vld [vmem:[#allocation9 + $0x1d8] sm:$0xff]
        %v1356 = vld [vmem:[#allocation9 + $0x1e0] sm:$0xff]
        %v1357 = vld [vmem:[#allocation9 + $0x1e8] sm:$0xff]
        %v1358 = vld [vmem:[#allocation9 + $0x1f0] sm:$0xff]
        %v1359 = vld [vmem:[#allocation9 + $0x1f8] sm:$0xff]
        %v1360 = vld [vmem:[#allocation9 + $0x200] sm:$0xff]
        %v1361 = vld [vmem:[#allocation9 + $0x208] sm:$0xff]
        %v1362 = vld [vmem:[#allocation9 + $0x210] sm:$0xff]
        %v1363 = vld [vmem:[#allocation9 + $0x218] sm:$0xff]
        %v1364 = vld [vmem:[#allocation9 + $0x220] sm:$0xff]
        %v1365 = vld [vmem:[#allocation9 + $0x228] sm:$0xff]
        %v1366 = vld [vmem:[#allocation9 + $0x230] sm:$0xff]
        %v1367 = vld [vmem:[#allocation9 + $0x238] sm:$0xff]
        %v1368 = vld [vmem:[#allocation9 + $0x240] sm:$0xff]
        %v1369 = vld [vmem:[#allocation9 + $0x248] sm:$0xff]
        %v1370 = vld [vmem:[#allocation9 + $0x250] sm:$0xff]
        %v1371 = vld [vmem:[#allocation9 + $0x258] sm:$0xff]
        %v1372 = vld [vmem:[#allocation9 + $0x260] sm:$0xff]
        %v1373 = vld [vmem:[#allocation9 + $0x268] sm:$0xff]
        %v1374 = vld [vmem:[#allocation9 + $0x270] sm:$0xff]
        %v1375 = vld [vmem:[#allocation9 + $0x278] sm:$0xff]
        %v1376 = vld [vmem:[#allocation9 + $0x280] sm:$0xff]
        %v1377 = vld [vmem:[#allocation9 + $0x288] sm:$0xff]
        %v1378 = vld [vmem:[#allocation9 + $0x290] sm:$0xff]
        %v1379 = vld [vmem:[#allocation9 + $0x298] sm:$0xff]
        %v1380 = vld [vmem:[#allocation9 + $0x2a0] sm:$0xff]
        %v1381 = vld [vmem:[#allocation9 + $0x2a8] sm:$0xff]
        %v1382 = vld [vmem:[#allocation9 + $0x2b0] sm:$0xff]
        %v1383 = vld [vmem:[#allocation9 + $0x2b8] sm:$0xff]
        %v1384 = vld [vmem:[#allocation9 + $0x2c0] sm:$0xff]
        %v1385 = vld [vmem:[#allocation9 + $0x2c8] sm:$0xff]
        %v1386 = vld [vmem:[#allocation9 + $0x2d0] sm:$0xff]
        %v1387 = vld [vmem:[#allocation9 + $0x2d8] sm:$0xff]
        %v1388 = vld [vmem:[#allocation9 + $0x2e0] sm:$0xff]
        %v1389 = vld [vmem:[#allocation9 + $0x2e8] sm:$0xff]
        %v1390 = vld [vmem:[#allocation9 + $0x2f0] sm:$0xff]
        %v1391 = vld [vmem:[#allocation9 + $0x2f8] sm:$0xff]
        %v1392 = vld [vmem:[#allocation9 + $0x300] sm:$0xff]
        %v1393 = vld [vmem:[#allocation9 + $0x308] sm:$0xff]
        %v1394 = vld [vmem:[#allocation9 + $0x310] sm:$0xff]
        %v1395 = vld [vmem:[#allocation9 + $0x318] sm:$0xff]
        %v1396 = vld [vmem:[#allocation9 + $0x320] sm:$0xff]
        %v1397 = vld [vmem:[#allocation9 + $0x328] sm:$0xff]
        %v1398 = vld [vmem:[#allocation9 + $0x330] sm:$0xff]
        %v1399 = vld [vmem:[#allocation9 + $0x338] sm:$0xff]
        %v1400 = vld [vmem:[#allocation9 + $0x340] sm:$0xff]
        %v1401 = vld [vmem:[#allocation9 + $0x348] sm:$0xff]
        %v1402 = vld [vmem:[#allocation9 + $0x350] sm:$0xff]
        %v1403 = vld [vmem:[#allocation9 + $0x358] sm:$0xff]
        %v1404 = vld [vmem:[#allocation9 + $0x360] sm:$0xff]
        %v1405 = vld [vmem:[#allocation9 + $0x368] sm:$0xff]
        %v1406 = vld [vmem:[#allocation9 + $0x370] sm:$0xff]
        %v1407 = vld [vmem:[#allocation9 + $0x378] sm:$0xff]
        %v1408 = vld [vmem:[#allocation9 + $0x380] sm:$0xff]
        %v1409 = vld [vmem:[#allocation9 + $0x388] sm:$0xff]
        %v1410 = vld [vmem:[#allocation9 + $0x390] sm:$0xff]
        %v1411 = vld [vmem:[#allocation9 + $0x398] sm:$0xff]
        %v1412 = vld [vmem:[#allocation9 + $0x3a0] sm:$0xff]
        %v1413 = vld [vmem:[#allocation9 + $0x3a8] sm:$0xff]
        %v1414 = vld [vmem:[#allocation9 + $0x3b0] sm:$0xff]
        %v1415 = vld [vmem:[#allocation9 + $0x3b8] sm:$0xff]
        %v1416 = vld [vmem:[#allocation9 + $0x3c0] sm:$0xff]
        %v1417 = vld [vmem:[#allocation9 + $0x3c8] sm:$0xff]
        %v1418 = vld [vmem:[#allocation9 + $0x3d0] sm:$0xff]
        %v1419 = vld [vmem:[#allocation9 + $0x3d8] sm:$0xff]
        %v1420 = vld [vmem:[#allocation9 + $0x3e0] sm:$0xff]
        %v1421 = vld [vmem:[#allocation9 + $0x3e8] sm:$0xff]
        %v1422 = vld [vmem:[#allocation9 + $0x3f0] sm:$0xff]
        %v1423 = vld [vmem:[#allocation9 + $0x3f8] sm:$0xff]
        %v1424 = vld [vmem:[#allocation9 + $0x400] sm:$0xff]
        %v1425 = vld [vmem:[#allocation9 + $0x408] sm:$0xff]
        %v1426 = vld [vmem:[#allocation9 + $0x410] sm:$0xff]
        %v1427 = vld [vmem:[#allocation9 + $0x418] sm:$0xff]
        %v1428 = vld [vmem:[#allocation9 + $0x420] sm:$0xff]
        %v1429 = vld [vmem:[#allocation9 + $0x428] sm:$0xff]
        %v1430 = vld [vmem:[#allocation9 + $0x430] sm:$0xff]
        %v1431 = vld [vmem:[#allocation9 + $0x438] sm:$0xff]
        %v1432 = vld [vmem:[#allocation9 + $0x440] sm:$0xff]
        %v1433 = vld [vmem:[#allocation9 + $0x448] sm:$0xff]
        %v1434 = vld [vmem:[#allocation9 + $0x450] sm:$0xff]
        %v1435 = vld [vmem:[#allocation9 + $0x458] sm:$0xff]
        %v1436 = vld [vmem:[#allocation9 + $0x460] sm:$0xff]
        %v1437 = vld [vmem:[#allocation9 + $0x468] sm:$0xff]
        %v1438 = vld [vmem:[#allocation9 + $0x470] sm:$0xff]
        %v1439 = vld [vmem:[#allocation9 + $0x478] sm:$0xff]
        %v1440 = vld [vmem:[%s6] sm:$0x1]
        %v1442 = vlaneseq
        %v1443 = vshrl.u32 %v1442, 7
        %v1444 = vsub.s32 0, %v1443
        %v1445 = vrot.slane %v1440, %v1444
        %1447 = vmatprep.subr.mxu0 0.0
        %1448 = vmatpush1.msra.mxu0 %v1296
        %1449 = vmatprep.subr.mxu0 0.0
        %1450 = vmatpush1.msra.mxu0 %v1297
        %1451 = vmatprep.subr.mxu0 0.0
        %1452 = vmatpush1.msra.mxu0 %v1298
        %1453 = vmatprep.subr.mxu0 0.0
        %1454 = vmatpush1.msra.mxu0 %v1299
        %1455 = vmatprep.subr.mxu0 0.0
        %1456 = vmatpush1.msra.mxu0 %v1300
        %1457 = vmatprep.subr.mxu0 0.0
        %1458 = vmatpush1.msra.mxu0 %v1301
        %1459 = vmatprep.subr.mxu0 0.0
        %1460 = vmatpush1.msra.mxu0 %v1302
        %1461 = vmatprep.subr.mxu0 0.0
        %1462 = vmatpush1.msra.mxu0 %v1303
        %1463 = vmatprep.subr.mxu0 0.0
        %1464 = vmatpush1.msra.mxu0 %v1304
        %1465 = vmatprep.subr.mxu0 0.0
        %1466 = vmatpush1.msra.mxu0 %v1305
        %1467 = vmatprep.subr.mxu0 0.0
        %1468 = vmatpush1.msra.mxu0 %v1306
        %1469 = vmatprep.subr.mxu0 0.0
        %1470 = vmatpush1.msra.mxu0 %v1307
        %1471 = vmatprep.subr.mxu0 0.0
        %1472 = vmatpush1.msra.mxu0 %v1308
        %1473 = vmatprep.subr.mxu0 0.0
        %1474 = vmatpush1.msra.mxu0 %v1309
        %1475 = vmatprep.subr.mxu0 0.0
        %1476 = vmatpush1.msra.mxu0 %v1310
        %1477 = vmatprep.subr.mxu0 0.0
        %1478 = vmatpush1.msra.mxu0 %v1311
        %1479 = vmatprep.subr.mxu0 0.0
        %1480 = vmatpush1.msra.mxu0 %v1312
        %1481 = vmatprep.subr.mxu0 0.0
        %1482 = vmatpush1.msra.mxu0 %v1313
        %1483 = vmatprep.subr.mxu0 0.0
        %1484 = vmatpush1.msra.mxu0 %v1314
        %1485 = vmatprep.subr.mxu0 0.0
        %1486 = vmatpush1.msra.mxu0 %v1315
        %1487 = vmatprep.subr.mxu0 0.0
        %1488 = vmatpush1.msra.mxu0 %v1316
        %1489 = vmatprep.subr.mxu0 0.0
        %1490 = vmatpush1.msra.mxu0 %v1317
        %1491 = vmatprep.subr.mxu0 0.0
        %1492 = vmatpush1.msra.mxu0 %v1318
        %1493 = vmatprep.subr.mxu0 0.0
        %1494 = vmatpush1.msra.mxu0 %v1319
        %1495 = vmatprep.subr.mxu0 0.0
        %1496 = vmatpush1.msra.mxu0 %v1320
        %1497 = vmatprep.subr.mxu0 0.0
        %1498 = vmatpush1.msra.mxu0 %v1321
        %1499 = vmatprep.subr.mxu0 0.0
        %1500 = vmatpush1.msra.mxu0 %v1322
        %1501 = vmatprep.subr.mxu0 0.0
        %1502 = vmatpush1.msra.mxu0 %v1323
        %1503 = vmatprep.subr.mxu0 0.0
        %1504 = vmatpush1.msra.mxu0 %v1324
        %1505 = vmatprep.subr.mxu0 0.0
        %1506 = vmatpush1.msra.mxu0 %v1325
        %1507 = vmatprep.subr.mxu0 0.0
        %1508 = vmatpush1.msra.mxu0 %v1326
        %1509 = vmatprep.subr.mxu0 0.0
        %1510 = vmatpush1.msra.mxu0 %v1327
        %1511 = vmatprep.mubr.f32.mxu0 %v855
        %1512 = vmatmul.mubr.f32.gmra.mrb[0].mxu0 %v985
        %v1513 = vpop.f32.mrb[0].mxu0
        %v1514 = vadd.f32 %v1445, %v1513
        %v1515 = vpop.f32.mrb[0].mxu0
        %1516 = vmatprep.mubr.f32.mxu0 %v856
        %1517 = vmatmul.mubr.f32.gmra.mrb[0].mxu0 %v987
        %v1518 = vpop.f32.mrb[0].mxu0
        %v1519 = vadd.f32 %v1445, %v1518
        %v1520 = vpop.f32.mrb[0].mxu0
        %1521 = vmatprep.mubr.f32.mxu0 %v859
        %1522 = vmatmul.mubr.f32.gmra.mrb[0].mxu0 %v990
        %v1523 = vpop.f32.mrb[0].mxu0
        %v1524 = vadd.f32 %v1445, %v1523
        %v1525 = vpop.f32.mrb[0].mxu0
        %1526 = vmatprep.mubr.f32.mxu0 %v860
        %1527 = vmatmul.mubr.f32.gmra.mrb[0].mxu0 %v992
        %v1528 = vpop.f32.mrb[0].mxu0
        %v1529 = vadd.f32 %v1445, %v1528
        %v1530 = vpop.f32.mrb[0].mxu0
        %1531 = vmatprep.mubr.f32.mxu0 %v863
        %1532 = vmatmul.mubr.f32.gmra.mrb[0].mxu0 %v995
        %v1533 = vpop.f32.mrb[0].mxu0
        %v1534 = vadd.f32 %v1445, %v1533
        %v1535 = vpop.f32.mrb[0].mxu0
        %1536 = vmatprep.mubr.f32.mxu0 %v864
        %1537 = vmatmul.mubr.f32.gmra.mrb[0].mxu0 %v997
        %v1538 = vpop.f32.mrb[0].mxu0
        %v1539 = vadd.f32 %v1445, %v1538
        %v1540 = vpop.f32.mrb[0].mxu0
        %1541 = vmatprep.mubr.f32.mxu0 %v867
        %1542 = vmatmul.mubr.f32.gmra.mrb[0].mxu0 %v1000
        %v1543 = vpop.f32.mrb[0].mxu0
        %v1544 = vadd.f32 %v1445, %v1543
        %v1545 = vpop.f32.mrb[0].mxu0
        %1546 = vmatprep.mubr.f32.mxu0 %v868
        %1547 = vmatmul.mubr.f32.gmra.mrb[0].mxu0 %v1002
        %v1548 = vpop.f32.mrb[0].mxu0
        %v1549 = vadd.f32 %v1445, %v1548
        %v1550 = vpop.f32.mrb[0].mxu0
        %1551 = vmatprep.mubr.f32.mxu0 %v871
        %1552 = vmatmul.mubr.f32.gmra.mrb[0].mxu0 %v1005
        %v1553 = vpop.f32.mrb[0].mxu0
        %v1554 = vadd.f32 %v1445, %v1553
        %v1555 = vpop.f32.mrb[0].mxu0
        %1556 = vmatprep.mubr.f32.mxu0 %v872
        %1557 = vmatmul.mubr.f32.gmra.mrb[0].mxu0 %v1007
        %v1558 = vpop.f32.mrb[0].mxu0
        %v1559 = vadd.f32 %v1445, %v1558
        %v1560 = vpop.f32.mrb[0].mxu0
        %1561 = vmatprep.mubr.f32.mxu0 %v875
        %1562 = vmatmul.mubr.f32.gmra.mrb[0].mxu0 %v1010
        %v1563 = vpop.f32.mrb[0].mxu0
        %v1564 = vadd.f32 %v1445, %v1563
        %v1565 = vpop.f32.mrb[0].mxu0
        %1566 = vmatprep.mubr.f32.mxu0 %v876
        %1567 = vmatmul.mubr.f32.gmra.mrb[0].mxu0 %v1012
        %v1568 = vpop.f32.mrb[0].mxu0
        %v1569 = vadd.f32 %v1445, %v1568
        %v1570 = vpop.f32.mrb[0].mxu0
        %1571 = vmatprep.mubr.f32.mxu0 %v879
        %1572 = vmatmul.mubr.f32.gmra.mrb[0].mxu0 %v1015
        %v1573 = vpop.f32.mrb[0].mxu0
        %v1574 = vadd.f32 %v1445, %v1573
        %v1575 = vpop.f32.mrb[0].mxu0
        %1576 = vmatprep.mubr.f32.mxu0 %v880
        %1577 = vmatmul.mubr.f32.gmra.mrb[0].mxu0 %v1017
        %v1578 = vpop.f32.mrb[0].mxu0
        %v1579 = vadd.f32 %v1445, %v1578
        %v1580 = vpop.f32.mrb[0].mxu0
        %1581 = vmatprep.mubr.f32.mxu0 %v883
        %1582 = vmatmul.mubr.f32.gmra.mrb[0].mxu0 %v1020
        %v1583 = vpop.f32.mrb[0].mxu0
        %v1584 = vadd.f32 %v1445, %v1583
        %v1585 = vpop.f32.mrb[0].mxu0
        %1586 = vmatprep.mubr.f32.mxu0 %v884
        %1587 = vmatmul.mubr.f32.gmra.mrb[0].mxu0 %v1022
        %v1588 = vpop.f32.mrb[0].mxu0
        %v1589 = vadd.f32 %v1445, %v1588
        %v1590 = vpop.f32.mrb[0].mxu0
        %1591 = vmatprep.mubr.f32.mxu0 %v887
        %1592 = vmatmul.mubr.f32.gmra.mrb[0].mxu0 %v1025
        %v1593 = vpop.f32.mrb[0].mxu0
        %v1594 = vadd.f32 %v1445, %v1593
        %v1595 = vpop.f32.mrb[0].mxu0
        %1596 = vmatprep.mubr.f32.mxu0 %v888
        %1597 = vmatmul.mubr.f32.gmra.mrb[0].mxu0 %v1027
        %v1598 = vpop.f32.mrb[0].mxu0
        %v1599 = vadd.f32 %v1445, %v1598
        %v1600 = vpop.f32.mrb[0].mxu0
        %1601 = vmatprep.mubr.f32.mxu0 %v891
        %1602 = vmatmul.mubr.f32.gmra.mrb[0].mxu0 %v1030
        %v1603 = vpop.f32.mrb[0].mxu0
        %v1604 = vadd.f32 %v1445, %v1603
        %v1605 = vpop.f32.mrb[0].mxu0
        %1606 = vmatprep.mubr.f32.mxu0 %v892
        %1607 = vmatmul.mubr.f32.gmra.mrb[0].mxu0 %v1032
        %v1608 = vpop.f32.mrb[0].mxu0
        %v1609 = vadd.f32 %v1445, %v1608
        %v1610 = vpop.f32.mrb[0].mxu0
        %1611 = vmatprep.mubr.f32.mxu0 %v895
        %1612 = vmatmul.mubr.f32.gmra.mrb[0].mxu0 %v1035
        %v1613 = vpop.f32.mrb[0].mxu0
        %v1614 = vadd.f32 %v1445, %v1613
        %v1615 = vpop.f32.mrb[0].mxu0
        %1616 = vmatprep.mubr.f32.mxu0 %v896
        %1617 = vmatmul.mubr.f32.gmra.mrb[0].mxu0 %v1037
        %v1618 = vpop.f32.mrb[0].mxu0
        %v1619 = vadd.f32 %v1445, %v1618
        %v1620 = vpop.f32.mrb[0].mxu0
        %1621 = vmatprep.mubr.f32.mxu0 %v899
        %1622 = vmatmul.mubr.f32.gmra.mrb[0].mxu0 %v1040
        %v1623 = vpop.f32.mrb[0].mxu0
        %v1624 = vadd.f32 %v1445, %v1623
        %v1625 = vpop.f32.mrb[0].mxu0
        %1626 = vmatprep.mubr.f32.mxu0 %v900
        %1627 = vmatmul.mubr.f32.gmra.mrb[0].mxu0 %v1042
        %v1628 = vpop.f32.mrb[0].mxu0
        %v1629 = vadd.f32 %v1445, %v1628
        %v1630 = vpop.f32.mrb[0].mxu0
        %1631 = vmatprep.mubr.f32.mxu0 %v903
        %1632 = vmatmul.mubr.f32.gmra.mrb[0].mxu0 %v1045
        %v1633 = vpop.f32.mrb[0].mxu0
        %v1634 = vadd.f32 %v1445, %v1633
        %v1635 = vpop.f32.mrb[0].mxu0
        %1636 = vmatprep.mubr.f32.mxu0 %v904
        %1637 = vmatmul.mubr.f32.gmra.mrb[0].mxu0 %v1047
        %v1638 = vpop.f32.mrb[0].mxu0
        %v1639 = vadd.f32 %v1445, %v1638
        %v1640 = vpop.f32.mrb[0].mxu0
        %1641 = vmatprep.mubr.f32.mxu0 %v907
        %1642 = vmatmul.mubr.f32.gmra.mrb[0].mxu0 %v1050
        %v1643 = vpop.f32.mrb[0].mxu0
        %v1644 = vadd.f32 %v1445, %v1643
        %v1645 = vpop.f32.mrb[0].mxu0
        %1646 = vmatprep.mubr.f32.mxu0 %v908
        %1647 = vmatmul.mubr.f32.gmra.mrb[0].mxu0 %v1052
        %v1648 = vpop.f32.mrb[0].mxu0
        %v1649 = vadd.f32 %v1445, %v1648
        %v1650 = vpop.f32.mrb[0].mxu0
        %1651 = vmatprep.mubr.f32.mxu0 %v911
        %1652 = vmatmul.mubr.f32.gmra.mrb[0].mxu0 %v1055
        %v1653 = vpop.f32.mrb[0].mxu0
        %v1654 = vadd.f32 %v1445, %v1653
        %v1655 = vpop.f32.mrb[0].mxu0
        %1656 = vmatprep.mubr.f32.mxu0 %v912
        %1657 = vmatmul.mubr.f32.gmra.mrb[0].mxu0 %v1057
        %v1658 = vpop.f32.mrb[0].mxu0
        %v1659 = vadd.f32 %v1445, %v1658
        %v1660 = vpop.f32.mrb[0].mxu0
        %1661 = vmatprep.mubr.f32.mxu0 %v915
        %1662 = vmatmul.mubr.f32.gmra.mrb[0].mxu0 %v1060
        %v1663 = vpop.f32.mrb[0].mxu0
        %v1664 = vadd.f32 %v1445, %v1663
        %v1665 = vpop.f32.mrb[0].mxu0
        %1666 = vmatprep.mubr.f32.mxu0 %v916
        %1667 = vmatmul.mubr.f32.gmra.mrb[0].mxu0 %v1062
        %v1668 = vpop.f32.mrb[0].mxu0
        %v1669 = vadd.f32 %v1445, %v1668
        %v1670 = vpop.f32.mrb[0].mxu0
        %1671 = vdwg.mxu0
        %1672 = vmatprep.subr.mxu0 0.0
        %1673 = vmatpush1.msra.mxu0 %v1328
        %1674 = vmatprep.subr.mxu0 0.0
        %1675 = vmatpush1.msra.mxu0 %v1329
        %1676 = vmatprep.subr.mxu0 0.0
        %1677 = vmatpush1.msra.mxu0 %v1330
        %1678 = vmatprep.subr.mxu0 0.0
        %1679 = vmatpush1.msra.mxu0 %v1331
        %1680 = vmatprep.subr.mxu0 0.0
        %1681 = vmatpush1.msra.mxu0 %v1332
        %1682 = vmatprep.subr.mxu0 0.0
        %1683 = vmatpush1.msra.mxu0 %v1333
        %1684 = vmatprep.subr.mxu0 0.0
        %1685 = vmatpush1.msra.mxu0 %v1334
        %1686 = vmatprep.subr.mxu0 0.0
        %1687 = vmatpush1.msra.mxu0 %v1335
        %1688 = vmatprep.subr.mxu0 0.0
        %1689 = vmatpush1.msra.mxu0 %v1336
        %1690 = vmatprep.subr.mxu0 0.0
        %1691 = vmatpush1.msra.mxu0 %v1337
        %1692 = vmatprep.subr.mxu0 0.0
        %1693 = vmatpush1.msra.mxu0 %v1338
        %1694 = vmatprep.subr.mxu0 0.0
        %1695 = vmatpush1.msra.mxu0 %v1339
        %1696 = vmatprep.subr.mxu0 0.0
        %1697 = vmatpush1.msra.mxu0 %v1340
        %1698 = vmatprep.subr.mxu0 0.0
        %1699 = vmatpush1.msra.mxu0 %v1341
        %1700 = vmatprep.subr.mxu0 0.0
        %1701 = vmatpush1.msra.mxu0 %v1342
        %1702 = vmatprep.subr.mxu0 0.0
        %1703 = vmatpush1.msra.mxu0 %v1343
        %1704 = vmatprep.subr.mxu0 0.0
        %1705 = vmatpush1.msra.mxu0 %v1344
        %1706 = vmatprep.subr.mxu0 0.0
        %1707 = vmatpush1.msra.mxu0 %v1345
        %1708 = vmatprep.subr.mxu0 0.0
        %1709 = vmatpush1.msra.mxu0 %v1346
        %1710 = vmatprep.subr.mxu0 0.0
        %1711 = vmatpush1.msra.mxu0 %v1347
        %1712 = vmatprep.subr.mxu0 0.0
        %1713 = vmatpush1.msra.mxu0 %v1348
        %1714 = vmatprep.subr.mxu0 0.0
        %1715 = vmatpush1.msra.mxu0 %v1349
        %1716 = vmatprep.subr.mxu0 0.0
        %1717 = vmatpush1.msra.mxu0 %v1350
        %1718 = vmatprep.subr.mxu0 0.0
        %1719 = vmatpush1.msra.mxu0 %v1351
        %1720 = vmatprep.subr.mxu0 0.0
        %1721 = vmatpush1.msra.mxu0 %v1352
        %1722 = vmatprep.subr.mxu0 0.0
        %1723 = vmatpush1.msra.mxu0 %v1353
        %1724 = vmatprep.subr.mxu0 0.0
        %1725 = vmatpush1.msra.mxu0 %v1354
        %1726 = vmatprep.subr.mxu0 0.0
        %1727 = vmatpush1.msra.mxu0 %v1355
        %1728 = vmatprep.subr.mxu0 0.0
        %1729 = vmatpush1.msra.mxu0 %v1356
        %1730 = vmatprep.subr.mxu0 0.0
        %1731 = vmatpush1.msra.mxu0 %v1357
        %1732 = vmatprep.subr.mxu0 0.0
        %1733 = vmatpush1.msra.mxu0 %v1358
        %1734 = vmatprep.subr.mxu0 0.0
        %1735 = vmatpush1.msra.mxu0 %v1359
        %1736 = vmatprep.mubr.f32.mxu0 %v995
        %1737 = vmatmul.mubr.f32.gmra.mrb[0].mxu0 %v1114
        %v1738 = vpop.f32.mrb[0].mxu0
        %v1739 = vadd.f32 %v1514, %v1738
        %v1740 = vpop.f32.mrb[0].mxu0
        %1741 = vmatprep.mubr.f32.mxu0 %v997
        %1742 = vmatmul.mubr.f32.gmra.mrb[0].mxu0 %v1116
        %v1743 = vpop.f32.mrb[0].mxu0
        %v1744 = vadd.f32 %v1519, %v1743
        %v1745 = vpop.f32.mrb[0].mxu0
        %1746 = vmatprep.mubr.f32.mxu0 %v1000
        %1747 = vmatmul.mubr.f32.gmra.mrb[0].mxu0 %v1119
        %v1748 = vpop.f32.mrb[0].mxu0
        %v1749 = vadd.f32 %v1524, %v1748
        %v1750 = vpop.f32.mrb[0].mxu0
        %1751 = vmatprep.mubr.f32.mxu0 %v1002
        %1752 = vmatmul.mubr.f32.gmra.mrb[0].mxu0 %v1121
        %v1753 = vpop.f32.mrb[0].mxu0
        %v1754 = vadd.f32 %v1529, %v1753
        %v1755 = vpop.f32.mrb[0].mxu0
        %1756 = vmatprep.mubr.f32.mxu0 %v1005
        %1757 = vmatmul.mubr.f32.gmra.mrb[0].mxu0 %v1124
        %v1758 = vpop.f32.mrb[0].mxu0
        %v1759 = vadd.f32 %v1534, %v1758
        %v1760 = vpop.f32.mrb[0].mxu0
        %1761 = vmatprep.mubr.f32.mxu0 %v1007
        %1762 = vmatmul.mubr.f32.gmra.mrb[0].mxu0 %v1126
        %v1763 = vpop.f32.mrb[0].mxu0
        %v1764 = vadd.f32 %v1539, %v1763
        %v1765 = vpop.f32.mrb[0].mxu0
        %1766 = vmatprep.mubr.f32.mxu0 %v1010
        %1767 = vmatmul.mubr.f32.gmra.mrb[0].mxu0 %v1129
        %v1768 = vpop.f32.mrb[0].mxu0
        %v1769 = vadd.f32 %v1544, %v1768
        %v1770 = vpop.f32.mrb[0].mxu0
        %1771 = vmatprep.mubr.f32.mxu0 %v1012
        %1772 = vmatmul.mubr.f32.gmra.mrb[0].mxu0 %v1131
        %v1773 = vpop.f32.mrb[0].mxu0
        %v1774 = vadd.f32 %v1549, %v1773
        %v1775 = vpop.f32.mrb[0].mxu0
        %1776 = vmatprep.mubr.f32.mxu0 %v1015
        %1777 = vmatmul.mubr.f32.gmra.mrb[0].mxu0 %v1134
        %v1778 = vpop.f32.mrb[0].mxu0
        %v1779 = vadd.f32 %v1554, %v1778
        %v1780 = vpop.f32.mrb[0].mxu0
        %1781 = vmatprep.mubr.f32.mxu0 %v1017
        %1782 = vmatmul.mubr.f32.gmra.mrb[0].mxu0 %v1136
        %v1783 = vpop.f32.mrb[0].mxu0
        %v1784 = vadd.f32 %v1559, %v1783
        %v1785 = vpop.f32.mrb[0].mxu0
        %1786 = vmatprep.mubr.f32.mxu0 %v1020
        %1787 = vmatmul.mubr.f32.gmra.mrb[0].mxu0 %v1139
        %v1788 = vpop.f32.mrb[0].mxu0
        %v1789 = vadd.f32 %v1564, %v1788
        %v1790 = vpop.f32.mrb[0].mxu0
        %1791 = vmatprep.mubr.f32.mxu0 %v1022
        %1792 = vmatmul.mubr.f32.gmra.mrb[0].mxu0 %v1141
        %v1793 = vpop.f32.mrb[0].mxu0
        %v1794 = vadd.f32 %v1569, %v1793
        %v1795 = vpop.f32.mrb[0].mxu0
        %1796 = vmatprep.mubr.f32.mxu0 %v1025
        %1797 = vmatmul.mubr.f32.gmra.mrb[0].mxu0 %v1144
        %v1798 = vpop.f32.mrb[0].mxu0
        %v1799 = vadd.f32 %v1574, %v1798
        %v1800 = vpop.f32.mrb[0].mxu0
        %1801 = vmatprep.mubr.f32.mxu0 %v1027
        %1802 = vmatmul.mubr.f32.gmra.mrb[0].mxu0 %v1146
        %v1803 = vpop.f32.mrb[0].mxu0
        %v1804 = vadd.f32 %v1579, %v1803
        %v1805 = vpop.f32.mrb[0].mxu0
        %1806 = vmatprep.mubr.f32.mxu0 %v1030
        %1807 = vmatmul.mubr.f32.gmra.mrb[0].mxu0 %v1149
        %v1808 = vpop.f32.mrb[0].mxu0
        %v1809 = vadd.f32 %v1584, %v1808
        %v1810 = vpop.f32.mrb[0].mxu0
        %1811 = vmatprep.mubr.f32.mxu0 %v1032
        %1812 = vmatmul.mubr.f32.gmra.mrb[0].mxu0 %v1151
        %v1813 = vpop.f32.mrb[0].mxu0
        %v1814 = vadd.f32 %v1589, %v1813
        %v1815 = vpop.f32.mrb[0].mxu0
        %1816 = vmatprep.mubr.f32.mxu0 %v1035
        %1817 = vmatmul.mubr.f32.gmra.mrb[0].mxu0 %v1154
        %v1818 = vpop.f32.mrb[0].mxu0
        %v1819 = vadd.f32 %v1594, %v1818
        %v1820 = vpop.f32.mrb[0].mxu0
        %1821 = vmatprep.mubr.f32.mxu0 %v1037
        %1822 = vmatmul.mubr.f32.gmra.mrb[0].mxu0 %v1156
        %v1823 = vpop.f32.mrb[0].mxu0
        %v1824 = vadd.f32 %v1599, %v1823
        %v1825 = vpop.f32.mrb[0].mxu0
        %1826 = vmatprep.mubr.f32.mxu0 %v1040
        %1827 = vmatmul.mubr.f32.gmra.mrb[0].mxu0 %v1159
        %v1828 = vpop.f32.mrb[0].mxu0
        %v1829 = vadd.f32 %v1604, %v1828
        %v1830 = vpop.f32.mrb[0].mxu0
        %1831 = vmatprep.mubr.f32.mxu0 %v1042
        %1832 = vmatmul.mubr.f32.gmra.mrb[0].mxu0 %v1161
        %v1833 = vpop.f32.mrb[0].mxu0
        %v1834 = vadd.f32 %v1609, %v1833
        %v1835 = vpop.f32.mrb[0].mxu0
        %1836 = vmatprep.mubr.f32.mxu0 %v1045
        %1837 = vmatmul.mubr.f32.gmra.mrb[0].mxu0 %v1164
        %v1838 = vpop.f32.mrb[0].mxu0
        %v1839 = vadd.f32 %v1614, %v1838
        %v1840 = vpop.f32.mrb[0].mxu0
        %1841 = vmatprep.mubr.f32.mxu0 %v1047
        %1842 = vmatmul.mubr.f32.gmra.mrb[0].mxu0 %v1166
        %v1843 = vpop.f32.mrb[0].mxu0
        %v1844 = vadd.f32 %v1619, %v1843
        %v1845 = vpop.f32.mrb[0].mxu0
        %1846 = vmatprep.mubr.f32.mxu0 %v1050
        %1847 = vmatmul.mubr.f32.gmra.mrb[0].mxu0 %v1169
        %v1848 = vpop.f32.mrb[0].mxu0
        %v1849 = vadd.f32 %v1624, %v1848
        %v1850 = vpop.f32.mrb[0].mxu0
        %1851 = vmatprep.mubr.f32.mxu0 %v1052
        %1852 = vmatmul.mubr.f32.gmra.mrb[0].mxu0 %v1171
        %v1853 = vpop.f32.mrb[0].mxu0
        %v1854 = vadd.f32 %v1629, %v1853
        %v1855 = vpop.f32.mrb[0].mxu0
        %1856 = vmatprep.mubr.f32.mxu0 %v1055
        %1857 = vmatmul.mubr.f32.gmra.mrb[0].mxu0 %v1174
        %v1858 = vpop.f32.mrb[0].mxu0
        %v1859 = vadd.f32 %v1634, %v1858
        %v1860 = vpop.f32.mrb[0].mxu0
        %1861 = vmatprep.mubr.f32.mxu0 %v1057
        %1862 = vmatmul.mubr.f32.gmra.mrb[0].mxu0 %v1176
        %v1863 = vpop.f32.mrb[0].mxu0
        %v1864 = vadd.f32 %v1639, %v1863
        %v1865 = vpop.f32.mrb[0].mxu0
        %1866 = vmatprep.mubr.f32.mxu0 %v1060
        %1867 = vmatmul.mubr.f32.gmra.mrb[0].mxu0 %v1179
        %v1868 = vpop.f32.mrb[0].mxu0
        %v1869 = vadd.f32 %v1644, %v1868
        %v1870 = vpop.f32.mrb[0].mxu0
        %1871 = vmatprep.mubr.f32.mxu0 %v1062
        %1872 = vmatmul.mubr.f32.gmra.mrb[0].mxu0 %v1181
        %v1873 = vpop.f32.mrb[0].mxu0
        %v1874 = vadd.f32 %v1649, %v1873
        %v1875 = vpop.f32.mrb[0].mxu0
        %1876 = vmatprep.mubr.f32.mxu0 %v1232
        %1877 = vmatmul.mubr.f32.gmra.mrb[0].mxu0 %v1184
        %v1878 = vpop.f32.mrb[0].mxu0
        %v1879 = vadd.f32 %v1654, %v1878
        %v1880 = vpop.f32.mrb[0].mxu0
        %1881 = vmatprep.mubr.f32.mxu0 %v1234
        %1882 = vmatmul.mubr.f32.gmra.mrb[0].mxu0 %v1186
        %v1883 = vpop.f32.mrb[0].mxu0
        %v1884 = vadd.f32 %v1659, %v1883
        %v1885 = vpop.f32.mrb[0].mxu0
        %1886 = vmatprep.mubr.f32.mxu0 %v1237
        %1887 = vmatmul.mubr.f32.gmra.mrb[0].mxu0 %v1189
        %v1888 = vpop.f32.mrb[0].mxu0
        %v1889 = vadd.f32 %v1664, %v1888
        %v1890 = vpop.f32.mrb[0].mxu0
        %1891 = vmatprep.mubr.f32.mxu0 %v1239
        %1892 = vmatmul.mubr.f32.gmra.mrb[0].mxu0 %v1191
        %v1893 = vpop.f32.mrb[0].mxu0
        %v1894 = vadd.f32 %v1669, %v1893
        %v1895 = vpop.f32.mrb[0].mxu0
        %1896 = vdwg.mxu0
        %1897 = vmatprep.subr.mxu0 0.0
        %1898 = vmatpush1.msra.mxu0 %v1360
        %1899 = vmatprep.subr.mxu0 0.0
        %1900 = vmatpush1.msra.mxu0 %v1361
        %1901 = vmatprep.subr.mxu0 0.0
        %1902 = vmatpush1.msra.mxu0 %v1362
        %1903 = vmatprep.subr.mxu0 0.0
        %1904 = vmatpush1.msra.mxu0 %v1363
        %1905 = vmatprep.subr.mxu0 0.0
        %1906 = vmatpush1.msra.mxu0 %v1364
        %1907 = vmatprep.subr.mxu0 0.0
        %1908 = vmatpush1.msra.mxu0 %v1365
        %1909 = vmatprep.subr.mxu0 0.0
        %1910 = vmatpush1.msra.mxu0 %v1366
        %1911 = vmatprep.subr.mxu0 0.0
        %1912 = vmatpush1.msra.mxu0 %v1367
        %1913 = vmatprep.subr.mxu0 0.0
        %1914 = vmatpush1.msra.mxu0 %v1368
        %1915 = vmatprep.subr.mxu0 0.0
        %1916 = vmatpush1.msra.mxu0 %v1369
        %1917 = vmatprep.subr.mxu0 0.0
        %1918 = vmatpush1.msra.mxu0 %v1370
        %1919 = vmatprep.subr.mxu0 0.0
        %1920 = vmatpush1.msra.mxu0 %v1371
        %1921 = vmatprep.subr.mxu0 0.0
        %1922 = vmatpush1.msra.mxu0 %v1372
        %1923 = vmatprep.subr.mxu0 0.0
        %1924 = vmatpush1.msra.mxu0 %v1373
        %1925 = vmatprep.subr.mxu0 0.0
        %1926 = vmatpush1.msra.mxu0 %v1374
        %1927 = vmatprep.subr.mxu0 0.0
        %1928 = vmatpush1.msra.mxu0 %v1375
        %1929 = vmatprep.subr.mxu0 0.0
        %1930 = vmatpush1.msra.mxu0 %v1376
        %1931 = vmatprep.subr.mxu0 0.0
        %1932 = vmatpush1.msra.mxu0 %v1377
        %1933 = vmatprep.subr.mxu0 0.0
        %1934 = vmatpush1.msra.mxu0 %v1378
        %1935 = vmatprep.subr.mxu0 0.0
        %1936 = vmatpush1.msra.mxu0 %v1379
        %1937 = vmatprep.subr.mxu0 0.0
        %1938 = vmatpush1.msra.mxu0 %v1380
        %1939 = vmatprep.subr.mxu0 0.0
        %1940 = vmatpush1.msra.mxu0 %v1381
        %1941 = vmatprep.subr.mxu0 0.0
        %1942 = vmatpush1.msra.mxu0 %v1382
        %1943 = vmatprep.subr.mxu0 0.0
        %1944 = vmatpush1.msra.mxu0 %v1383
        %1945 = vmatprep.subr.mxu0 0.0
        %1946 = vmatpush1.msra.mxu0 %v1384
        %1947 = vmatprep.subr.mxu0 0.0
        %1948 = vmatpush1.msra.mxu0 %v1385
        %1949 = vmatprep.subr.mxu0 0.0
        %1950 = vmatpush1.msra.mxu0 %v1386
        %1951 = vmatprep.subr.mxu0 0.0
        %1952 = vmatpush1.msra.mxu0 %v1387
        %1953 = vmatprep.subr.mxu0 0.0
        %1954 = vmatpush1.msra.mxu0 %v1388
        %1955 = vmatprep.subr.mxu0 0.0
        %1956 = vmatpush1.msra.mxu0 %v1389
        %1957 = vmatprep.subr.mxu0 0.0
        %1958 = vmatpush1.msra.mxu0 %v1390
        %1959 = vmatprep.subr.mxu0 0.0
        %1960 = vmatpush1.msra.mxu0 %v1391
        %1961 = vmatprep.mubr.f32.mxu0 %v1124
        %1962 = vmatmul.mubr.f32.gmra.mrb[0].mxu0 %v863
        %v1963 = vpop.f32.mrb[0].mxu0
        %v1964 = vadd.f32 %v1739, %v1963
        %v1965 = vpop.f32.mrb[0].mxu0
        %1966 = vmatprep.mubr.f32.mxu0 %v1126
        %1967 = vmatmul.mubr.f32.gmra.mrb[0].mxu0 %v864
        %v1968 = vpop.f32.mrb[0].mxu0
        %v1969 = vadd.f32 %v1744, %v1968
        %v1970 = vpop.f32.mrb[0].mxu0
        %1971 = vmatprep.mubr.f32.mxu0 %v1129
        %1972 = vmatmul.mubr.f32.gmra.mrb[0].mxu0 %v867
        %v1973 = vpop.f32.mrb[0].mxu0
        %v1974 = vadd.f32 %v1749, %v1973
        %v1975 = vpop.f32.mrb[0].mxu0
        %1976 = vmatprep.mubr.f32.mxu0 %v1131
        %1977 = vmatmul.mubr.f32.gmra.mrb[0].mxu0 %v868
        %v1978 = vpop.f32.mrb[0].mxu0
        %v1979 = vadd.f32 %v1754, %v1978
        %v1980 = vpop.f32.mrb[0].mxu0
        %1981 = vmatprep.mubr.f32.mxu0 %v1134
        %1982 = vmatmul.mubr.f32.gmra.mrb[0].mxu0 %v871
        %v1983 = vpop.f32.mrb[0].mxu0
        %v1984 = vadd.f32 %v1759, %v1983
        %v1985 = vpop.f32.mrb[0].mxu0
        %1986 = vmatprep.mubr.f32.mxu0 %v1136
        %1987 = vmatmul.mubr.f32.gmra.mrb[0].mxu0 %v872
        %v1988 = vpop.f32.mrb[0].mxu0
        %v1989 = vadd.f32 %v1764, %v1988
        %v1990 = vpop.f32.mrb[0].mxu0
        %1991 = vmatprep.mubr.f32.mxu0 %v1139
        %1992 = vmatmul.mubr.f32.gmra.mrb[0].mxu0 %v875
        %v1993 = vpop.f32.mrb[0].mxu0
        %v1994 = vadd.f32 %v1769, %v1993
        %v1995 = vpop.f32.mrb[0].mxu0
        %1996 = vmatprep.mubr.f32.mxu0 %v1141
        %1997 = vmatmul.mubr.f32.gmra.mrb[0].mxu0 %v876
        %v1998 = vpop.f32.mrb[0].mxu0
        %v1999 = vadd.f32 %v1774, %v1998
        %v2000 = vpop.f32.mrb[0].mxu0
        %2001 = vmatprep.mubr.f32.mxu0 %v1144
        %2002 = vmatmul.mubr.f32.gmra.mrb[0].mxu0 %v879
        %v2003 = vpop.f32.mrb[0].mxu0
        %v2004 = vadd.f32 %v1779, %v2003
        %v2005 = vpop.f32.mrb[0].mxu0
        %2006 = vmatprep.mubr.f32.mxu0 %v1146
        %2007 = vmatmul.mubr.f32.gmra.mrb[0].mxu0 %v880
        %v2008 = vpop.f32.mrb[0].mxu0
        %v2009 = vadd.f32 %v1784, %v2008
        %v2010 = vpop.f32.mrb[0].mxu0
        %2011 = vmatprep.mubr.f32.mxu0 %v1149
        %2012 = vmatmul.mubr.f32.gmra.mrb[0].mxu0 %v883
        %v2013 = vpop.f32.mrb[0].mxu0
        %v2014 = vadd.f32 %v1789, %v2013
        %v2015 = vpop.f32.mrb[0].mxu0
        %2016 = vmatprep.mubr.f32.mxu0 %v1151
        %2017 = vmatmul.mubr.f32.gmra.mrb[0].mxu0 %v884
        %v2018 = vpop.f32.mrb[0].mxu0
        %v2019 = vadd.f32 %v1794, %v2018
        %v2020 = vpop.f32.mrb[0].mxu0
        %2021 = vmatprep.mubr.f32.mxu0 %v1154
        %2022 = vmatmul.mubr.f32.gmra.mrb[0].mxu0 %v887
        %v2023 = vpop.f32.mrb[0].mxu0
        %v2024 = vadd.f32 %v1799, %v2023
        %v2025 = vpop.f32.mrb[0].mxu0
        %2026 = vmatprep.mubr.f32.mxu0 %v1156
        %2027 = vmatmul.mubr.f32.gmra.mrb[0].mxu0 %v888
        %v2028 = vpop.f32.mrb[0].mxu0
        %v2029 = vadd.f32 %v1804, %v2028
        %v2030 = vpop.f32.mrb[0].mxu0
        %2031 = vmatprep.mubr.f32.mxu0 %v1159
        %2032 = vmatmul.mubr.f32.gmra.mrb[0].mxu0 %v891
        %v2033 = vpop.f32.mrb[0].mxu0
        %v2034 = vadd.f32 %v1809, %v2033
        %v2035 = vpop.f32.mrb[0].mxu0
        %2036 = vmatprep.mubr.f32.mxu0 %v1161
        %2037 = vmatmul.mubr.f32.gmra.mrb[0].mxu0 %v892
        %v2038 = vpop.f32.mrb[0].mxu0
        %v2039 = vadd.f32 %v1814, %v2038
        %v2040 = vpop.f32.mrb[0].mxu0
        %2041 = vmatprep.mubr.f32.mxu0 %v1164
        %2042 = vmatmul.mubr.f32.gmra.mrb[0].mxu0 %v895
        %v2043 = vpop.f32.mrb[0].mxu0
        %v2044 = vadd.f32 %v1819, %v2043
        %v2045 = vpop.f32.mrb[0].mxu0
        %2046 = vmatprep.mubr.f32.mxu0 %v1166
        %2047 = vmatmul.mubr.f32.gmra.mrb[0].mxu0 %v896
        %v2048 = vpop.f32.mrb[0].mxu0
        %v2049 = vadd.f32 %v1824, %v2048
        %v2050 = vpop.f32.mrb[0].mxu0
        %2051 = vmatprep.mubr.f32.mxu0 %v1169
        %2052 = vmatmul.mubr.f32.gmra.mrb[0].mxu0 %v899
        %v2053 = vpop.f32.mrb[0].mxu0
        %v2054 = vadd.f32 %v1829, %v2053
        %v2055 = vpop.f32.mrb[0].mxu0
        %2056 = vmatprep.mubr.f32.mxu0 %v1171
        %2057 = vmatmul.mubr.f32.gmra.mrb[0].mxu0 %v900
        %v2058 = vpop.f32.mrb[0].mxu0
        %v2059 = vadd.f32 %v1834, %v2058
        %v2060 = vpop.f32.mrb[0].mxu0
        %2061 = vmatprep.mubr.f32.mxu0 %v1174
        %2062 = vmatmul.mubr.f32.gmra.mrb[0].mxu0 %v903
        %v2063 = vpop.f32.mrb[0].mxu0
        %v2064 = vadd.f32 %v1839, %v2063
        %v2065 = vpop.f32.mrb[0].mxu0
        %2066 = vmatprep.mubr.f32.mxu0 %v1176
        %2067 = vmatmul.mubr.f32.gmra.mrb[0].mxu0 %v904
        %v2068 = vpop.f32.mrb[0].mxu0
        %v2069 = vadd.f32 %v1844, %v2068
        %v2070 = vpop.f32.mrb[0].mxu0
        %2071 = vmatprep.mubr.f32.mxu0 %v1179
        %2072 = vmatmul.mubr.f32.gmra.mrb[0].mxu0 %v907
        %v2073 = vpop.f32.mrb[0].mxu0
        %v2074 = vadd.f32 %v1849, %v2073
        %v2075 = vpop.f32.mrb[0].mxu0
        %2076 = vmatprep.mubr.f32.mxu0 %v1181
        %2077 = vmatmul.mubr.f32.gmra.mrb[0].mxu0 %v908
        %v2078 = vpop.f32.mrb[0].mxu0
        %v2079 = vadd.f32 %v1854, %v2078
        %v2080 = vpop.f32.mrb[0].mxu0
        %2081 = vmatprep.mubr.f32.mxu0 %v1184
        %2082 = vmatmul.mubr.f32.gmra.mrb[0].mxu0 %v911
        %v2083 = vpop.f32.mrb[0].mxu0
        %v2084 = vadd.f32 %v1859, %v2083
        %v2085 = vpop.f32.mrb[0].mxu0
        %2086 = vmatprep.mubr.f32.mxu0 %v1186
        %2087 = vmatmul.mubr.f32.gmra.mrb[0].mxu0 %v912
        %v2088 = vpop.f32.mrb[0].mxu0
        %v2089 = vadd.f32 %v1864, %v2088
        %v2090 = vpop.f32.mrb[0].mxu0
        %2091 = vmatprep.mubr.f32.mxu0 %v1189
        %2092 = vmatmul.mubr.f32.gmra.mrb[0].mxu0 %v915
        %v2093 = vpop.f32.mrb[0].mxu0
        %v2094 = vadd.f32 %v1869, %v2093
        %v2095 = vpop.f32.mrb[0].mxu0
        %2096 = vmatprep.mubr.f32.mxu0 %v1191
        %2097 = vmatmul.mubr.f32.gmra.mrb[0].mxu0 %v916
        %v2098 = vpop.f32.mrb[0].mxu0
        %v2099 = vadd.f32 %v1874, %v2098
        %v2100 = vpop.f32.mrb[0].mxu0
        %2101 = vmatprep.mubr.f32.mxu0 %v1248
        %2102 = vmatmul.mubr.f32.gmra.mrb[0].mxu0 %v919
        %v2103 = vpop.f32.mrb[0].mxu0
        %v2104 = vadd.f32 %v1879, %v2103
        %v2105 = vpop.f32.mrb[0].mxu0
        %2106 = vmatprep.mubr.f32.mxu0 %v1250
        %2107 = vmatmul.mubr.f32.gmra.mrb[0].mxu0 %v920
        %v2108 = vpop.f32.mrb[0].mxu0
        %v2109 = vadd.f32 %v1884, %v2108
        %v2110 = vpop.f32.mrb[0].mxu0
        %2111 = vmatprep.mubr.f32.mxu0 %v1253
        %2112 = vmatmul.mubr.f32.gmra.mrb[0].mxu0 %v923
        %v2113 = vpop.f32.mrb[0].mxu0
        %v2114 = vadd.f32 %v1889, %v2113
        %v2115 = vpop.f32.mrb[0].mxu0
        %2116 = vmatprep.mubr.f32.mxu0 %v1255
        %2117 = vmatmul.mubr.f32.gmra.mrb[0].mxu0 %v924
        %v2118 = vpop.f32.mrb[0].mxu0
        %v2119 = vadd.f32 %v1894, %v2118
        %v2120 = vpop.f32.mrb[0].mxu0
        %2121 = vdwg.mxu0
        %2122 = vmatprep.subr.mxu0 0.0
        %2123 = vmatpush1.msra.mxu0 %v1392
        %2124 = vmatprep.subr.mxu0 0.0
        %2125 = vmatpush1.msra.mxu0 %v1393
        %2126 = vmatprep.subr.mxu0 0.0
        %2127 = vmatpush1.msra.mxu0 %v1394
        %2128 = vmatprep.subr.mxu0 0.0
        %2129 = vmatpush1.msra.mxu0 %v1395
        %2130 = vmatprep.subr.mxu0 0.0
        %2131 = vmatpush1.msra.mxu0 %v1396
        %2132 = vmatprep.subr.mxu0 0.0
        %2133 = vmatpush1.msra.mxu0 %v1397
        %2134 = vmatprep.subr.mxu0 0.0
        %2135 = vmatpush1.msra.mxu0 %v1398
        %2136 = vmatprep.subr.mxu0 0.0
        %2137 = vmatpush1.msra.mxu0 %v1399
        %2138 = vmatprep.subr.mxu0 0.0
        %2139 = vmatpush1.msra.mxu0 %v1400
        %2140 = vmatprep.subr.mxu0 0.0
        %2141 = vmatpush1.msra.mxu0 %v1401
        %2142 = vmatprep.subr.mxu0 0.0
        %2143 = vmatpush1.msra.mxu0 %v1402
        %2144 = vmatprep.subr.mxu0 0.0
        %2145 = vmatpush1.msra.mxu0 %v1403
        %2146 = vmatprep.subr.mxu0 0.0
        %2147 = vmatpush1.msra.mxu0 %v1404
        %2148 = vmatprep.subr.mxu0 0.0
        %2149 = vmatpush1.msra.mxu0 %v1405
        %2150 = vmatprep.subr.mxu0 0.0
        %2151 = vmatpush1.msra.mxu0 %v1406
        %2152 = vmatprep.subr.mxu0 0.0
        %2153 = vmatpush1.msra.mxu0 %v1407
        %2154 = vmatprep.subr.mxu0 0.0
        %2155 = vmatpush1.msra.mxu0 %v1408
        %2156 = vmatprep.subr.mxu0 0.0
        %2157 = vmatpush1.msra.mxu0 %v1409
        %2158 = vmatprep.subr.mxu0 0.0
        %2159 = vmatpush1.msra.mxu0 %v1410
        %2160 = vmatprep.subr.mxu0 0.0
        %2161 = vmatpush1.msra.mxu0 %v1411
        %2162 = vmatprep.subr.mxu0 0.0
        %2163 = vmatpush1.msra.mxu0 %v1412
        %2164 = vmatprep.subr.mxu0 0.0
        %2165 = vmatpush1.msra.mxu0 %v1413
        %2166 = vmatprep.subr.mxu0 0.0
        %2167 = vmatpush1.msra.mxu0 %v1414
        %2168 = vmatprep.subr.mxu0 0.0
        %2169 = vmatpush1.msra.mxu0 %v1415
        %2170 = vmatprep.subr.mxu0 0.0
        %2171 = vmatpush1.msra.mxu0 %v1416
        %2172 = vmatprep.subr.mxu0 0.0
        %2173 = vmatpush1.msra.mxu0 %v1417
        %2174 = vmatprep.subr.mxu0 0.0
        %2175 = vmatpush1.msra.mxu0 %v1418
        %2176 = vmatprep.subr.mxu0 0.0
        %2177 = vmatpush1.msra.mxu0 %v1419
        %2178 = vmatprep.subr.mxu0 0.0
        %2179 = vmatpush1.msra.mxu0 %v1420
        %2180 = vmatprep.subr.mxu0 0.0
        %2181 = vmatpush1.msra.mxu0 %v1421
        %2182 = vmatprep.subr.mxu0 0.0
        %2183 = vmatpush1.msra.mxu0 %v1422
        %2184 = vmatprep.subr.mxu0 0.0
        %2185 = vmatpush1.msra.mxu0 %v1423
        %2186 = vmatprep.mubr.f32.mxu0 %v871
        %2187 = vmatmul.mubr.f32.gmra.mrb[0].mxu0 %v1005
        %v2188 = vpop.f32.mrb[0].mxu0
        %v2189 = vadd.f32 %v1964, %v2188
        %v2190 = vpop.f32.mrb[0].mxu0
        %2191 = vmatprep.mubr.f32.mxu0 %v872
        %2192 = vmatmul.mubr.f32.gmra.mrb[0].mxu0 %v1007
        %v2193 = vpop.f32.mrb[0].mxu0
        %v2194 = vadd.f32 %v1969, %v2193
        %v2195 = vpop.f32.mrb[0].mxu0
        %2196 = vmatprep.mubr.f32.mxu0 %v875
        %2197 = vmatmul.mubr.f32.gmra.mrb[0].mxu0 %v1010
        %v2198 = vpop.f32.mrb[0].mxu0
        %v2199 = vadd.f32 %v1974, %v2198
        %v2200 = vpop.f32.mrb[0].mxu0
        %2201 = vmatprep.mubr.f32.mxu0 %v876
        %2202 = vmatmul.mubr.f32.gmra.mrb[0].mxu0 %v1012
        %v2203 = vpop.f32.mrb[0].mxu0
        %v2204 = vadd.f32 %v1979, %v2203
        %v2205 = vpop.f32.mrb[0].mxu0
        %2206 = vmatprep.mubr.f32.mxu0 %v879
        %2207 = vmatmul.mubr.f32.gmra.mrb[0].mxu0 %v1015
        %v2208 = vpop.f32.mrb[0].mxu0
        %v2209 = vadd.f32 %v1984, %v2208
        %v2210 = vpop.f32.mrb[0].mxu0
        %2211 = vmatprep.mubr.f32.mxu0 %v880
        %2212 = vmatmul.mubr.f32.gmra.mrb[0].mxu0 %v1017
        %v2213 = vpop.f32.mrb[0].mxu0
        %v2214 = vadd.f32 %v1989, %v2213
        %v2215 = vpop.f32.mrb[0].mxu0
        %2216 = vmatprep.mubr.f32.mxu0 %v883
        %2217 = vmatmul.mubr.f32.gmra.mrb[0].mxu0 %v1020
        %v2218 = vpop.f32.mrb[0].mxu0
        %v2219 = vadd.f32 %v1994, %v2218
        %v2220 = vpop.f32.mrb[0].mxu0
        %2221 = vmatprep.mubr.f32.mxu0 %v884
        %2222 = vmatmul.mubr.f32.gmra.mrb[0].mxu0 %v1022
        %v2223 = vpop.f32.mrb[0].mxu0
        %v2224 = vadd.f32 %v1999, %v2223
        %v2225 = vpop.f32.mrb[0].mxu0
        %2226 = vmatprep.mubr.f32.mxu0 %v887
        %2227 = vmatmul.mubr.f32.gmra.mrb[0].mxu0 %v1025
        %v2228 = vpop.f32.mrb[0].mxu0
        %v2229 = vadd.f32 %v2004, %v2228
        %v2230 = vpop.f32.mrb[0].mxu0
        %2231 = vmatprep.mubr.f32.mxu0 %v888
        %2232 = vmatmul.mubr.f32.gmra.mrb[0].mxu0 %v1027
        %v2233 = vpop.f32.mrb[0].mxu0
        %v2234 = vadd.f32 %v2009, %v2233
        %v2235 = vpop.f32.mrb[0].mxu0
        %2236 = vmatprep.mubr.f32.mxu0 %v891
        %2237 = vmatmul.mubr.f32.gmra.mrb[0].mxu0 %v1030
        %v2238 = vpop.f32.mrb[0].mxu0
        %v2239 = vadd.f32 %v2014, %v2238
        %v2240 = vpop.f32.mrb[0].mxu0
        %2241 = vmatprep.mubr.f32.mxu0 %v892
        %2242 = vmatmul.mubr.f32.gmra.mrb[0].mxu0 %v1032
        %v2243 = vpop.f32.mrb[0].mxu0
        %v2244 = vadd.f32 %v2019, %v2243
        %v2245 = vpop.f32.mrb[0].mxu0
        %2246 = vmatprep.mubr.f32.mxu0 %v895
        %2247 = vmatmul.mubr.f32.gmra.mrb[0].mxu0 %v1035
        %v2248 = vpop.f32.mrb[0].mxu0
        %v2249 = vadd.f32 %v2024, %v2248
        %v2250 = vpop.f32.mrb[0].mxu0
        %2251 = vmatprep.mubr.f32.mxu0 %v896
        %2252 = vmatmul.mubr.f32.gmra.mrb[0].mxu0 %v1037
        %v2253 = vpop.f32.mrb[0].mxu0
        %v2254 = vadd.f32 %v2029, %v2253
        %v2255 = vpop.f32.mrb[0].mxu0
        %2256 = vmatprep.mubr.f32.mxu0 %v899
        %2257 = vmatmul.mubr.f32.gmra.mrb[0].mxu0 %v1040
        %v2258 = vpop.f32.mrb[0].mxu0
        %v2259 = vadd.f32 %v2034, %v2258
        %v2260 = vpop.f32.mrb[0].mxu0
        %2261 = vmatprep.mubr.f32.mxu0 %v900
        %2262 = vmatmul.mubr.f32.gmra.mrb[0].mxu0 %v1042
        %v2263 = vpop.f32.mrb[0].mxu0
        %v2264 = vadd.f32 %v2039, %v2263
        %v2265 = vpop.f32.mrb[0].mxu0
        %2266 = vmatprep.mubr.f32.mxu0 %v903
        %2267 = vmatmul.mubr.f32.gmra.mrb[0].mxu0 %v1045
        %v2268 = vpop.f32.mrb[0].mxu0
        %v2269 = vadd.f32 %v2044, %v2268
        %v2270 = vpop.f32.mrb[0].mxu0
        %2271 = vmatprep.mubr.f32.mxu0 %v904
        %2272 = vmatmul.mubr.f32.gmra.mrb[0].mxu0 %v1047
        %v2273 = vpop.f32.mrb[0].mxu0
        %v2274 = vadd.f32 %v2049, %v2273
        %v2275 = vpop.f32.mrb[0].mxu0
        %2276 = vmatprep.mubr.f32.mxu0 %v907
        %2277 = vmatmul.mubr.f32.gmra.mrb[0].mxu0 %v1050
        %v2278 = vpop.f32.mrb[0].mxu0
        %v2279 = vadd.f32 %v2054, %v2278
        %v2280 = vpop.f32.mrb[0].mxu0
        %2281 = vmatprep.mubr.f32.mxu0 %v908
        %2282 = vmatmul.mubr.f32.gmra.mrb[0].mxu0 %v1052
        %v2283 = vpop.f32.mrb[0].mxu0
        %v2284 = vadd.f32 %v2059, %v2283
        %v2285 = vpop.f32.mrb[0].mxu0
        %2286 = vmatprep.mubr.f32.mxu0 %v911
        %2287 = vmatmul.mubr.f32.gmra.mrb[0].mxu0 %v1055
        %v2288 = vpop.f32.mrb[0].mxu0
        %v2289 = vadd.f32 %v2064, %v2288
        %v2290 = vpop.f32.mrb[0].mxu0
        %2291 = vmatprep.mubr.f32.mxu0 %v912
        %2292 = vmatmul.mubr.f32.gmra.mrb[0].mxu0 %v1057
        %v2293 = vpop.f32.mrb[0].mxu0
        %v2294 = vadd.f32 %v2069, %v2293
        %v2295 = vpop.f32.mrb[0].mxu0
        %2296 = vmatprep.mubr.f32.mxu0 %v915
        %2297 = vmatmul.mubr.f32.gmra.mrb[0].mxu0 %v1060
        %v2298 = vpop.f32.mrb[0].mxu0
        %v2299 = vadd.f32 %v2074, %v2298
        %v2300 = vpop.f32.mrb[0].mxu0
        %2301 = vmatprep.mubr.f32.mxu0 %v916
        %2302 = vmatmul.mubr.f32.gmra.mrb[0].mxu0 %v1062
        %v2303 = vpop.f32.mrb[0].mxu0
        %v2304 = vadd.f32 %v2079, %v2303
        %v2305 = vpop.f32.mrb[0].mxu0
        %2306 = vmatprep.mubr.f32.mxu0 %v919
        %2307 = vmatmul.mubr.f32.gmra.mrb[0].mxu0 %v1232
        %v2308 = vpop.f32.mrb[0].mxu0
        %v2309 = vadd.f32 %v2084, %v2308
        %v2310 = vpop.f32.mrb[0].mxu0
        %2311 = vmatprep.mubr.f32.mxu0 %v920
        %2312 = vmatmul.mubr.f32.gmra.mrb[0].mxu0 %v1234
        %v2313 = vpop.f32.mrb[0].mxu0
        %v2314 = vadd.f32 %v2089, %v2313
        %v2315 = vpop.f32.mrb[0].mxu0
        %2316 = vmatprep.mubr.f32.mxu0 %v923
        %2317 = vmatmul.mubr.f32.gmra.mrb[0].mxu0 %v1237
        %v2318 = vpop.f32.mrb[0].mxu0
        %v2319 = vadd.f32 %v2094, %v2318
        %v2320 = vpop.f32.mrb[0].mxu0
        %2321 = vmatprep.mubr.f32.mxu0 %v924
        %2322 = vmatmul.mubr.f32.gmra.mrb[0].mxu0 %v1239
        %v2323 = vpop.f32.mrb[0].mxu0
        %v2324 = vadd.f32 %v2099, %v2323
        %v2325 = vpop.f32.mrb[0].mxu0
        %2326 = vmatprep.mubr.f32.mxu0 %v927
        %2327 = vmatmul.mubr.f32.gmra.mrb[0].mxu0 %v1268
        %v2328 = vpop.f32.mrb[0].mxu0
        %v2329 = vadd.f32 %v2104, %v2328
        %v2330 = vpop.f32.mrb[0].mxu0
        %2331 = vmatprep.mubr.f32.mxu0 %v928
        %2332 = vmatmul.mubr.f32.gmra.mrb[0].mxu0 %v1270
        %v2333 = vpop.f32.mrb[0].mxu0
        %v2334 = vadd.f32 %v2109, %v2333
        %v2335 = vpop.f32.mrb[0].mxu0
        %2336 = vmatprep.mubr.f32.mxu0 %v931
        %2337 = vmatmul.mubr.f32.gmra.mrb[0].mxu0 %v1273
        %v2338 = vpop.f32.mrb[0].mxu0
        %v2339 = vadd.f32 %v2114, %v2338
        %v2340 = vpop.f32.mrb[0].mxu0
        %2341 = vmatprep.mubr.f32.mxu0 %v932
        %2342 = vmatmul.mubr.f32.gmra.mrb[0].mxu0 %v1275
        %v2343 = vpop.f32.mrb[0].mxu0
        %v2344 = vadd.f32 %v2119, %v2343
        %v2345 = vpop.f32.mrb[0].mxu0
        %2346 = vdwg.mxu0
        %2347 = vmatprep.subr.mxu0 0.0
        %2348 = vmatpush1.msra.mxu0 %v1424
        %2349 = vmatprep.subr.mxu0 0.0
        %2350 = vmatpush1.msra.mxu0 %v1425
        %2351 = vmatprep.subr.mxu0 0.0
        %2352 = vmatpush1.msra.mxu0 %v1426
        %2353 = vmatprep.subr.mxu0 0.0
        %2354 = vmatpush1.msra.mxu0 %v1427
        %2355 = vmatprep.subr.mxu0 0.0
        %2356 = vmatpush1.msra.mxu0 %v1428
        %2357 = vmatprep.subr.mxu0 0.0
        %2358 = vmatpush1.msra.mxu0 %v1429
        %2359 = vmatprep.subr.mxu0 0.0
        %2360 = vmatpush1.msra.mxu0 %v1430
        %2361 = vmatprep.subr.mxu0 0.0
        %2362 = vmatpush1.msra.mxu0 %v1431
        %2363 = vmatprep.subr.mxu0 0.0
        %2364 = vmatpush1.msra.mxu0 %v1432
        %2365 = vmatprep.subr.mxu0 0.0
        %2366 = vmatpush1.msra.mxu0 %v1433
        %2367 = vmatprep.subr.mxu0 0.0
        %2368 = vmatpush1.msra.mxu0 %v1434
        %2369 = vmatprep.subr.mxu0 0.0
        %2370 = vmatpush1.msra.mxu0 %v1435
        %2371 = vmatprep.subr.mxu0 0.0
        %2372 = vmatpush1.msra.mxu0 %v1436
        %2373 = vmatprep.subr.mxu0 0.0
        %2374 = vmatpush1.msra.mxu0 %v1437
        %2375 = vmatprep.subr.mxu0 0.0
        %2376 = vmatpush1.msra.mxu0 %v1438
        %2377 = vmatprep.subr.mxu0 0.0
        %2378 = vmatpush1.msra.mxu0 %v1439
        %2379 = vmatprep.subr.mxu0 0.0
        %2380 = vmatpush1.msra.mxu0 0.0
        %2381 = vmatprep.subr.mxu0 0.0
        %2382 = vmatpush1.msra.mxu0 0.0
        %2383 = vmatprep.subr.mxu0 0.0
        %2384 = vmatpush1.msra.mxu0 0.0
        %2385 = vmatprep.subr.mxu0 0.0
        %2386 = vmatpush1.msra.mxu0 0.0
        %2387 = vmatprep.subr.mxu0 0.0
        %2388 = vmatpush1.msra.mxu0 0.0
        %2389 = vmatprep.subr.mxu0 0.0
        %2390 = vmatpush1.msra.mxu0 0.0
        %2391 = vmatprep.subr.mxu0 0.0
        %2392 = vmatpush1.msra.mxu0 0.0
        %2393 = vmatprep.subr.mxu0 0.0
        %2394 = vmatpush1.msra.mxu0 0.0
        %2395 = vmatprep.subr.mxu0 0.0
        %2396 = vmatpush1.msra.mxu0 0.0
        %2397 = vmatprep.subr.mxu0 0.0
        %2398 = vmatpush1.msra.mxu0 0.0
        %2399 = vmatprep.subr.mxu0 0.0
        %2400 = vmatpush1.msra.mxu0 0.0
        %2401 = vmatprep.subr.mxu0 0.0
        %2402 = vmatpush1.msra.mxu0 0.0
        %2403 = vmatprep.subr.mxu0 0.0
        %2404 = vmatpush1.msra.mxu0 0.0
        %2405 = vmatprep.subr.mxu0 0.0
        %2406 = vmatpush1.msra.mxu0 0.0
        %2407 = vmatprep.subr.mxu0 0.0
        %2408 = vmatpush1.msra.mxu0 0.0
        %2409 = vmatprep.subr.mxu0 0.0
        %2410 = vmatpush1.msra.mxu0 0.0
        %2411 = vmatprep.mubr.f32.mxu0 0.0
        %2412 = vmatmul.mubr.f32.gmra.mrb[0].mxu0 %v1134
        %v2413 = vpop.f32.mrb[0].mxu0
        %v2414 = vadd.f32 %v2189, %v2413
        %v2415 = vpop.f32.mrb[0].mxu0
        %2416 = vmatprep.mubr.f32.mxu0 0.0
        %2417 = vmatmul.mubr.f32.gmra.mrb[0].mxu0 %v1136
        %v2418 = vpop.f32.mrb[0].mxu0
        %v2419 = vadd.f32 %v2194, %v2418
        %v2420 = vpop.f32.mrb[0].mxu0
        %2421 = vmatprep.mubr.f32.mxu0 0.0
        %2422 = vmatmul.mubr.f32.gmra.mrb[0].mxu0 %v1139
        %v2423 = vpop.f32.mrb[0].mxu0
        %v2424 = vadd.f32 %v2199, %v2423
        %v2425 = vpop.f32.mrb[0].mxu0
        %2426 = vmatprep.mubr.f32.mxu0 0.0
        %2427 = vmatmul.mubr.f32.gmra.mrb[0].mxu0 %v1141
        %v2428 = vpop.f32.mrb[0].mxu0
        %v2429 = vadd.f32 %v2204, %v2428
        %v2430 = vpop.f32.mrb[0].mxu0
        %2431 = vmatprep.mubr.f32.mxu0 0.0
        %2432 = vmatmul.mubr.f32.gmra.mrb[0].mxu0 %v1144
        %v2433 = vpop.f32.mrb[0].mxu0
        %v2434 = vadd.f32 %v2209, %v2433
        %v2435 = vpop.f32.mrb[0].mxu0
        %2436 = vmatprep.mubr.f32.mxu0 0.0
        %2437 = vmatmul.mubr.f32.gmra.mrb[0].mxu0 %v1146
        %v2438 = vpop.f32.mrb[0].mxu0
        %v2439 = vadd.f32 %v2214, %v2438
        %v2440 = vpop.f32.mrb[0].mxu0
        %2441 = vmatprep.mubr.f32.mxu0 0.0
        %2442 = vmatmul.mubr.f32.gmra.mrb[0].mxu0 %v1149
        %v2443 = vpop.f32.mrb[0].mxu0
        %v2444 = vadd.f32 %v2219, %v2443
        %v2445 = vpop.f32.mrb[0].mxu0
        %2446 = vmatprep.mubr.f32.mxu0 0.0
        %2447 = vmatmul.mubr.f32.gmra.mrb[0].mxu0 %v1151
        %v2448 = vpop.f32.mrb[0].mxu0
        %v2449 = vadd.f32 %v2224, %v2448
        %v2450 = vpop.f32.mrb[0].mxu0
        %2451 = vmatprep.mubr.f32.mxu0 0.0
        %2452 = vmatmul.mubr.f32.gmra.mrb[0].mxu0 %v1154
        %v2453 = vpop.f32.mrb[0].mxu0
        %v2454 = vadd.f32 %v2229, %v2453
        %v2455 = vpop.f32.mrb[0].mxu0
        %2456 = vmatprep.mubr.f32.mxu0 0.0
        %2457 = vmatmul.mubr.f32.gmra.mrb[0].mxu0 %v1156
        %v2458 = vpop.f32.mrb[0].mxu0
        %v2459 = vadd.f32 %v2234, %v2458
        %v2460 = vpop.f32.mrb[0].mxu0
        %2461 = vmatprep.mubr.f32.mxu0 0.0
        %2462 = vmatmul.mubr.f32.gmra.mrb[0].mxu0 %v1159
        %v2463 = vpop.f32.mrb[0].mxu0
        %v2464 = vadd.f32 %v2239, %v2463
        %v2465 = vpop.f32.mrb[0].mxu0
        %2466 = vmatprep.mubr.f32.mxu0 0.0
        %2467 = vmatmul.mubr.f32.gmra.mrb[0].mxu0 %v1161
        %v2468 = vpop.f32.mrb[0].mxu0
        %v2469 = vadd.f32 %v2244, %v2468
        %v2470 = vpop.f32.mrb[0].mxu0
        %2471 = vmatprep.mubr.f32.mxu0 0.0
        %2472 = vmatmul.mubr.f32.gmra.mrb[0].mxu0 %v1164
        %v2473 = vpop.f32.mrb[0].mxu0
        %v2474 = vadd.f32 %v2249, %v2473
        %v2475 = vpop.f32.mrb[0].mxu0
        %2476 = vmatprep.mubr.f32.mxu0 0.0
        %2477 = vmatmul.mubr.f32.gmra.mrb[0].mxu0 %v1166
        %v2478 = vpop.f32.mrb[0].mxu0
        %v2479 = vadd.f32 %v2254, %v2478
        %v2480 = vpop.f32.mrb[0].mxu0
        %2481 = vmatprep.mubr.f32.mxu0 0.0
        %2482 = vmatmul.mubr.f32.gmra.mrb[0].mxu0 %v1169
        %v2483 = vpop.f32.mrb[0].mxu0
        %v2484 = vadd.f32 %v2259, %v2483
        %v2485 = vpop.f32.mrb[0].mxu0
        %2486 = vmatprep.mubr.f32.mxu0 0.0
        %2487 = vmatmul.mubr.f32.gmra.mrb[0].mxu0 %v1171
        %v2488 = vpop.f32.mrb[0].mxu0
        %v2489 = vadd.f32 %v2264, %v2488
        %v2490 = vpop.f32.mrb[0].mxu0
        %2491 = vmatprep.mubr.f32.mxu0 0.0
        %2492 = vmatmul.mubr.f32.gmra.mrb[0].mxu0 %v1174
        %v2493 = vpop.f32.mrb[0].mxu0
        %v2494 = vadd.f32 %v2269, %v2493
        %v2495 = vpop.f32.mrb[0].mxu0
        %2496 = vmatprep.mubr.f32.mxu0 0.0
        %2497 = vmatmul.mubr.f32.gmra.mrb[0].mxu0 %v1176
        %v2498 = vpop.f32.mrb[0].mxu0
        %v2499 = vadd.f32 %v2274, %v2498
        %v2500 = vpop.f32.mrb[0].mxu0
        %2501 = vmatprep.mubr.f32.mxu0 0.0
        %2502 = vmatmul.mubr.f32.gmra.mrb[0].mxu0 %v1179
        %v2503 = vpop.f32.mrb[0].mxu0
        %v2504 = vadd.f32 %v2279, %v2503
        %v2505 = vpop.f32.mrb[0].mxu0
        %2506 = vmatprep.mubr.f32.mxu0 0.0
        %2507 = vmatmul.mubr.f32.gmra.mrb[0].mxu0 %v1181
        %v2508 = vpop.f32.mrb[0].mxu0
        %v2509 = vadd.f32 %v2284, %v2508
        %v2510 = vpop.f32.mrb[0].mxu0
        %2511 = vmatprep.mubr.f32.mxu0 0.0
        %2512 = vmatmul.mubr.f32.gmra.mrb[0].mxu0 %v1184
        %v2513 = vpop.f32.mrb[0].mxu0
        %v2514 = vadd.f32 %v2289, %v2513
        %v2515 = vpop.f32.mrb[0].mxu0
        %2516 = vmatprep.mubr.f32.mxu0 0.0
        %2517 = vmatmul.mubr.f32.gmra.mrb[0].mxu0 %v1186
        %v2518 = vpop.f32.mrb[0].mxu0
        %v2519 = vadd.f32 %v2294, %v2518
        %v2520 = vpop.f32.mrb[0].mxu0
        %2521 = vmatprep.mubr.f32.mxu0 0.0
        %2522 = vmatmul.mubr.f32.gmra.mrb[0].mxu0 %v1189
        %v2523 = vpop.f32.mrb[0].mxu0
        %v2524 = vadd.f32 %v2299, %v2523
        %v2525 = vpop.f32.mrb[0].mxu0
        %2526 = vmatprep.mubr.f32.mxu0 0.0
        %2527 = vmatmul.mubr.f32.gmra.mrb[0].mxu0 %v1191
        %v2528 = vpop.f32.mrb[0].mxu0
        %v2529 = vadd.f32 %v2304, %v2528
        %v2530 = vpop.f32.mrb[0].mxu0
        %2531 = vmatprep.mubr.f32.mxu0 0.0
        %2532 = vmatmul.mubr.f32.gmra.mrb[0].mxu0 %v1248
        %v2533 = vpop.f32.mrb[0].mxu0
        %v2534 = vadd.f32 %v2309, %v2533
        %v2535 = vpop.f32.mrb[0].mxu0
        %2536 = vmatprep.mubr.f32.mxu0 0.0
        %2537 = vmatmul.mubr.f32.gmra.mrb[0].mxu0 %v1250
        %v2538 = vpop.f32.mrb[0].mxu0
        %v2539 = vadd.f32 %v2314, %v2538
        %v2540 = vpop.f32.mrb[0].mxu0
        %2541 = vmatprep.mubr.f32.mxu0 0.0
        %2542 = vmatmul.mubr.f32.gmra.mrb[0].mxu0 %v1253
        %v2543 = vpop.f32.mrb[0].mxu0
        %v2544 = vadd.f32 %v2319, %v2543
        %v2545 = vpop.f32.mrb[0].mxu0
        %2546 = vmatprep.mubr.f32.mxu0 0.0
        %2547 = vmatmul.mubr.f32.gmra.mrb[0].mxu0 %v1255
        %v2548 = vpop.f32.mrb[0].mxu0
        %v2549 = vadd.f32 %v2324, %v2548
        %v2550 = vpop.f32.mrb[0].mxu0
        %2551 = vmatprep.mubr.f32.mxu0 0.0
        %2552 = vmatmul.mubr.f32.gmra.mrb[0].mxu0 %v1284
        %v2553 = vpop.f32.mrb[0].mxu0
        %v2554 = vadd.f32 %v2329, %v2553
        %v2555 = vpop.f32.mrb[0].mxu0
        %2556 = vmatprep.mubr.f32.mxu0 0.0
        %2557 = vmatmul.mubr.f32.gmra.mrb[0].mxu0 %v1286
        %v2558 = vpop.f32.mrb[0].mxu0
        %v2559 = vadd.f32 %v2334, %v2558
        %v2560 = vpop.f32.mrb[0].mxu0
        %2561 = vmatprep.mubr.f32.mxu0 0.0
        %2562 = vmatmul.mubr.f32.gmra.mrb[0].mxu0 %v1289
        %v2563 = vpop.f32.mrb[0].mxu0
        %v2564 = vadd.f32 %v2339, %v2563
        %v2565 = vpop.f32.mrb[0].mxu0
        %2566 = vmatprep.mubr.f32.mxu0 0.0
        %2567 = vmatmul.mubr.f32.gmra.mrb[0].mxu0 %v1291
        %v2568 = vpop.f32.mrb[0].mxu0
        %v2569 = vadd.f32 %v2344, %v2568
        %v2570 = vpop.f32.mrb[0].mxu0
        %2571 = vdwg.mxu0
        %v2572 = vmax.f32 %v2414, 0.0
        %v2573 = vmax.f32 %v2419, 0.0
        %v2574 = vmax.f32 %v2424, 0.0
        %v2575 = vmax.f32 %v2429, 0.0
        %v2576 = vmax.f32 %v2434, 0.0
        %v2577 = vmax.f32 %v2439, 0.0
        %v2578 = vmax.f32 %v2444, 0.0
        %v2579 = vmax.f32 %v2449, 0.0
        %v2580 = vmax.f32 %v2454, 0.0
        %v2581 = vmax.f32 %v2459, 0.0
        %v2582 = vmax.f32 %v2464, 0.0
        %v2583 = vmax.f32 %v2469, 0.0
        %v2584 = vmax.f32 %v2474, 0.0
        %v2585 = vmax.f32 %v2479, 0.0
        %v2586 = vmax.f32 %v2484, 0.0
        %v2587 = vmax.f32 %v2489, 0.0
        %v2588 = vmax.f32 %v2494, 0.0
        %v2589 = vmax.f32 %v2499, 0.0
        %v2590 = vmax.f32 %v2504, 0.0
        %v2591 = vmax.f32 %v2509, 0.0
        %v2592 = vmax.f32 %v2514, 0.0
        %v2593 = vmax.f32 %v2519, 0.0
        %v2594 = vmax.f32 %v2524, 0.0
        %v2595 = vmax.f32 %v2529, 0.0
        %v2596 = vmax.f32 %v2534, 0.0
        %v2597 = vmax.f32 %v2539, 0.0
        %v2598 = vmax.f32 %v2544, 0.0
        %v2599 = vmax.f32 %v2549, 0.0
        %v2600 = vmax.f32 %v2554, 0.0
        %v2601 = vmax.f32 %v2559, 0.0
        %v2602 = vmax.f32 %v2564, 0.0
        %v2603 = vmax.f32 %v2569, 0.0
        %v2604 = vld [vmem:[#allocation11] sm:$0xff]
        %v2605 = vld [vmem:[#allocation11 + $0x8] sm:$0xff]
        %v2606 = vld [vmem:[#allocation11 + $0x10] sm:$0xff]
        %v2607 = vld [vmem:[#allocation11 + $0x18] sm:$0xff]
        %v2608 = vld [vmem:[#allocation11 + $0x20] sm:$0xff]
        %v2609 = vld [vmem:[#allocation11 + $0x28] sm:$0xff]
        %v2610 = vld [vmem:[#allocation11 + $0x30] sm:$0xff]
        %v2611 = vld [vmem:[#allocation11 + $0x38] sm:$0xff]
        %v2612 = vld [vmem:[#allocation11 + $0x40] sm:$0xff]
        %v2613 = vld [vmem:[#allocation11 + $0x48] sm:$0xff]
        %v2614 = vld [vmem:[#allocation11 + $0x50] sm:$0xff]
        %v2615 = vld [vmem:[#allocation11 + $0x58] sm:$0xff]
        %v2616 = vld [vmem:[#allocation11 + $0x60] sm:$0xff]
        %v2617 = vld [vmem:[#allocation11 + $0x68] sm:$0xff]
        %v2618 = vld [vmem:[#allocation11 + $0x70] sm:$0xff]
        %v2619 = vld [vmem:[#allocation11 + $0x78] sm:$0xff]
        %v2620 = vld [vmem:[%s8] sm:$0x1]
        %v2622 = vlaneseq
        %v2623 = vshrl.u32 %v2622, 7
        %v2624 = vsub.s32 0, %v2623
        %v2625 = vrot.slane %v2620, %v2624
        %2627 = vmatprep.subr.mxu0 0.0
        %2628 = vmatpush1.msra.mxu0 %v2604
        %2629 = vmatprep.subr.mxu0 0.0
        %2630 = vmatpush1.msra.mxu0 %v2605
        %2631 = vmatprep.subr.mxu0 0.0
        %2632 = vmatpush1.msra.mxu0 %v2606
        %2633 = vmatprep.subr.mxu0 0.0
        %2634 = vmatpush1.msra.mxu0 %v2607
        %2635 = vmatprep.subr.mxu0 0.0
        %2636 = vmatpush1.msra.mxu0 %v2608
        %2637 = vmatprep.subr.mxu0 0.0
        %2638 = vmatpush1.msra.mxu0 %v2609
        %2639 = vmatprep.subr.mxu0 0.0
        %2640 = vmatpush1.msra.mxu0 %v2610
        %2641 = vmatprep.subr.mxu0 0.0
        %2642 = vmatpush1.msra.mxu0 %v2611
        %2643 = vmatprep.subr.mxu0 0.0
        %2644 = vmatpush1.msra.mxu0 %v2612
        %2645 = vmatprep.subr.mxu0 0.0
        %2646 = vmatpush1.msra.mxu0 %v2613
        %2647 = vmatprep.subr.mxu0 0.0
        %2648 = vmatpush1.msra.mxu0 %v2614
        %2649 = vmatprep.subr.mxu0 0.0
        %2650 = vmatpush1.msra.mxu0 %v2615
        %2651 = vmatprep.subr.mxu0 0.0
        %2652 = vmatpush1.msra.mxu0 %v2616
        %2653 = vmatprep.subr.mxu0 0.0
        %2654 = vmatpush1.msra.mxu0 %v2617
        %2655 = vmatprep.subr.mxu0 0.0
        %2656 = vmatpush1.msra.mxu0 %v2618
        %2657 = vmatprep.subr.mxu0 0.0
        %2658 = vmatpush1.msra.mxu0 %v2619
        %2659 = vmatprep.subr.mxu0 0.0
        %2660 = vmatpush1.msra.mxu0 0.0
        %2661 = vmatprep.subr.mxu0 0.0
        %2662 = vmatpush1.msra.mxu0 0.0
        %2663 = vmatprep.subr.mxu0 0.0
        %2664 = vmatpush1.msra.mxu0 0.0
        %2665 = vmatprep.subr.mxu0 0.0
        %2666 = vmatpush1.msra.mxu0 0.0
        %2667 = vmatprep.subr.mxu0 0.0
        %2668 = vmatpush1.msra.mxu0 0.0
        %2669 = vmatprep.subr.mxu0 0.0
        %2670 = vmatpush1.msra.mxu0 0.0
        %2671 = vmatprep.subr.mxu0 0.0
        %2672 = vmatpush1.msra.mxu0 0.0
        %2673 = vmatprep.subr.mxu0 0.0
        %2674 = vmatpush1.msra.mxu0 0.0
        %2675 = vmatprep.subr.mxu0 0.0
        %2676 = vmatpush1.msra.mxu0 0.0
        %2677 = vmatprep.subr.mxu0 0.0
        %2678 = vmatpush1.msra.mxu0 0.0
        %2679 = vmatprep.subr.mxu0 0.0
        %2680 = vmatpush1.msra.mxu0 0.0
        %2681 = vmatprep.subr.mxu0 0.0
        %2682 = vmatpush1.msra.mxu0 0.0
        %2683 = vmatprep.subr.mxu0 0.0
        %2684 = vmatpush1.msra.mxu0 0.0
        %2685 = vmatprep.subr.mxu0 0.0
        %2686 = vmatpush1.msra.mxu0 0.0
        %2687 = vmatprep.subr.mxu0 0.0
        %2688 = vmatpush1.msra.mxu0 0.0
        %2689 = vmatprep.subr.mxu0 0.0
        %2690 = vmatpush1.msra.mxu0 0.0
        %2691 = vmatprep.mubr.f32.mxu0 0.0
        %2692 = vmatmul.mubr.f32.gmra.mrb[0].mxu0 %v2572
        %v2693 = vpop.f32.mrb[0].mxu0
        %v2694 = vadd.f32 %v2625, %v2693
        %v2695 = vpop.f32.mrb[0].mxu0
        %2696 = vmatprep.mubr.f32.mxu0 0.0
        %2697 = vmatmul.mubr.f32.gmra.mrb[0].mxu0 %v2573
        %v2698 = vpop.f32.mrb[0].mxu0
        %v2699 = vadd.f32 %v2625, %v2698
        %v2700 = vpop.f32.mrb[0].mxu0
        %2701 = vmatprep.mubr.f32.mxu0 0.0
        %2702 = vmatmul.mubr.f32.gmra.mrb[0].mxu0 %v2574
        %v2703 = vpop.f32.mrb[0].mxu0
        %v2704 = vadd.f32 %v2625, %v2703
        %v2705 = vpop.f32.mrb[0].mxu0
        %2706 = vmatprep.mubr.f32.mxu0 0.0
        %2707 = vmatmul.mubr.f32.gmra.mrb[0].mxu0 %v2575
        %v2708 = vpop.f32.mrb[0].mxu0
        %v2709 = vadd.f32 %v2625, %v2708
        %v2710 = vpop.f32.mrb[0].mxu0
        %2711 = vmatprep.mubr.f32.mxu0 0.0
        %2712 = vmatmul.mubr.f32.gmra.mrb[0].mxu0 %v2576
        %v2713 = vpop.f32.mrb[0].mxu0
        %v2714 = vadd.f32 %v2625, %v2713
        %v2715 = vpop.f32.mrb[0].mxu0
        %2716 = vmatprep.mubr.f32.mxu0 0.0
        %2717 = vmatmul.mubr.f32.gmra.mrb[0].mxu0 %v2577
        %v2718 = vpop.f32.mrb[0].mxu0
        %v2719 = vadd.f32 %v2625, %v2718
        %v2720 = vpop.f32.mrb[0].mxu0
        %2721 = vmatprep.mubr.f32.mxu0 0.0
        %2722 = vmatmul.mubr.f32.gmra.mrb[0].mxu0 %v2578
        %v2723 = vpop.f32.mrb[0].mxu0
        %v2724 = vadd.f32 %v2625, %v2723
        %v2725 = vpop.f32.mrb[0].mxu0
        %2726 = vmatprep.mubr.f32.mxu0 0.0
        %2727 = vmatmul.mubr.f32.gmra.mrb[0].mxu0 %v2579
        %v2728 = vpop.f32.mrb[0].mxu0
        %v2729 = vadd.f32 %v2625, %v2728
        %v2730 = vpop.f32.mrb[0].mxu0
        %2731 = vmatprep.mubr.f32.mxu0 0.0
        %2732 = vmatmul.mubr.f32.gmra.mrb[0].mxu0 %v2580
        %v2733 = vpop.f32.mrb[0].mxu0
        %v2734 = vadd.f32 %v2625, %v2733
        %v2735 = vpop.f32.mrb[0].mxu0
        %2736 = vmatprep.mubr.f32.mxu0 0.0
        %2737 = vmatmul.mubr.f32.gmra.mrb[0].mxu0 %v2581
        %v2738 = vpop.f32.mrb[0].mxu0
        %v2739 = vadd.f32 %v2625, %v2738
        %v2740 = vpop.f32.mrb[0].mxu0
        %2741 = vmatprep.mubr.f32.mxu0 0.0
        %2742 = vmatmul.mubr.f32.gmra.mrb[0].mxu0 %v2582
        %v2743 = vpop.f32.mrb[0].mxu0
        %v2744 = vadd.f32 %v2625, %v2743
        %v2745 = vpop.f32.mrb[0].mxu0
        %2746 = vmatprep.mubr.f32.mxu0 0.0
        %2747 = vmatmul.mubr.f32.gmra.mrb[0].mxu0 %v2583
        %v2748 = vpop.f32.mrb[0].mxu0
        %v2749 = vadd.f32 %v2625, %v2748
        %v2750 = vpop.f32.mrb[0].mxu0
        %2751 = vmatprep.mubr.f32.mxu0 0.0
        %2752 = vmatmul.mubr.f32.gmra.mrb[0].mxu0 %v2584
        %v2753 = vpop.f32.mrb[0].mxu0
        %v2754 = vadd.f32 %v2625, %v2753
        %v2755 = vpop.f32.mrb[0].mxu0
        %2756 = vmatprep.mubr.f32.mxu0 0.0
        %2757 = vmatmul.mubr.f32.gmra.mrb[0].mxu0 %v2585
        %v2758 = vpop.f32.mrb[0].mxu0
        %v2759 = vadd.f32 %v2625, %v2758
        %v2760 = vpop.f32.mrb[0].mxu0
        %2761 = vmatprep.mubr.f32.mxu0 0.0
        %2762 = vmatmul.mubr.f32.gmra.mrb[0].mxu0 %v2586
        %v2763 = vpop.f32.mrb[0].mxu0
        %v2764 = vadd.f32 %v2625, %v2763
        %v2765 = vpop.f32.mrb[0].mxu0
        %2766 = vmatprep.mubr.f32.mxu0 0.0
        %2767 = vmatmul.mubr.f32.gmra.mrb[0].mxu0 %v2587
        %v2768 = vpop.f32.mrb[0].mxu0
        %v2769 = vadd.f32 %v2625, %v2768
        %v2770 = vpop.f32.mrb[0].mxu0
        %2771 = vmatprep.mubr.f32.mxu0 0.0
        %2772 = vmatmul.mubr.f32.gmra.mrb[0].mxu0 %v2588
        %v2773 = vpop.f32.mrb[0].mxu0
        %v2774 = vadd.f32 %v2625, %v2773
        %v2775 = vpop.f32.mrb[0].mxu0
        %2776 = vmatprep.mubr.f32.mxu0 0.0
        %2777 = vmatmul.mubr.f32.gmra.mrb[0].mxu0 %v2589
        %v2778 = vpop.f32.mrb[0].mxu0
        %v2779 = vadd.f32 %v2625, %v2778
        %v2780 = vpop.f32.mrb[0].mxu0
        %2781 = vmatprep.mubr.f32.mxu0 0.0
        %2782 = vmatmul.mubr.f32.gmra.mrb[0].mxu0 %v2590
        %v2783 = vpop.f32.mrb[0].mxu0
        %v2784 = vadd.f32 %v2625, %v2783
        %v2785 = vpop.f32.mrb[0].mxu0
        %2786 = vmatprep.mubr.f32.mxu0 0.0
        %2787 = vmatmul.mubr.f32.gmra.mrb[0].mxu0 %v2591
        %v2788 = vpop.f32.mrb[0].mxu0
        %v2789 = vadd.f32 %v2625, %v2788
        %v2790 = vpop.f32.mrb[0].mxu0
        %2791 = vmatprep.mubr.f32.mxu0 0.0
        %2792 = vmatmul.mubr.f32.gmra.mrb[0].mxu0 %v2592
        %v2793 = vpop.f32.mrb[0].mxu0
        %v2794 = vadd.f32 %v2625, %v2793
        %v2795 = vpop.f32.mrb[0].mxu0
        %2796 = vmatprep.mubr.f32.mxu0 0.0
        %2797 = vmatmul.mubr.f32.gmra.mrb[0].mxu0 %v2593
        %v2798 = vpop.f32.mrb[0].mxu0
        %v2799 = vadd.f32 %v2625, %v2798
        %v2800 = vpop.f32.mrb[0].mxu0
        %2801 = vmatprep.mubr.f32.mxu0 0.0
        %2802 = vmatmul.mubr.f32.gmra.mrb[0].mxu0 %v2594
        %v2803 = vpop.f32.mrb[0].mxu0
        %v2804 = vadd.f32 %v2625, %v2803
        %v2805 = vpop.f32.mrb[0].mxu0
        %2806 = vmatprep.mubr.f32.mxu0 0.0
        %2807 = vmatmul.mubr.f32.gmra.mrb[0].mxu0 %v2595
        %v2808 = vpop.f32.mrb[0].mxu0
        %v2809 = vadd.f32 %v2625, %v2808
        %v2810 = vpop.f32.mrb[0].mxu0
        %2811 = vmatprep.mubr.f32.mxu0 0.0
        %2812 = vmatmul.mubr.f32.gmra.mrb[0].mxu0 %v2596
        %v2813 = vpop.f32.mrb[0].mxu0
        %v2814 = vadd.f32 %v2625, %v2813
        %v2815 = vpop.f32.mrb[0].mxu0
        %2816 = vmatprep.mubr.f32.mxu0 0.0
        %2817 = vmatmul.mubr.f32.gmra.mrb[0].mxu0 %v2597
        %v2818 = vpop.f32.mrb[0].mxu0
        %v2819 = vadd.f32 %v2625, %v2818
        %v2820 = vpop.f32.mrb[0].mxu0
        %2821 = vmatprep.mubr.f32.mxu0 0.0
        %2822 = vmatmul.mubr.f32.gmra.mrb[0].mxu0 %v2598
        %v2823 = vpop.f32.mrb[0].mxu0
        %v2824 = vadd.f32 %v2625, %v2823
        %v2825 = vpop.f32.mrb[0].mxu0
        %2826 = vmatprep.mubr.f32.mxu0 0.0
        %2827 = vmatmul.mubr.f32.gmra.mrb[0].mxu0 %v2599
        %v2828 = vpop.f32.mrb[0].mxu0
        %v2829 = vadd.f32 %v2625, %v2828
        %v2830 = vpop.f32.mrb[0].mxu0
        %2831 = vmatprep.mubr.f32.mxu0 0.0
        %2832 = vmatmul.mubr.f32.gmra.mrb[0].mxu0 %v2600
        %v2833 = vpop.f32.mrb[0].mxu0
        %v2834 = vadd.f32 %v2625, %v2833
        %v2835 = vpop.f32.mrb[0].mxu0
        %2836 = vmatprep.mubr.f32.mxu0 0.0
        %2837 = vmatmul.mubr.f32.gmra.mrb[0].mxu0 %v2601
        %v2838 = vpop.f32.mrb[0].mxu0
        %v2839 = vadd.f32 %v2625, %v2838
        %v2840 = vpop.f32.mrb[0].mxu0
        %2841 = vmatprep.mubr.f32.mxu0 0.0
        %2842 = vmatmul.mubr.f32.gmra.mrb[0].mxu0 %v2602
        %v2843 = vpop.f32.mrb[0].mxu0
        %v2844 = vadd.f32 %v2625, %v2843
        %v2845 = vpop.f32.mrb[0].mxu0
        %2846 = vmatprep.mubr.f32.mxu0 0.0
        %2847 = vmatmul.mubr.f32.gmra.mrb[0].mxu0 %v2603
        %v2848 = vpop.f32.mrb[0].mxu0
        %v2849 = vadd.f32 %v2625, %v2848
        %v2850 = vpop.f32.mrb[0].mxu0
        %2851 = vdwg.mxu0
        %v2852 = vmax.f32 %v2694, 0.0
        %v2853 = vmax.f32 %v2699, 0.0
        %v2854 = vmax.f32 %v2704, 0.0
        %v2855 = vmax.f32 %v2709, 0.0
        %v2856 = vmax.f32 %v2714, 0.0
        %v2857 = vmax.f32 %v2719, 0.0
        %v2858 = vmax.f32 %v2724, 0.0
        %v2859 = vmax.f32 %v2729, 0.0
        %v2860 = vmax.f32 %v2734, 0.0
        %v2861 = vmax.f32 %v2739, 0.0
        %v2862 = vmax.f32 %v2744, 0.0
        %v2863 = vmax.f32 %v2749, 0.0
        %v2864 = vmax.f32 %v2754, 0.0
        %v2865 = vmax.f32 %v2759, 0.0
        %v2866 = vmax.f32 %v2764, 0.0
        %v2867 = vmax.f32 %v2769, 0.0
        %v2868 = vmax.f32 %v2774, 0.0
        %v2869 = vmax.f32 %v2779, 0.0
        %v2870 = vmax.f32 %v2784, 0.0
        %v2871 = vmax.f32 %v2789, 0.0
        %v2872 = vmax.f32 %v2794, 0.0
        %v2873 = vmax.f32 %v2799, 0.0
        %v2874 = vmax.f32 %v2804, 0.0
        %v2875 = vmax.f32 %v2809, 0.0
        %v2876 = vmax.f32 %v2814, 0.0
        %v2877 = vmax.f32 %v2819, 0.0
        %v2878 = vmax.f32 %v2824, 0.0
        %v2879 = vmax.f32 %v2829, 0.0
        %v2880 = vmax.f32 %v2834, 0.0
        %v2881 = vmax.f32 %v2839, 0.0
        %v2882 = vmax.f32 %v2844, 0.0
        %v2883 = vmax.f32 %v2849, 0.0
        %v2884 = vld [vmem:[#allocation6] sm:$0xff]
        %v2885 = vld [vmem:[#allocation6 + $0x8] sm:$0xff]
        %v2886 = vld [vmem:[#allocation6 + $0x10] sm:$0xff]
        %v2887 = vld [vmem:[#allocation6 + $0x18] sm:$0xff]
        %v2888 = vld [vmem:[#allocation6 + $0x20] sm:$0xff]
        %v2889 = vld [vmem:[#allocation6 + $0x28] sm:$0xff]
        %v2890 = vld [vmem:[#allocation6 + $0x30] sm:$0xff]
        %v2891 = vld [vmem:[#allocation6 + $0x38] sm:$0xff]
        %v2892 = vld [vmem:[#allocation6 + $0x40] sm:$0xff]
        %v2893 = vld [vmem:[#allocation6 + $0x48] sm:$0xff]
        %v2894 = vld [vmem:[#allocation6 + $0x50] sm:$0xff]
        %v2895 = vld [vmem:[#allocation6 + $0x58] sm:$0xff]
        %v2896 = vld [vmem:[#allocation6 + $0x60] sm:$0xff]
        %v2897 = vld [vmem:[#allocation6 + $0x68] sm:$0xff]
        %v2898 = vld [vmem:[#allocation6 + $0x70] sm:$0xff]
        %v2899 = vld [vmem:[#allocation6 + $0x78] sm:$0xff]
        %v2900 = vld [vmem:[%s2] sm:$0x1]
        %v2902 = vlaneseq
        %v2903 = vshrl.u32 %v2902, 7
        %v2904 = vsub.s32 0, %v2903
        %v2905 = vrot.slane %v2900, %v2904
        %2907 = vmatprep.subr.mxu0 0.0
        %2908 = vmatpush1.msra.mxu0 %v2884
        %2909 = vmatprep.subr.mxu0 0.0
        %2910 = vmatpush1.msra.mxu0 %v2885
        %2911 = vmatprep.subr.mxu0 0.0
        %2912 = vmatpush1.msra.mxu0 %v2886
        %2913 = vmatprep.subr.mxu0 0.0
        %2914 = vmatpush1.msra.mxu0 %v2887
        %2915 = vmatprep.subr.mxu0 0.0
        %2916 = vmatpush1.msra.mxu0 %v2888
        %2917 = vmatprep.subr.mxu0 0.0
        %2918 = vmatpush1.msra.mxu0 %v2889
        %2919 = vmatprep.subr.mxu0 0.0
        %2920 = vmatpush1.msra.mxu0 %v2890
        %2921 = vmatprep.subr.mxu0 0.0
        %2922 = vmatpush1.msra.mxu0 %v2891
        %2923 = vmatprep.subr.mxu0 0.0
        %2924 = vmatpush1.msra.mxu0 %v2892
        %2925 = vmatprep.subr.mxu0 0.0
        %2926 = vmatpush1.msra.mxu0 %v2893
        %2927 = vmatprep.subr.mxu0 0.0
        %2928 = vmatpush1.msra.mxu0 %v2894
        %2929 = vmatprep.subr.mxu0 0.0
        %2930 = vmatpush1.msra.mxu0 %v2895
        %2931 = vmatprep.subr.mxu0 0.0
        %2932 = vmatpush1.msra.mxu0 %v2896
        %2933 = vmatprep.subr.mxu0 0.0
        %2934 = vmatpush1.msra.mxu0 %v2897
        %2935 = vmatprep.subr.mxu0 0.0
        %2936 = vmatpush1.msra.mxu0 %v2898
        %2937 = vmatprep.subr.mxu0 0.0
        %2938 = vmatpush1.msra.mxu0 %v2899
        %2939 = vmatprep.subr.mxu0 0.0
        %2940 = vmatpush1.msra.mxu0 0.0
        %2941 = vmatprep.subr.mxu0 0.0
        %2942 = vmatpush1.msra.mxu0 0.0
        %2943 = vmatprep.subr.mxu0 0.0
        %2944 = vmatpush1.msra.mxu0 0.0
        %2945 = vmatprep.subr.mxu0 0.0
        %2946 = vmatpush1.msra.mxu0 0.0
        %2947 = vmatprep.subr.mxu0 0.0
        %2948 = vmatpush1.msra.mxu0 0.0
        %2949 = vmatprep.subr.mxu0 0.0
        %2950 = vmatpush1.msra.mxu0 0.0
        %2951 = vmatprep.subr.mxu0 0.0
        %2952 = vmatpush1.msra.mxu0 0.0
        %2953 = vmatprep.subr.mxu0 0.0
        %2954 = vmatpush1.msra.mxu0 0.0
        %2955 = vmatprep.subr.mxu0 0.0
        %2956 = vmatpush1.msra.mxu0 0.0
        %2957 = vmatprep.subr.mxu0 0.0
        %2958 = vmatpush1.msra.mxu0 0.0
        %2959 = vmatprep.subr.mxu0 0.0
        %2960 = vmatpush1.msra.mxu0 0.0
        %2961 = vmatprep.subr.mxu0 0.0
        %2962 = vmatpush1.msra.mxu0 0.0
        %2963 = vmatprep.subr.mxu0 0.0
        %2964 = vmatpush1.msra.mxu0 0.0
        %2965 = vmatprep.subr.mxu0 0.0
        %2966 = vmatpush1.msra.mxu0 0.0
        %2967 = vmatprep.subr.mxu0 0.0
        %2968 = vmatpush1.msra.mxu0 0.0
        %2969 = vmatprep.subr.mxu0 0.0
        %2970 = vmatpush1.msra.mxu0 0.0
        %2971 = vmatprep.mubr.f32.mxu0 0.0
        %2972 = vmatmul.mubr.f32.gmra.mrb[0].mxu0 %v409
        %v2973 = vpop.f32.mrb[0].mxu0
        %v2974 = vadd.f32 %v2905, %v2973
        %v2975 = vpop.f32.mrb[0].mxu0
        %2976 = vmatprep.mubr.f32.mxu0 0.0
        %2977 = vmatmul.mubr.f32.gmra.mrb[0].mxu0 %v410
        %v2978 = vpop.f32.mrb[0].mxu0
        %v2979 = vadd.f32 %v2905, %v2978
        %v2980 = vpop.f32.mrb[0].mxu0
        %2981 = vmatprep.mubr.f32.mxu0 0.0
        %2982 = vmatmul.mubr.f32.gmra.mrb[0].mxu0 %v411
        %v2983 = vpop.f32.mrb[0].mxu0
        %v2984 = vadd.f32 %v2905, %v2983
        %v2985 = vpop.f32.mrb[0].mxu0
        %2986 = vmatprep.mubr.f32.mxu0 0.0
        %2987 = vmatmul.mubr.f32.gmra.mrb[0].mxu0 %v412
        %v2988 = vpop.f32.mrb[0].mxu0
        %v2989 = vadd.f32 %v2905, %v2988
        %v2990 = vpop.f32.mrb[0].mxu0
        %2991 = vmatprep.mubr.f32.mxu0 0.0
        %2992 = vmatmul.mubr.f32.gmra.mrb[0].mxu0 %v413
        %v2993 = vpop.f32.mrb[0].mxu0
        %v2994 = vadd.f32 %v2905, %v2993
        %v2995 = vpop.f32.mrb[0].mxu0
        %2996 = vmatprep.mubr.f32.mxu0 0.0
        %2997 = vmatmul.mubr.f32.gmra.mrb[0].mxu0 %v414
        %v2998 = vpop.f32.mrb[0].mxu0
        %v2999 = vadd.f32 %v2905, %v2998
        %v3000 = vpop.f32.mrb[0].mxu0
        %3001 = vmatprep.mubr.f32.mxu0 0.0
        %3002 = vmatmul.mubr.f32.gmra.mrb[0].mxu0 %v415
        %v3003 = vpop.f32.mrb[0].mxu0
        %v3004 = vadd.f32 %v2905, %v3003
        %v3005 = vpop.f32.mrb[0].mxu0
        %3006 = vmatprep.mubr.f32.mxu0 0.0
        %3007 = vmatmul.mubr.f32.gmra.mrb[0].mxu0 %v416
        %v3008 = vpop.f32.mrb[0].mxu0
        %v3009 = vadd.f32 %v2905, %v3008
        %v3010 = vpop.f32.mrb[0].mxu0
        %3011 = vmatprep.mubr.f32.mxu0 0.0
        %3012 = vmatmul.mubr.f32.gmra.mrb[0].mxu0 %v417
        %v3013 = vpop.f32.mrb[0].mxu0
        %v3014 = vadd.f32 %v2905, %v3013
        %v3015 = vpop.f32.mrb[0].mxu0
        %3016 = vmatprep.mubr.f32.mxu0 0.0
        %3017 = vmatmul.mubr.f32.gmra.mrb[0].mxu0 %v418
        %v3018 = vpop.f32.mrb[0].mxu0
        %v3019 = vadd.f32 %v2905, %v3018
        %v3020 = vpop.f32.mrb[0].mxu0
        %3021 = vmatprep.mubr.f32.mxu0 0.0
        %3022 = vmatmul.mubr.f32.gmra.mrb[0].mxu0 %v419
        %v3023 = vpop.f32.mrb[0].mxu0
        %v3024 = vadd.f32 %v2905, %v3023
        %v3025 = vpop.f32.mrb[0].mxu0
        %3026 = vmatprep.mubr.f32.mxu0 0.0
        %3027 = vmatmul.mubr.f32.gmra.mrb[0].mxu0 %v420
        %v3028 = vpop.f32.mrb[0].mxu0
        %v3029 = vadd.f32 %v2905, %v3028
        %v3030 = vpop.f32.mrb[0].mxu0
        %3031 = vmatprep.mubr.f32.mxu0 0.0
        %3032 = vmatmul.mubr.f32.gmra.mrb[0].mxu0 %v421
        %v3033 = vpop.f32.mrb[0].mxu0
        %v3034 = vadd.f32 %v2905, %v3033
        %v3035 = vpop.f32.mrb[0].mxu0
        %3036 = vmatprep.mubr.f32.mxu0 0.0
        %3037 = vmatmul.mubr.f32.gmra.mrb[0].mxu0 %v422
        %v3038 = vpop.f32.mrb[0].mxu0
        %v3039 = vadd.f32 %v2905, %v3038
        %v3040 = vpop.f32.mrb[0].mxu0
        %3041 = vmatprep.mubr.f32.mxu0 0.0
        %3042 = vmatmul.mubr.f32.gmra.mrb[0].mxu0 %v423
        %v3043 = vpop.f32.mrb[0].mxu0
        %v3044 = vadd.f32 %v2905, %v3043
        %v3045 = vpop.f32.mrb[0].mxu0
        %3046 = vmatprep.mubr.f32.mxu0 0.0
        %3047 = vmatmul.mubr.f32.gmra.mrb[0].mxu0 %v424
        %v3048 = vpop.f32.mrb[0].mxu0
        %v3049 = vadd.f32 %v2905, %v3048
        %v3050 = vpop.f32.mrb[0].mxu0
        %3051 = vmatprep.mubr.f32.mxu0 0.0
        %3052 = vmatmul.mubr.f32.gmra.mrb[0].mxu0 %v425
        %v3053 = vpop.f32.mrb[0].mxu0
        %v3054 = vadd.f32 %v2905, %v3053
        %v3055 = vpop.f32.mrb[0].mxu0
        %3056 = vmatprep.mubr.f32.mxu0 0.0
        %3057 = vmatmul.mubr.f32.gmra.mrb[0].mxu0 %v426
        %v3058 = vpop.f32.mrb[0].mxu0
        %v3059 = vadd.f32 %v2905, %v3058
        %v3060 = vpop.f32.mrb[0].mxu0
        %3061 = vmatprep.mubr.f32.mxu0 0.0
        %3062 = vmatmul.mubr.f32.gmra.mrb[0].mxu0 %v427
        %v3063 = vpop.f32.mrb[0].mxu0
        %v3064 = vadd.f32 %v2905, %v3063
        %v3065 = vpop.f32.mrb[0].mxu0
        %3066 = vmatprep.mubr.f32.mxu0 0.0
        %3067 = vmatmul.mubr.f32.gmra.mrb[0].mxu0 %v428
        %v3068 = vpop.f32.mrb[0].mxu0
        %v3069 = vadd.f32 %v2905, %v3068
        %v3070 = vpop.f32.mrb[0].mxu0
        %3071 = vmatprep.mubr.f32.mxu0 0.0
        %3072 = vmatmul.mubr.f32.gmra.mrb[0].mxu0 %v429
        %v3073 = vpop.f32.mrb[0].mxu0
        %v3074 = vadd.f32 %v2905, %v3073
        %v3075 = vpop.f32.mrb[0].mxu0
        %3076 = vmatprep.mubr.f32.mxu0 0.0
        %3077 = vmatmul.mubr.f32.gmra.mrb[0].mxu0 %v430
        %v3078 = vpop.f32.mrb[0].mxu0
        %v3079 = vadd.f32 %v2905, %v3078
        %v3080 = vpop.f32.mrb[0].mxu0
        %3081 = vmatprep.mubr.f32.mxu0 0.0
        %3082 = vmatmul.mubr.f32.gmra.mrb[0].mxu0 %v431
        %v3083 = vpop.f32.mrb[0].mxu0
        %v3084 = vadd.f32 %v2905, %v3083
        %v3085 = vpop.f32.mrb[0].mxu0
        %3086 = vmatprep.mubr.f32.mxu0 0.0
        %3087 = vmatmul.mubr.f32.gmra.mrb[0].mxu0 %v432
        %v3088 = vpop.f32.mrb[0].mxu0
        %v3089 = vadd.f32 %v2905, %v3088
        %v3090 = vpop.f32.mrb[0].mxu0
        %3091 = vmatprep.mubr.f32.mxu0 0.0
        %3092 = vmatmul.mubr.f32.gmra.mrb[0].mxu0 %v433
        %v3093 = vpop.f32.mrb[0].mxu0
        %v3094 = vadd.f32 %v2905, %v3093
        %v3095 = vpop.f32.mrb[0].mxu0
        %3096 = vmatprep.mubr.f32.mxu0 0.0
        %3097 = vmatmul.mubr.f32.gmra.mrb[0].mxu0 %v434
        %v3098 = vpop.f32.mrb[0].mxu0
        %v3099 = vadd.f32 %v2905, %v3098
        %v3100 = vpop.f32.mrb[0].mxu0
        %3101 = vmatprep.mubr.f32.mxu0 0.0
        %3102 = vmatmul.mubr.f32.gmra.mrb[0].mxu0 %v435
        %v3103 = vpop.f32.mrb[0].mxu0
        %v3104 = vadd.f32 %v2905, %v3103
        %v3105 = vpop.f32.mrb[0].mxu0
        %3106 = vmatprep.mubr.f32.mxu0 0.0
        %3107 = vmatmul.mubr.f32.gmra.mrb[0].mxu0 %v436
        %v3108 = vpop.f32.mrb[0].mxu0
        %v3109 = vadd.f32 %v2905, %v3108
        %v3110 = vpop.f32.mrb[0].mxu0
        %3111 = vmatprep.mubr.f32.mxu0 0.0
        %3112 = vmatmul.mubr.f32.gmra.mrb[0].mxu0 %v437
        %v3113 = vpop.f32.mrb[0].mxu0
        %v3114 = vadd.f32 %v2905, %v3113
        %v3115 = vpop.f32.mrb[0].mxu0
        %3116 = vmatprep.mubr.f32.mxu0 0.0
        %3117 = vmatmul.mubr.f32.gmra.mrb[0].mxu0 %v438
        %v3118 = vpop.f32.mrb[0].mxu0
        %v3119 = vadd.f32 %v2905, %v3118
        %v3120 = vpop.f32.mrb[0].mxu0
        %3121 = vmatprep.mubr.f32.mxu0 0.0
        %3122 = vmatmul.mubr.f32.gmra.mrb[0].mxu0 %v439
        %v3123 = vpop.f32.mrb[0].mxu0
        %v3124 = vadd.f32 %v2905, %v3123
        %v3125 = vpop.f32.mrb[0].mxu0
        %3126 = vmatprep.mubr.f32.mxu0 0.0
        %3127 = vmatmul.mubr.f32.gmra.mrb[0].mxu0 %v440
        %v3128 = vpop.f32.mrb[0].mxu0
        %v3129 = vadd.f32 %v2905, %v3128
        %v3130 = vpop.f32.mrb[0].mxu0
        %3131 = vdwg.mxu0
        %v3132 = vadd.f32 %v2852, %v2974
        %v3133 = vadd.f32 %v2853, %v2979
        %v3134 = vadd.f32 %v2854, %v2984
        %v3135 = vadd.f32 %v2855, %v2989
        %v3136 = vadd.f32 %v2856, %v2994
        %v3137 = vadd.f32 %v2857, %v2999
        %v3138 = vadd.f32 %v2858, %v3004
        %v3139 = vadd.f32 %v2859, %v3009
        %v3140 = vadd.f32 %v2860, %v3014
        %v3141 = vadd.f32 %v2861, %v3019
        %v3142 = vadd.f32 %v2862, %v3024
        %v3143 = vadd.f32 %v2863, %v3029
        %v3144 = vadd.f32 %v2864, %v3034
        %v3145 = vadd.f32 %v2865, %v3039
        %v3146 = vadd.f32 %v2866, %v3044
        %v3147 = vadd.f32 %v2867, %v3049
        %v3148 = vadd.f32 %v2868, %v3054
        %v3149 = vadd.f32 %v2869, %v3059
        %v3150 = vadd.f32 %v2870, %v3064
        %v3151 = vadd.f32 %v2871, %v3069
        %v3152 = vadd.f32 %v2872, %v3074
        %v3153 = vadd.f32 %v2873, %v3079
        %v3154 = vadd.f32 %v2874, %v3084
        %v3155 = vadd.f32 %v2875, %v3089
        %v3156 = vadd.f32 %v2876, %v3094
        %v3157 = vadd.f32 %v2877, %v3099
        %v3158 = vadd.f32 %v2878, %v3104
        %v3159 = vadd.f32 %v2879, %v3109
        %v3160 = vadd.f32 %v2880, %v3114
        %v3161 = vadd.f32 %v2881, %v3119
        %v3162 = vadd.f32 %v2882, %v3124
        %v3163 = vadd.f32 %v2883, %v3129
        %3164 = vst [vmem:[%s408] sm:$0xff] %v3132
        %3165 = vst [vmem:[%s408 + $0x8] sm:$0xff] %v3133
        %3166 = vst [vmem:[%s408 + $0x10] sm:$0xff] %v3134
        %3167 = vst [vmem:[%s408 + $0x18] sm:$0xff] %v3135
        %3168 = vst [vmem:[%s408 + $0x20] sm:$0xff] %v3136
        %3169 = vst [vmem:[%s408 + $0x28] sm:$0xff] %v3137
        %3170 = vst [vmem:[%s408 + $0x30] sm:$0xff] %v3138
        %3171 = vst [vmem:[%s408 + $0x38] sm:$0xff] %v3139
        %3172 = vst [vmem:[%s408 + $0x40] sm:$0xff] %v3140
        %3173 = vst [vmem:[%s408 + $0x48] sm:$0xff] %v3141
        %3174 = vst [vmem:[%s408 + $0x50] sm:$0xff] %v3142
        %3175 = vst [vmem:[%s408 + $0x58] sm:$0xff] %v3143
        %3176 = vst [vmem:[%s408 + $0x60] sm:$0xff] %v3144
        %3177 = vst [vmem:[%s408 + $0x68] sm:$0xff] %v3145
        %3178 = vst [vmem:[%s408 + $0x70] sm:$0xff] %v3146
        %3179 = vst [vmem:[%s408 + $0x78] sm:$0xff] %v3147
        %3180 = vst [vmem:[%s408 + $0x80] sm:$0xff] %v3148
        %3181 = vst [vmem:[%s408 + $0x88] sm:$0xff] %v3149
        %3182 = vst [vmem:[%s408 + $0x90] sm:$0xff] %v3150
        %3183 = vst [vmem:[%s408 + $0x98] sm:$0xff] %v3151
        %3184 = vst [vmem:[%s408 + $0xa0] sm:$0xff] %v3152
        %3185 = vst [vmem:[%s408 + $0xa8] sm:$0xff] %v3153
        %3186 = vst [vmem:[%s408 + $0xb0] sm:$0xff] %v3154
        %3187 = vst [vmem:[%s408 + $0xb8] sm:$0xff] %v3155
        %3188 = vst [vmem:[%s408 + $0xc0] sm:$0xff] %v3156
        %3189 = vst [vmem:[%s408 + $0xc8] sm:$0xff] %v3157
        %3190 = vst [vmem:[%s408 + $0xd0] sm:$0xff] %v3158
        %3191 = vst [vmem:[%s408 + $0xd8] sm:$0xff] %v3159
        %3192 = vst [vmem:[%s408 + $0xe0] sm:$0xff] %v3160
        %3193 = vst [vmem:[%s408 + $0xe8] sm:$0xff] %v3161
        %3194 = vst [vmem:[%s408 + $0xf0] sm:$0xff] %v3162
        %3195 = vst [vmem:[%s408 + $0xf8] sm:$0xff] %v3163
        %s3196 = sand.u32 %s230, 1
        %s3197 = scalar_lea.sflag [#allocation5], %s3196
        %s3198 = sand.u32 %s230, 1
        %s3199 = smul.addr %s3198, 256
        %s3200 = scalar_lea.vmem [#allocation12], %s3199
        // Predicated region
        $region77: #{tpu_custom_call.1} parent=55 // pred_check
          %p3201 = pneg %p240
        $region78: #{tpu_custom_call.1} parent=55 // pred_check_branch
          %3203 = sbr.rel (%p3201) target = $region80
        $region79: #{tpu_custom_call.1} parent=55 // pred_region
          %s3205 = ssub.s32 4096, 4096
          %3206 = vsyncadd %s3197, %s3205
          %s3207 = smul.addr %s28, 32
          %s3208 = smul.addr %s3207, 128
          %s3209 = scalar_lea.hbm %s9, %s3208
          %s3210 = sshll.u32 %s3200, 4
          %s3211 = int_to_ptr.vmem [resolvable:$true] %s3210
          %3216 = dma.vmem_to_hbm [thread:$0]  %s3211, 4096, %s3209, %s3197, 128, 128, 8
        $region80: #{tpu_custom_call.1} parent=55 // pred_fallthru
          _
      $region56: #{tpu_custom_call.1} parent=5 // pred_fallthru
        _
      %p3217 = scmp.le.s32.totalorder 2, %s23
      // Predicated region
      $region81: #{tpu_custom_call.1} parent=5 // pred_check
        %p3218 = pneg %p3217
      $region82: #{tpu_custom_call.1} parent=5 // pred_check_branch
        %3220 = sbr.rel (%p3218) target = $region84
      $region83: #{tpu_custom_call.1} parent=5 // pred_region
        %s3221 = ssub.s32 %s23, 2
        // Predicated region
        $region85: #{tpu_custom_call.1} parent=83 // pred_check
          %p3222 = pneg %p246
        $region86: #{tpu_custom_call.1} parent=83 // pred_check_branch
          %3224 = sbr.rel (%p3222) target = $region88
        $region87: #{tpu_custom_call.1} parent=83 // pred_region
          %s3225 = sand.u32 %s231, 1
          %s3226 = scalar_lea.sflag [#allocation5], %s3225
          %s3227 = sand.u32 %s231, 1
          %s3228 = smul.addr %s3227, 256
          %s3229 = scalar_lea.vmem [#allocation12], %s3228
          %3230 = dma.done %s3226, 4096
        $region88: #{tpu_custom_call.1} parent=83 // pred_fallthru
          _
      $region84: #{tpu_custom_call.1} parent=5 // pred_fallthru
        _
    $region6: #{tpu_custom_call.1} parent=1 // loop_footer
      %s27 = sadd.s32 1, %s23
    $region7: #{tpu_custom_call.1} parent=1 // loop_footer_branch
      %22 = sbr.rel target = $region3
    $region8: #{tpu_custom_call.1} parent=1 // loop_exit
      _
    %3231 = vsyncpa [#allocation4], 1
    %s3232 = scalar_lea.sflag [#allocation4], 1
    %3233 = vsyncpa %s3232, 1
    %3234 = vsyncpa [#allocation7], 1
    %3235 = vsyncpa [#allocation10], 1
    %3236 = vsyncpa [#allocation5], 1
    %s3237 = scalar_lea.sflag [#allocation5], 1
    %3238 = vsyncpa %s3237, 1

</llo_original>
